<compile_context>
chip_gen: v7x
topology: tpu7x:2x2x1
jax: 0.10.0
libtpu: 0.0.40
codegen_flags: <defaults>
</compile_context>

<pallas_src>
import functools

import jax
import jax.numpy as jnp
from jax.experimental import pallas as pl
from jax.experimental.pallas import tpu as pltpu


def _pairwise_kernel(matt_j_ref, mat_i_ref, o_ref, *, b, c):
    """One (j, i) tile of out_T[b, j] += sum_i exp(-sum_c |mat[j]-mat[i]|)."""
    i = pl.program_id(1)

    @pl.when(i == 0)
    def _init():
        o_ref[...] = jnp.zeros_like(o_ref)

    mt_j = matt_j_ref[...]        # (BC, TJ)  query rows, j on the lane axis
    m_i = mat_i_ref[...]          # (TI, BC)  reference rows, i on sublanes

    rows = []
    for bb in range(b):           # b, c are small static Python ints
        m_b = None
        for cc in range(c):
            k = bb * c + cc
            col_i = m_i[:, k:k + 1]          # (TI, 1)
            row_j = mt_j[k:k + 1, :]         # (1, TJ)
            d = jnp.abs(col_i - row_j)       # (TI, TJ) dense VPU tile
            m_b = d if m_b is None else m_b + d
        # exp + i-reduction + accumulation stay in f32.
        e_b = jnp.exp(-m_b.astype(jnp.float32))          # (TI, TJ) on EUP
        rows.append(e_b.sum(axis=0, keepdims=True))      # (1, TJ) sublane reduce
    o_ref[...] += jnp.concatenate(rows, axis=0)          # (B, TJ) dense store


def _round_up(x, m):
    return ((x + m - 1) // m) * m


def minibatch_discrimination(x, weight, bias, dim_input_feature,
                             dim_output_feature, c,
                             compute_dtype=jnp.float32):
    """JAX/Pallas forward pass matching the PyTorch module.

    compute_dtype=jnp.bfloat16 is a valid speed knob on v6e/v7x (diff/c-sum in
    bf16, exp + accumulate in f32) but loosens accuracy below the 1e-4 check.
    """
    a = dim_input_feature
    b = dim_output_feature
    bc = b * c

    x2 = x.reshape(-1, a).astype(jnp.float32)
    n = x2.shape[0]

    # Projection done with a plain XLA matmul (O(N*A*BC), not the bottleneck);
    # this also yields the transposed (BC, N) j-stream copy for free.
    mat = x2 @ weight.astype(jnp.float32)                 # (N, BC) f32

    # Pad N so pairwise tiles are (8,128)-aligned.  Padded rows get a huge
    # sentinel: sum_c |real - 1e19| is ~c*1e19, so exp(-that) underflows to
    # exactly 0 -> padded i-rows contribute nothing; padded j-columns of the
    # output are sliced away below.
    ti = 128                      # i tile (sublane axis of the diff tile)
    n_pad = _round_up(n, ti)
    mat_p = jnp.pad(mat, ((0, n_pad - n), (0, 0)), constant_values=1e19)

    # Hoisted, loop-invariant casts (done once, outside the kernel).
    mat_i = mat_p.astype(compute_dtype)                   # (N_pad, BC)
    mat_jT = mat_p.T.astype(compute_dtype)                # (BC, N_pad)

    # j tile = lane axis of the output: multiple of 128 dividing n_pad.  Use
    # 256 only when that still leaves >= 2 j-blocks (v7x has 2 TensorCores);
    # the per-b live diff tile is (ti/8)*(tj/128) vregs, so tj<=256 keeps it
    # within the 64-vreg register file (no spill of the c-accumulator).
    tj = 256 if (n_pad % 256 == 0 and n_pad // 256 >= 2) else 128

    # Per-step VMEM, padded to (8,128) physical tiles and double-buffered:
    #   mat_i  (ti, bc->128 lanes): 2 * 128*128*4  = 128 KiB
    #   mat_jT (bc->32  , tj)     : 2 *  32*tj*4   <=  64 KiB
    #   out    (b ->8   , tj)     : 2 *   8*tj*4   <=  16 KiB
    # << the default scoped-VMEM limit on v5e/v6e/v7x; 32 MiB set for margin.
    grid = (n_pad // tj, n_pad // ti)
    out_t = pl.pallas_call(
        functools.partial(_pairwise_kernel, b=b, c=c),
        out_shape=jax.ShapeDtypeStruct((b, n_pad), jnp.float32),
        grid=grid,
        in_specs=[
            pl.BlockSpec((bc, tj), lambda j, i: (0, j)),   # j stream (lanes)
            pl.BlockSpec((ti, bc), lambda j, i: (i, 0)),   # i stream (sublanes)
        ],
        out_specs=pl.BlockSpec((b, tj), lambda j, i: (0, j)),
        compiler_params=pltpu.CompilerParams(
            dimension_semantics=("parallel", "arbitrary"),
            vmem_limit_bytes=32 * 1024 * 1024),
    )(mat_jT, mat_i)

    # Drop padded j columns, transpose back to (N, B); bias added in the
    # wrapper (no (1, B) tile / DMA inside the kernel).
    out = out_t[:, :n].T
    return out + bias.reshape(1, b).astype(jnp.float32)


def _reference(x, weight, bias, dim_input_feature, dim_output_feature, c):
    x2 = x.reshape(-1, dim_input_feature)
    mat = (x2 @ weight).reshape(-1, dim_output_feature, c)
    diff = jnp.abs(mat[None, :, :, :] - mat[:, None, :, :]).sum(3)  # (N, N, B)
    return jnp.exp(-diff).sum(0) + bias[None, :]


if __name__ == "__main__":
    # Small, module-consistent shapes.
    N, A, B, C = 8, 32, 8, 4   # batch, dim_input_feature, dim_output_feature, c

    key = jax.random.PRNGKey(0)
    kx, kw, kb = jax.random.split(key, 3)
    x = jax.random.normal(kx, (N, A), dtype=jnp.float32)
    # torch.empty is uninitialized; initialize deterministically instead.
    weight = jax.random.normal(kw, (A, B * C), dtype=jnp.float32) * 0.1
    bias = jax.random.normal(kb, (B,), dtype=jnp.float32) * 0.1

    out = minibatch_discrimination(x, weight, bias, A, B, C)
    out = jax.block_until_ready(out)

    ref = _reference(x, weight, bias, A, B, C)
    assert out.shape == (N, B)
    assert jnp.allclose(out, ref, atol=1e-4, rtol=1e-4), "mismatch vs reference"

    print("KERNEL_OK")
</pallas_src>

<mosaic_0001>
module attributes {stable_mosaic.version = 11 : i64} {
  func.func @_pairwise_kernel(%arg0: i32, %arg1: i32, %arg2: memref<32x128xf32, #tpu.memory_space<vmem>>, %arg3: memref<128x32xf32, #tpu.memory_space<vmem>>, %arg4: memref<8x128xf32, #tpu.memory_space<vmem>>) attributes {dimension_semantics = [#tpu.dimension_semantics<parallel>, #tpu.dimension_semantics<arbitrary>], iteration_bounds = array<i64: 1, 1>, scalar_prefetch = 0 : i64, scratch_operands = 0 : i64, tpu.core_type = #tpu.core_type<tc>, window_params = [{transform_indices = @transform_0, window_bounds = array<i64: 32, 128>}, {transform_indices = @transform_1, window_bounds = array<i64: 128, 32>}, {transform_indices = @transform_2, window_bounds = array<i64: 8, 128>}]} {
    %c0_i32 = arith.constant 0 : i32
    %0 = arith.cmpi eq, %arg1, %c0_i32 : i32
    %1 = arith.extui %0 : i1 to i32
    %c0_i32_0 = arith.constant 0 : i32
    %2 = arith.cmpi ne, %1, %c0_i32_0 : i32
    scf.if %2 {
      %cst_23 = arith.constant 0.000000e+00 : f32
      %265 = vector.broadcast %cst_23 : f32 to vector<8x128xf32>
      %c0_24 = arith.constant 0 : index
      %c0_25 = arith.constant 0 : index
      %266 = vector.load %arg4[%c0_24, %c0_25] : memref<8x128xf32, #tpu.memory_space<vmem>>, vector<8x128xf32>
      tpu.vector_store %arg4[%c0_24, %c0_25], %265 {strides = array<i32>} : memref<8x128xf32, #tpu.memory_space<vmem>>, vector<8x128xf32>,
    } else {
    }
    %c0 = arith.constant 0 : index
    %c0_1 = arith.constant 0 : index
    %3 = vector.load %arg2[%c0, %c0_1] : memref<32x128xf32, #tpu.memory_space<vmem>>, vector<32x128xf32>
    %c0_2 = arith.constant 0 : index
    %c0_3 = arith.constant 0 : index
    %4 = vector.load %arg3[%c0_2, %c0_3] : memref<128x32xf32, #tpu.memory_space<vmem>>, vector<128x32xf32>
    %5 = vector.extract_strided_slice %4 {offsets = [0, 0], sizes = [128, 1], strides = [1, 1]} : vector<128x32xf32> to vector<128x1xf32>
    %6 = vector.extract_strided_slice %3 {offsets = [0, 0], sizes = [1, 128], strides = [1, 1]} : vector<32x128xf32> to vector<1x128xf32>
    %7 = vector.broadcast %5 : vector<128x1xf32> to vector<128x128xf32>
    %8 = vector.broadcast %6 : vector<1x128xf32> to vector<128x128xf32>
    %9 = arith.subf %7, %8 : vector<128x128xf32>
    %10 = math.absf %9 : vector<128x128xf32>
    %11 = vector.extract_strided_slice %4 {offsets = [0, 1], sizes = [128, 1], strides = [1, 1]} : vector<128x32xf32> to vector<128x1xf32>
    %12 = vector.extract_strided_slice %3 {offsets = [1, 0], sizes = [1, 128], strides = [1, 1]} : vector<32x128xf32> to vector<1x128xf32>
    %13 = vector.broadcast %11 : vector<128x1xf32> to vector<128x128xf32>
    %14 = vector.broadcast %12 : vector<1x128xf32> to vector<128x128xf32>
    %15 = arith.subf %13, %14 : vector<128x128xf32>
    %16 = math.absf %15 : vector<128x128xf32>
    %17 = arith.addf %10, %16 : vector<128x128xf32>
    %18 = vector.extract_strided_slice %4 {offsets = [0, 2], sizes = [128, 1], strides = [1, 1]} : vector<128x32xf32> to vector<128x1xf32>
    %19 = vector.extract_strided_slice %3 {offsets = [2, 0], sizes = [1, 128], strides = [1, 1]} : vector<32x128xf32> to vector<1x128xf32>
    %20 = vector.broadcast %18 : vector<128x1xf32> to vector<128x128xf32>
    %21 = vector.broadcast %19 : vector<1x128xf32> to vector<128x128xf32>
    %22 = arith.subf %20, %21 : vector<128x128xf32>
    %23 = math.absf %22 : vector<128x128xf32>
    %24 = arith.addf %17, %23 : vector<128x128xf32>
    %25 = vector.extract_strided_slice %4 {offsets = [0, 3], sizes = [128, 1], strides = [1, 1]} : vector<128x32xf32> to vector<128x1xf32>
    %26 = vector.extract_strided_slice %3 {offsets = [3, 0], sizes = [1, 128], strides = [1, 1]} : vector<32x128xf32> to vector<1x128xf32>
    %27 = vector.broadcast %25 : vector<128x1xf32> to vector<128x128xf32>
    %28 = vector.broadcast %26 : vector<1x128xf32> to vector<128x128xf32>
    %29 = arith.subf %27, %28 : vector<128x128xf32>
    %30 = math.absf %29 : vector<128x128xf32>
    %31 = arith.addf %24, %30 : vector<128x128xf32>
    %cst = arith.constant 0.000000e+00 : f32
    %32 = vector.broadcast %cst : f32 to vector<128x128xf32>
    %33 = arith.subf %32, %31 : vector<128x128xf32>
    %34 = math.exp %33 : vector<128x128xf32>
    %cst_4 = arith.constant dense<0.000000e+00> : vector<128xf32>
    %35 = vector.multi_reduction <add>, %34, %cst_4 [0] : vector<128x128xf32> to vector<128xf32>
    %36 = vector.shape_cast %35 : vector<128xf32> to vector<1x128xf32>
    %37 = vector.extract_strided_slice %4 {offsets = [0, 4], sizes = [128, 1], strides = [1, 1]} : vector<128x32xf32> to vector<128x1xf32>
    %38 = vector.extract_strided_slice %3 {offsets = [4, 0], sizes = [1, 128], strides = [1, 1]} : vector<32x128xf32> to vector<1x128xf32>
    %39 = vector.broadcast %37 : vector<128x1xf32> to vector<128x128xf32>
    %40 = vector.broadcast %38 : vector<1x128xf32> to vector<128x128xf32>
    %41 = arith.subf %39, %40 : vector<128x128xf32>
    %42 = math.absf %41 : vector<128x128xf32>
    %43 = vector.extract_strided_slice %4 {offsets = [0, 5], sizes = [128, 1], strides = [1, 1]} : vector<128x32xf32> to vector<128x1xf32>
    %44 = vector.extract_strided_slice %3 {offsets = [5, 0], sizes = [1, 128], strides = [1, 1]} : vector<32x128xf32> to vector<1x128xf32>
    %45 = vector.broadcast %43 : vector<128x1xf32> to vector<128x128xf32>
    %46 = vector.broadcast %44 : vector<1x128xf32> to vector<128x128xf32>
    %47 = arith.subf %45, %46 : vector<128x128xf32>
    %48 = math.absf %47 : vector<128x128xf32>
    %49 = arith.addf %42, %48 : vector<128x128xf32>
    %50 = vector.extract_strided_slice %4 {offsets = [0, 6], sizes = [128, 1], strides = [1, 1]} : vector<128x32xf32> to vector<128x1xf32>
    %51 = vector.extract_strided_slice %3 {offsets = [6, 0], sizes = [1, 128], strides = [1, 1]} : vector<32x128xf32> to vector<1x128xf32>
    %52 = vector.broadcast %50 : vector<128x1xf32> to vector<128x128xf32>
    %53 = vector.broadcast %51 : vector<1x128xf32> to vector<128x128xf32>
    %54 = arith.subf %52, %53 : vector<128x128xf32>
    %55 = math.absf %54 : vector<128x128xf32>
    %56 = arith.addf %49, %55 : vector<128x128xf32>
    %57 = vector.extract_strided_slice %4 {offsets = [0, 7], sizes = [128, 1], strides = [1, 1]} : vector<128x32xf32> to vector<128x1xf32>
    %58 = vector.extract_strided_slice %3 {offsets = [7, 0], sizes = [1, 128], strides = [1, 1]} : vector<32x128xf32> to vector<1x128xf32>
    %59 = vector.broadcast %57 : vector<128x1xf32> to vector<128x128xf32>
    %60 = vector.broadcast %58 : vector<1x128xf32> to vector<128x128xf32>
    %61 = arith.subf %59, %60 : vector<128x128xf32>
    %62 = math.absf %61 : vector<128x128xf32>
    %63 = arith.addf %56, %62 : vector<128x128xf32>
    %cst_5 = arith.constant 0.000000e+00 : f32
    %64 = vector.broadcast %cst_5 : f32 to vector<128x128xf32>
    %65 = arith.subf %64, %63 : vector<128x128xf32>
    %66 = math.exp %65 : vector<128x128xf32>
    %cst_6 = arith.constant dense<0.000000e+00> : vector<128xf32>
    %67 = vector.multi_reduction <add>, %66, %cst_6 [0] : vector<128x128xf32> to vector<128xf32>
    %68 = vector.shape_cast %67 : vector<128xf32> to vector<1x128xf32>
    %69 = vector.extract_strided_slice %4 {offsets = [0, 8], sizes = [128, 1], strides = [1, 1]} : vector<128x32xf32> to vector<128x1xf32>
    %70 = vector.extract_strided_slice %3 {offsets = [8, 0], sizes = [1, 128], strides = [1, 1]} : vector<32x128xf32> to vector<1x128xf32>
    %71 = vector.broadcast %69 : vector<128x1xf32> to vector<128x128xf32>
    %72 = vector.broadcast %70 : vector<1x128xf32> to vector<128x128xf32>
    %73 = arith.subf %71, %72 : vector<128x128xf32>
    %74 = math.absf %73 : vector<128x128xf32>
    %75 = vector.extract_strided_slice %4 {offsets = [0, 9], sizes = [128, 1], strides = [1, 1]} : vector<128x32xf32> to vector<128x1xf32>
    %76 = vector.extract_strided_slice %3 {offsets = [9, 0], sizes = [1, 128], strides = [1, 1]} : vector<32x128xf32> to vector<1x128xf32>
    %77 = vector.broadcast %75 : vector<128x1xf32> to vector<128x128xf32>
    %78 = vector.broadcast %76 : vector<1x128xf32> to vector<128x128xf32>
    %79 = arith.subf %77, %78 : vector<128x128xf32>
    %80 = math.absf %79 : vector<128x128xf32>
    %81 = arith.addf %74, %80 : vector<128x128xf32>
    %82 = vector.extract_strided_slice %4 {offsets = [0, 10], sizes = [128, 1], strides = [1, 1]} : vector<128x32xf32> to vector<128x1xf32>
    %83 = vector.extract_strided_slice %3 {offsets = [10, 0], sizes = [1, 128], strides = [1, 1]} : vector<32x128xf32> to vector<1x128xf32>
    %84 = vector.broadcast %82 : vector<128x1xf32> to vector<128x128xf32>
    %85 = vector.broadcast %83 : vector<1x128xf32> to vector<128x128xf32>
    %86 = arith.subf %84, %85 : vector<128x128xf32>
    %87 = math.absf %86 : vector<128x128xf32>
    %88 = arith.addf %81, %87 : vector<128x128xf32>
    %89 = vector.extract_strided_slice %4 {offsets = [0, 11], sizes = [128, 1], strides = [1, 1]} : vector<128x32xf32> to vector<128x1xf32>
    %90 = vector.extract_strided_slice %3 {offsets = [11, 0], sizes = [1, 128], strides = [1, 1]} : vector<32x128xf32> to vector<1x128xf32>
    %91 = vector.broadcast %89 : vector<128x1xf32> to vector<128x128xf32>
    %92 = vector.broadcast %90 : vector<1x128xf32> to vector<128x128xf32>
    %93 = arith.subf %91, %92 : vector<128x128xf32>
    %94 = math.absf %93 : vector<128x128xf32>
    %95 = arith.addf %88, %94 : vector<128x128xf32>
    %cst_7 = arith.constant 0.000000e+00 : f32
    %96 = vector.broadcast %cst_7 : f32 to vector<128x128xf32>
    %97 = arith.subf %96, %95 : vector<128x128xf32>
    %98 = math.exp %97 : vector<128x128xf32>
    %cst_8 = arith.constant dense<0.000000e+00> : vector<128xf32>
    %99 = vector.multi_reduction <add>, %98, %cst_8 [0] : vector<128x128xf32> to vector<128xf32>
    %100 = vector.shape_cast %99 : vector<128xf32> to vector<1x128xf32>
    %101 = vector.extract_strided_slice %4 {offsets = [0, 12], sizes = [128, 1], strides = [1, 1]} : vector<128x32xf32> to vector<128x1xf32>
    %102 = vector.extract_strided_slice %3 {offsets = [12, 0], sizes = [1, 128], strides = [1, 1]} : vector<32x128xf32> to vector<1x128xf32>
    %103 = vector.broadcast %101 : vector<128x1xf32> to vector<128x128xf32>
    %104 = vector.broadcast %102 : vector<1x128xf32> to vector<128x128xf32>
    %105 = arith.subf %103, %104 : vector<128x128xf32>
    %106 = math.absf %105 : vector<128x128xf32>
    %107 = vector.extract_strided_slice %4 {offsets = [0, 13], sizes = [128, 1], strides = [1, 1]} : vector<128x32xf32> to vector<128x1xf32>
    %108 = vector.extract_strided_slice %3 {offsets = [13, 0], sizes = [1, 128], strides = [1, 1]} : vector<32x128xf32> to vector<1x128xf32>
    %109 = vector.broadcast %107 : vector<128x1xf32> to vector<128x128xf32>
    %110 = vector.broadcast %108 : vector<1x128xf32> to vector<128x128xf32>
    %111 = arith.subf %109, %110 : vector<128x128xf32>
    %112 = math.absf %111 : vector<128x128xf32>
    %113 = arith.addf %106, %112 : vector<128x128xf32>
    %114 = vector.extract_strided_slice %4 {offsets = [0, 14], sizes = [128, 1], strides = [1, 1]} : vector<128x32xf32> to vector<128x1xf32>
    %115 = vector.extract_strided_slice %3 {offsets = [14, 0], sizes = [1, 128], strides = [1, 1]} : vector<32x128xf32> to vector<1x128xf32>
    %116 = vector.broadcast %114 : vector<128x1xf32> to vector<128x128xf32>
    %117 = vector.broadcast %115 : vector<1x128xf32> to vector<128x128xf32>
    %118 = arith.subf %116, %117 : vector<128x128xf32>
    %119 = math.absf %118 : vector<128x128xf32>
    %120 = arith.addf %113, %119 : vector<128x128xf32>
    %121 = vector.extract_strided_slice %4 {offsets = [0, 15], sizes = [128, 1], strides = [1, 1]} : vector<128x32xf32> to vector<128x1xf32>
    %122 = vector.extract_strided_slice %3 {offsets = [15, 0], sizes = [1, 128], strides = [1, 1]} : vector<32x128xf32> to vector<1x128xf32>
    %123 = vector.broadcast %121 : vector<128x1xf32> to vector<128x128xf32>
    %124 = vector.broadcast %122 : vector<1x128xf32> to vector<128x128xf32>
    %125 = arith.subf %123, %124 : vector<128x128xf32>
    %126 = math.absf %125 : vector<128x128xf32>
    %127 = arith.addf %120, %126 : vector<128x128xf32>
    %cst_9 = arith.constant 0.000000e+00 : f32
    %128 = vector.broadcast %cst_9 : f32 to vector<128x128xf32>
    %129 = arith.subf %128, %127 : vector<128x128xf32>
    %130 = math.exp %129 : vector<128x128xf32>
    %cst_10 = arith.constant dense<0.000000e+00> : vector<128xf32>
    %131 = vector.multi_reduction <add>, %130, %cst_10 [0] : vector<128x128xf32> to vector<128xf32>
    %132 = vector.shape_cast %131 : vector<128xf32> to vector<1x128xf32>
    %133 = vector.extract_strided_slice %4 {offsets = [0, 16], sizes = [128, 1], strides = [1, 1]} : vector<128x32xf32> to vector<128x1xf32>
    %134 = vector.extract_strided_slice %3 {offsets = [16, 0], sizes = [1, 128], strides = [1, 1]} : vector<32x128xf32> to vector<1x128xf32>
    %135 = vector.broadcast %133 : vector<128x1xf32> to vector<128x128xf32>
    %136 = vector.broadcast %134 : vector<1x128xf32> to vector<128x128xf32>
    %137 = arith.subf %135, %136 : vector<128x128xf32>
    %138 = math.absf %137 : vector<128x128xf32>
    %139 = vector.extract_strided_slice %4 {offsets = [0, 17], sizes = [128, 1], strides = [1, 1]} : vector<128x32xf32> to vector<128x1xf32>
    %140 = vector.extract_strided_slice %3 {offsets = [17, 0], sizes = [1, 128], strides = [1, 1]} : vector<32x128xf32> to vector<1x128xf32>
    %141 = vector.broadcast %139 : vector<128x1xf32> to vector<128x128xf32>
    %142 = vector.broadcast %140 : vector<1x128xf32> to vector<128x128xf32>
    %143 = arith.subf %141, %142 : vector<128x128xf32>
    %144 = math.absf %143 : vector<128x128xf32>
    %145 = arith.addf %138, %144 : vector<128x128xf32>
    %146 = vector.extract_strided_slice %4 {offsets = [0, 18], sizes = [128, 1], strides = [1, 1]} : vector<128x32xf32> to vector<128x1xf32>
    %147 = vector.extract_strided_slice %3 {offsets = [18, 0], sizes = [1, 128], strides = [1, 1]} : vector<32x128xf32> to vector<1x128xf32>
    %148 = vector.broadcast %146 : vector<128x1xf32> to vector<128x128xf32>
    %149 = vector.broadcast %147 : vector<1x128xf32> to vector<128x128xf32>
    %150 = arith.subf %148, %149 : vector<128x128xf32>
    %151 = math.absf %150 : vector<128x128xf32>
    %152 = arith.addf %145, %151 : vector<128x128xf32>
    %153 = vector.extract_strided_slice %4 {offsets = [0, 19], sizes = [128, 1], strides = [1, 1]} : vector<128x32xf32> to vector<128x1xf32>
    %154 = vector.extract_strided_slice %3 {offsets = [19, 0], sizes = [1, 128], strides = [1, 1]} : vector<32x128xf32> to vector<1x128xf32>
    %155 = vector.broadcast %153 : vector<128x1xf32> to vector<128x128xf32>
    %156 = vector.broadcast %154 : vector<1x128xf32> to vector<128x128xf32>
    %157 = arith.subf %155, %156 : vector<128x128xf32>
    %158 = math.absf %157 : vector<128x128xf32>
    %159 = arith.addf %152, %158 : vector<128x128xf32>
    %cst_11 = arith.constant 0.000000e+00 : f32
    %160 = vector.broadcast %cst_11 : f32 to vector<128x128xf32>
    %161 = arith.subf %160, %159 : vector<128x128xf32>
    %162 = math.exp %161 : vector<128x128xf32>
    %cst_12 = arith.constant dense<0.000000e+00> : vector<128xf32>
    %163 = vector.multi_reduction <add>, %162, %cst_12 [0] : vector<128x128xf32> to vector<128xf32>
    %164 = vector.shape_cast %163 : vector<128xf32> to vector<1x128xf32>
    %165 = vector.extract_strided_slice %4 {offsets = [0, 20], sizes = [128, 1], strides = [1, 1]} : vector<128x32xf32> to vector<128x1xf32>
    %166 = vector.extract_strided_slice %3 {offsets = [20, 0], sizes = [1, 128], strides = [1, 1]} : vector<32x128xf32> to vector<1x128xf32>
    %167 = vector.broadcast %165 : vector<128x1xf32> to vector<128x128xf32>
    %168 = vector.broadcast %166 : vector<1x128xf32> to vector<128x128xf32>
    %169 = arith.subf %167, %168 : vector<128x128xf32>
    %170 = math.absf %169 : vector<128x128xf32>
    %171 = vector.extract_strided_slice %4 {offsets = [0, 21], sizes = [128, 1], strides = [1, 1]} : vector<128x32xf32> to vector<128x1xf32>
    %172 = vector.extract_strided_slice %3 {offsets = [21, 0], sizes = [1, 128], strides = [1, 1]} : vector<32x128xf32> to vector<1x128xf32>
    %173 = vector.broadcast %171 : vector<128x1xf32> to vector<128x128xf32>
    %174 = vector.broadcast %172 : vector<1x128xf32> to vector<128x128xf32>
    %175 = arith.subf %173, %174 : vector<128x128xf32>
    %176 = math.absf %175 : vector<128x128xf32>
    %177 = arith.addf %170, %176 : vector<128x128xf32>
    %178 = vector.extract_strided_slice %4 {offsets = [0, 22], sizes = [128, 1], strides = [1, 1]} : vector<128x32xf32> to vector<128x1xf32>
    %179 = vector.extract_strided_slice %3 {offsets = [22, 0], sizes = [1, 128], strides = [1, 1]} : vector<32x128xf32> to vector<1x128xf32>
    %180 = vector.broadcast %178 : vector<128x1xf32> to vector<128x128xf32>
    %181 = vector.broadcast %179 : vector<1x128xf32> to vector<128x128xf32>
    %182 = arith.subf %180, %181 : vector<128x128xf32>
    %183 = math.absf %182 : vector<128x128xf32>
    %184 = arith.addf %177, %183 : vector<128x128xf32>
    %185 = vector.extract_strided_slice %4 {offsets = [0, 23], sizes = [128, 1], strides = [1, 1]} : vector<128x32xf32> to vector<128x1xf32>
    %186 = vector.extract_strided_slice %3 {offsets = [23, 0], sizes = [1, 128], strides = [1, 1]} : vector<32x128xf32> to vector<1x128xf32>
    %187 = vector.broadcast %185 : vector<128x1xf32> to vector<128x128xf32>
    %188 = vector.broadcast %186 : vector<1x128xf32> to vector<128x128xf32>
    %189 = arith.subf %187, %188 : vector<128x128xf32>
    %190 = math.absf %189 : vector<128x128xf32>
    %191 = arith.addf %184, %190 : vector<128x128xf32>
    %cst_13 = arith.constant 0.000000e+00 : f32
    %192 = vector.broadcast %cst_13 : f32 to vector<128x128xf32>
    %193 = arith.subf %192, %191 : vector<128x128xf32>
    %194 = math.exp %193 : vector<128x128xf32>
    %cst_14 = arith.constant dense<0.000000e+00> : vector<128xf32>
    %195 = vector.multi_reduction <add>, %194, %cst_14 [0] : vector<128x128xf32> to vector<128xf32>
    %196 = vector.shape_cast %195 : vector<128xf32> to vector<1x128xf32>
    %197 = vector.extract_strided_slice %4 {offsets = [0, 24], sizes = [128, 1], strides = [1, 1]} : vector<128x32xf32> to vector<128x1xf32>
    %198 = vector.extract_strided_slice %3 {offsets = [24, 0], sizes = [1, 128], strides = [1, 1]} : vector<32x128xf32> to vector<1x128xf32>
    %199 = vector.broadcast %197 : vector<128x1xf32> to vector<128x128xf32>
    %200 = vector.broadcast %198 : vector<1x128xf32> to vector<128x128xf32>
    %201 = arith.subf %199, %200 : vector<128x128xf32>
    %202 = math.absf %201 : vector<128x128xf32>
    %203 = vector.extract_strided_slice %4 {offsets = [0, 25], sizes = [128, 1], strides = [1, 1]} : vector<128x32xf32> to vector<128x1xf32>
    %204 = vector.extract_strided_slice %3 {offsets = [25, 0], sizes = [1, 128], strides = [1, 1]} : vector<32x128xf32> to vector<1x128xf32>
    %205 = vector.broadcast %203 : vector<128x1xf32> to vector<128x128xf32>
    %206 = vector.broadcast %204 : vector<1x128xf32> to vector<128x128xf32>
    %207 = arith.subf %205, %206 : vector<128x128xf32>
    %208 = math.absf %207 : vector<128x128xf32>
    %209 = arith.addf %202, %208 : vector<128x128xf32>
    %210 = vector.extract_strided_slice %4 {offsets = [0, 26], sizes = [128, 1], strides = [1, 1]} : vector<128x32xf32> to vector<128x1xf32>
    %211 = vector.extract_strided_slice %3 {offsets = [26, 0], sizes = [1, 128], strides = [1, 1]} : vector<32x128xf32> to vector<1x128xf32>
    %212 = vector.broadcast %210 : vector<128x1xf32> to vector<128x128xf32>
    %213 = vector.broadcast %211 : vector<1x128xf32> to vector<128x128xf32>
    %214 = arith.subf %212, %213 : vector<128x128xf32>
    %215 = math.absf %214 : vector<128x128xf32>
    %216 = arith.addf %209, %215 : vector<128x128xf32>
    %217 = vector.extract_strided_slice %4 {offsets = [0, 27], sizes = [128, 1], strides = [1, 1]} : vector<128x32xf32> to vector<128x1xf32>
    %218 = vector.extract_strided_slice %3 {offsets = [27, 0], sizes = [1, 128], strides = [1, 1]} : vector<32x128xf32> to vector<1x128xf32>
    %219 = vector.broadcast %217 : vector<128x1xf32> to vector<128x128xf32>
    %220 = vector.broadcast %218 : vector<1x128xf32> to vector<128x128xf32>
    %221 = arith.subf %219, %220 : vector<128x128xf32>
    %222 = math.absf %221 : vector<128x128xf32>
    %223 = arith.addf %216, %222 : vector<128x128xf32>
    %cst_15 = arith.constant 0.000000e+00 : f32
    %224 = vector.broadcast %cst_15 : f32 to vector<128x128xf32>
    %225 = arith.subf %224, %223 : vector<128x128xf32>
    %226 = math.exp %225 : vector<128x128xf32>
    %cst_16 = arith.constant dense<0.000000e+00> : vector<128xf32>
    %227 = vector.multi_reduction <add>, %226, %cst_16 [0] : vector<128x128xf32> to vector<128xf32>
    %228 = vector.shape_cast %227 : vector<128xf32> to vector<1x128xf32>
    %229 = vector.extract_strided_slice %4 {offsets = [0, 28], sizes = [128, 1], strides = [1, 1]} : vector<128x32xf32> to vector<128x1xf32>
    %230 = vector.extract_strided_slice %3 {offsets = [28, 0], sizes = [1, 128], strides = [1, 1]} : vector<32x128xf32> to vector<1x128xf32>
    %231 = vector.broadcast %229 : vector<128x1xf32> to vector<128x128xf32>
    %232 = vector.broadcast %230 : vector<1x128xf32> to vector<128x128xf32>
    %233 = arith.subf %231, %232 : vector<128x128xf32>
    %234 = math.absf %233 : vector<128x128xf32>
    %235 = vector.extract_strided_slice %4 {offsets = [0, 29], sizes = [128, 1], strides = [1, 1]} : vector<128x32xf32> to vector<128x1xf32>
    %236 = vector.extract_strided_slice %3 {offsets = [29, 0], sizes = [1, 128], strides = [1, 1]} : vector<32x128xf32> to vector<1x128xf32>
    %237 = vector.broadcast %235 : vector<128x1xf32> to vector<128x128xf32>
    %238 = vector.broadcast %236 : vector<1x128xf32> to vector<128x128xf32>
    %239 = arith.subf %237, %238 : vector<128x128xf32>
    %240 = math.absf %239 : vector<128x128xf32>
    %241 = arith.addf %234, %240 : vector<128x128xf32>
    %242 = vector.extract_strided_slice %4 {offsets = [0, 30], sizes = [128, 1], strides = [1, 1]} : vector<128x32xf32> to vector<128x1xf32>
    %243 = vector.extract_strided_slice %3 {offsets = [30, 0], sizes = [1, 128], strides = [1, 1]} : vector<32x128xf32> to vector<1x128xf32>
    %244 = vector.broadcast %242 : vector<128x1xf32> to vector<128x128xf32>
    %245 = vector.broadcast %243 : vector<1x128xf32> to vector<128x128xf32>
    %246 = arith.subf %244, %245 : vector<128x128xf32>
    %247 = math.absf %246 : vector<128x128xf32>
    %248 = arith.addf %241, %247 : vector<128x128xf32>
    %249 = vector.extract_strided_slice %4 {offsets = [0, 31], sizes = [128, 1], strides = [1, 1]} : vector<128x32xf32> to vector<128x1xf32>
    %250 = vector.extract_strided_slice %3 {offsets = [31, 0], sizes = [1, 128], strides = [1, 1]} : vector<32x128xf32> to vector<1x128xf32>
    %251 = vector.broadcast %249 : vector<128x1xf32> to vector<128x128xf32>
    %252 = vector.broadcast %250 : vector<1x128xf32> to vector<128x128xf32>
    %253 = arith.subf %251, %252 : vector<128x128xf32>
    %254 = math.absf %253 : vector<128x128xf32>
    %255 = arith.addf %248, %254 : vector<128x128xf32>
    %cst_17 = arith.constant 0.000000e+00 : f32
    %256 = vector.broadcast %cst_17 : f32 to vector<128x128xf32>
    %257 = arith.subf %256, %255 : vector<128x128xf32>
    %258 = math.exp %257 : vector<128x128xf32>
    %cst_18 = arith.constant dense<0.000000e+00> : vector<128xf32>
    %259 = vector.multi_reduction <add>, %258, %cst_18 [0] : vector<128x128xf32> to vector<128xf32>
    %260 = vector.shape_cast %259 : vector<128xf32> to vector<1x128xf32>
    %c0_19 = arith.constant 0 : index
    %c0_20 = arith.constant 0 : index
    %261 = vector.load %arg4[%c0_19, %c0_20] : memref<8x128xf32, #tpu.memory_space<vmem>>, vector<8x128xf32>
    %262 = tpu.concatenate %36, %68, %100, %132, %164, %196, %228, %260 in 0 : vector<1x128xf32>, vector<1x128xf32>, vector<1x128xf32>, vector<1x128xf32>, vector<1x128xf32>, vector<1x128xf32>, vector<1x128xf32>, vector<1x128xf32> -> vector<8x128xf32>
    %263 = arith.addf %261, %262 : vector<8x128xf32>
    %c0_21 = arith.constant 0 : index
    %c0_22 = arith.constant 0 : index
    %264 = vector.load %arg4[%c0_21, %c0_22] : memref<8x128xf32, #tpu.memory_space<vmem>>, vector<8x128xf32>
    tpu.vector_store %arg4[%c0_21, %c0_22], %263 {strides = array<i32>} : memref<8x128xf32, #tpu.memory_space<vmem>>, vector<8x128xf32>,
    return
  }
  func.func @transform_0(%arg0: i32, %arg1: i32) -> (i32, i32) {
    %c0_i32 = arith.constant 0 : i32
    %c0_i32_0 = arith.constant 0 : i32
    return %c0_i32, %arg0 : i32, i32
  }
  func.func @transform_1(%arg0: i32, %arg1: i32) -> (i32, i32) {
    %c0_i32 = arith.constant 0 : i32
    %c0_i32_0 = arith.constant 0 : i32
    return %arg1, %c0_i32 : i32, i32
  }
  func.func @transform_2(%arg0: i32, %arg1: i32) -> (i32, i32) {
    %c0_i32 = arith.constant 0 : i32
    %c0_i32_0 = arith.constant 0 : i32
    return %c0_i32, %arg0 : i32, i32
  }
}

</mosaic_0001>

<llo_original>
// kernel: tpu_custom_call.1
$region0: #{tpu_custom_call.1}
  #allocation0 [shape = 'u32[]', space=smem, size = 0x4, offset = 0x4, fixed_abs, tag = 'smem constant byte address 0x4 - core index']
  #allocation1 [shape = 'u32[144,128]{1,0:T(1,128)}', space=vmem, size = 0x12000, scoped, tag = 'internal scratch']
  %s0 = inlined_call_operand.vmem [shape: f32[32,128], index: 0, kind: input, shape index: {}]
  %s1 = inlined_call_operand.vmem [shape: f32[128,32], index: 1, kind: input, shape index: {}]
  %s2 = inlined_call_operand.hbm [shape: f32[8,128], index: 2, kind: output, shape index: {}]
  %s3 = sld [smem:[#allocation0]]
  $region22: #{tpu_custom_call.1} parent=0
    _
  %s5 = ssub.s32 1, %s3
  %s6 = scalar_select 0, %s5, %s3
  $region1: #{tpu_custom_call.1} parent=0
    #allocation2 [shape = 'u8[4096]{0}', space=vmem, size = 0x1000, scoped, tag = 'output window, operand 0, single buffered']
    #allocation3 [shape = 's32[1]{0}', space=sflag, size = 0x4, scoped, tag = 'scoped memory for tpu_custom_call.1']
    %7 = vsyncpa [#allocation3], 0
    // Predicated region
    $region2: #{tpu_custom_call.1} parent=1 // pred_check
      _
    $region3: #{tpu_custom_call.1} parent=1 // pred_check_branch
      %9 = sbr.rel (0) target = $region5
    $region4: #{tpu_custom_call.1} parent=1 // pred_region
      _
    $region5: #{tpu_custom_call.1} parent=1 // pred_fallthru
      _
    // Predicated region
    $region6: #{tpu_custom_call.1} parent=1 // pred_check
      _
    $region7: #{tpu_custom_call.1} parent=1 // pred_check_branch
      %11 = sbr.rel (0) target = $region9
    $region8: #{tpu_custom_call.1} parent=1 // pred_region
      _
    $region9: #{tpu_custom_call.1} parent=1 // pred_fallthru
      _
    %p12 = scmp.eq.s32.totalorder 0, 0
    // Predicated region
    $region10: #{tpu_custom_call.1} parent=1 // pred_check
      %p13 = pneg %p12
    $region11: #{tpu_custom_call.1} parent=1 // pred_check_branch
      %15 = sbr.rel (%p13) target = $region13
    $region12: #{tpu_custom_call.1} parent=1 // pred_region
      %16 = vst [vmem:[#allocation2] sm:$0xff] 0.0
    $region13: #{tpu_custom_call.1} parent=1 // pred_fallthru
      _
    %v17 = vld [vmem:[%s0] sm:$0xff]
    %v18 = vld [vmem:[%s0 + $0x8] sm:$0xff]
    %v19 = vld [vmem:[%s0 + $0x10] sm:$0xff]
    %v20 = vld [vmem:[%s0 + $0x18] sm:$0xff]
    %v21 = vld [vmem:[%s1] sm:$0xff]
    %v22 = vld [vmem:[%s1 + $0x8] sm:$0xff]
    %v23 = vld [vmem:[%s1 + $0x10] sm:$0xff]
    %v24 = vld [vmem:[%s1 + $0x18] sm:$0xff]
    %v25 = vld [vmem:[%s1 + $0x20] sm:$0xff]
    %v26 = vld [vmem:[%s1 + $0x28] sm:$0xff]
    %v27 = vld [vmem:[%s1 + $0x30] sm:$0xff]
    %v28 = vld [vmem:[%s1 + $0x38] sm:$0xff]
    %v29 = vld [vmem:[%s1 + $0x40] sm:$0xff]
    %v30 = vld [vmem:[%s1 + $0x48] sm:$0xff]
    %v31 = vld [vmem:[%s1 + $0x50] sm:$0xff]
    %v32 = vld [vmem:[%s1 + $0x58] sm:$0xff]
    %v33 = vld [vmem:[%s1 + $0x60] sm:$0xff]
    %v34 = vld [vmem:[%s1 + $0x68] sm:$0xff]
    %v35 = vld [vmem:[%s1 + $0x70] sm:$0xff]
    %v36 = vld [vmem:[%s1 + $0x78] sm:$0xff]
    %38 = vset.pattern.permute.xlu0 0
    %39 = vperm.xlu0 %38, %v21
    %v40 = vpop.permute.xlu0 %39
    %43 = vset.pattern.permute.xlu0 0
    %44 = vperm.xlu0 %43, %v22
    %v45 = vpop.permute.xlu0 %44
    %48 = vset.pattern.permute.xlu0 0
    %49 = vperm.xlu0 %48, %v23
    %v50 = vpop.permute.xlu0 %49
    %53 = vset.pattern.permute.xlu0 0
    %54 = vperm.xlu0 %53, %v24
    %v55 = vpop.permute.xlu0 %54
    %58 = vset.pattern.permute.xlu0 0
    %59 = vperm.xlu0 %58, %v25
    %v60 = vpop.permute.xlu0 %59
    %63 = vset.pattern.permute.xlu0 0
    %64 = vperm.xlu0 %63, %v26
    %v65 = vpop.permute.xlu0 %64
    %68 = vset.pattern.permute.xlu0 0
    %69 = vperm.xlu0 %68, %v27
    %v70 = vpop.permute.xlu0 %69
    %73 = vset.pattern.permute.xlu0 0
    %74 = vperm.xlu0 %73, %v28
    %v75 = vpop.permute.xlu0 %74
    %78 = vset.pattern.permute.xlu0 0
    %79 = vperm.xlu0 %78, %v29
    %v80 = vpop.permute.xlu0 %79
    %83 = vset.pattern.permute.xlu0 0
    %84 = vperm.xlu0 %83, %v30
    %v85 = vpop.permute.xlu0 %84
    %88 = vset.pattern.permute.xlu0 0
    %89 = vperm.xlu0 %88, %v31
    %v90 = vpop.permute.xlu0 %89
    %93 = vset.pattern.permute.xlu0 0
    %94 = vperm.xlu0 %93, %v32
    %v95 = vpop.permute.xlu0 %94
    %98 = vset.pattern.permute.xlu0 0
    %99 = vperm.xlu0 %98, %v33
    %v100 = vpop.permute.xlu0 %99
    %103 = vset.pattern.permute.xlu0 0
    %104 = vperm.xlu0 %103, %v34
    %v105 = vpop.permute.xlu0 %104
    %108 = vset.pattern.permute.xlu0 0
    %109 = vperm.xlu0 %108, %v35
    %v110 = vpop.permute.xlu0 %109
    %113 = vset.pattern.permute.xlu0 0
    %114 = vperm.xlu0 %113, %v36
    %v115 = vpop.permute.xlu0 %114
    %v117 = vlaneseq
    %v118 = vshrl.u32 %v117, 7
    %v119 = vsub.s32 0, %v118
    %v120 = vrot.slane %v17, %v119
    %v121 = vsub.f32 %v40, %v120
    %v122 = vsub.f32 %v45, %v120
    %v123 = vsub.f32 %v50, %v120
    %v124 = vsub.f32 %v55, %v120
    %v125 = vsub.f32 %v60, %v120
    %v126 = vsub.f32 %v65, %v120
    %v127 = vsub.f32 %v70, %v120
    %v128 = vsub.f32 %v75, %v120
    %v129 = vsub.f32 %v80, %v120
    %v130 = vsub.f32 %v85, %v120
    %v131 = vsub.f32 %v90, %v120
    %v132 = vsub.f32 %v95, %v120
    %v133 = vsub.f32 %v100, %v120
    %v134 = vsub.f32 %v105, %v120
    %v135 = vsub.f32 %v110, %v120
    %v136 = vsub.f32 %v115, %v120
    %v137 = vand.u32 2147483647, %v121
    %v138 = vand.u32 2147483647, %v122
    %v139 = vand.u32 2147483647, %v123
    %v140 = vand.u32 2147483647, %v124
    %v141 = vand.u32 2147483647, %v125
    %v142 = vand.u32 2147483647, %v126
    %v143 = vand.u32 2147483647, %v127
    %v144 = vand.u32 2147483647, %v128
    %v145 = vand.u32 2147483647, %v129
    %v146 = vand.u32 2147483647, %v130
    %v147 = vand.u32 2147483647, %v131
    %v148 = vand.u32 2147483647, %v132
    %v149 = vand.u32 2147483647, %v133
    %v150 = vand.u32 2147483647, %v134
    %v151 = vand.u32 2147483647, %v135
    %v152 = vand.u32 2147483647, %v136
    %153 = vset.pattern.permute.xlu0 1
    %154 = vperm.xlu0 %153, %v21
    %v155 = vpop.permute.xlu0 %154
    %157 = vset.pattern.permute.xlu0 1
    %158 = vperm.xlu0 %157, %v22
    %v159 = vpop.permute.xlu0 %158
    %161 = vset.pattern.permute.xlu0 1
    %162 = vperm.xlu0 %161, %v23
    %v163 = vpop.permute.xlu0 %162
    %165 = vset.pattern.permute.xlu0 1
    %166 = vperm.xlu0 %165, %v24
    %v167 = vpop.permute.xlu0 %166
    %169 = vset.pattern.permute.xlu0 1
    %170 = vperm.xlu0 %169, %v25
    %v171 = vpop.permute.xlu0 %170
    %173 = vset.pattern.permute.xlu0 1
    %174 = vperm.xlu0 %173, %v26
    %v175 = vpop.permute.xlu0 %174
    %177 = vset.pattern.permute.xlu0 1
    %178 = vperm.xlu0 %177, %v27
    %v179 = vpop.permute.xlu0 %178
    %181 = vset.pattern.permute.xlu0 1
    %182 = vperm.xlu0 %181, %v28
    %v183 = vpop.permute.xlu0 %182
    %185 = vset.pattern.permute.xlu0 1
    %186 = vperm.xlu0 %185, %v29
    %v187 = vpop.permute.xlu0 %186
    %189 = vset.pattern.permute.xlu0 1
    %190 = vperm.xlu0 %189, %v30
    %v191 = vpop.permute.xlu0 %190
    %193 = vset.pattern.permute.xlu0 1
    %194 = vperm.xlu0 %193, %v31
    %v195 = vpop.permute.xlu0 %194
    %197 = vset.pattern.permute.xlu0 1
    %198 = vperm.xlu0 %197, %v32
    %v199 = vpop.permute.xlu0 %198
    %201 = vset.pattern.permute.xlu0 1
    %202 = vperm.xlu0 %201, %v33
    %v203 = vpop.permute.xlu0 %202
    %205 = vset.pattern.permute.xlu0 1
    %206 = vperm.xlu0 %205, %v34
    %v207 = vpop.permute.xlu0 %206
    %209 = vset.pattern.permute.xlu0 1
    %210 = vperm.xlu0 %209, %v35
    %v211 = vpop.permute.xlu0 %210
    %213 = vset.pattern.permute.xlu0 1
    %214 = vperm.xlu0 %213, %v36
    %v215 = vpop.permute.xlu0 %214
    %v217 = vlaneseq
    %v218 = vshrl.u32 %v217, 7
    %v219 = vsub.s32 1, %v218
    %v220 = vrot.slane %v17, %v219
    %v221 = vsub.f32 %v155, %v220
    %v222 = vsub.f32 %v159, %v220
    %v223 = vsub.f32 %v163, %v220
    %v224 = vsub.f32 %v167, %v220
    %v225 = vsub.f32 %v171, %v220
    %v226 = vsub.f32 %v175, %v220
    %v227 = vsub.f32 %v179, %v220
    %v228 = vsub.f32 %v183, %v220
    %v229 = vsub.f32 %v187, %v220
    %v230 = vsub.f32 %v191, %v220
    %v231 = vsub.f32 %v195, %v220
    %v232 = vsub.f32 %v199, %v220
    %v233 = vsub.f32 %v203, %v220
    %v234 = vsub.f32 %v207, %v220
    %v235 = vsub.f32 %v211, %v220
    %v236 = vsub.f32 %v215, %v220
    %v237 = vand.u32 2147483647, %v221
    %v238 = vand.u32 2147483647, %v222
    %v239 = vand.u32 2147483647, %v223
    %v240 = vand.u32 2147483647, %v224
    %v241 = vand.u32 2147483647, %v225
    %v242 = vand.u32 2147483647, %v226
    %v243 = vand.u32 2147483647, %v227
    %v244 = vand.u32 2147483647, %v228
    %v245 = vand.u32 2147483647, %v229
    %v246 = vand.u32 2147483647, %v230
    %v247 = vand.u32 2147483647, %v231
    %v248 = vand.u32 2147483647, %v232
    %v249 = vand.u32 2147483647, %v233
    %v250 = vand.u32 2147483647, %v234
    %v251 = vand.u32 2147483647, %v235
    %v252 = vand.u32 2147483647, %v236
    %v253 = vadd.f32 %v137, %v237
    %v254 = vadd.f32 %v138, %v238
    %v255 = vadd.f32 %v139, %v239
    %v256 = vadd.f32 %v140, %v240
    %v257 = vadd.f32 %v141, %v241
    %v258 = vadd.f32 %v142, %v242
    %v259 = vadd.f32 %v143, %v243
    %v260 = vadd.f32 %v144, %v244
    %v261 = vadd.f32 %v145, %v245
    %v262 = vadd.f32 %v146, %v246
    %v263 = vadd.f32 %v147, %v247
    %v264 = vadd.f32 %v148, %v248
    %v265 = vadd.f32 %v149, %v249
    %v266 = vadd.f32 %v150, %v250
    %v267 = vadd.f32 %v151, %v251
    %v268 = vadd.f32 %v152, %v252
    %269 = vset.pattern.permute.xlu0 2
    %270 = vperm.xlu0 %269, %v21
    %v271 = vpop.permute.xlu0 %270
    %273 = vset.pattern.permute.xlu0 2
    %274 = vperm.xlu0 %273, %v22
    %v275 = vpop.permute.xlu0 %274
    %277 = vset.pattern.permute.xlu0 2
    %278 = vperm.xlu0 %277, %v23
    %v279 = vpop.permute.xlu0 %278
    %281 = vset.pattern.permute.xlu0 2
    %282 = vperm.xlu0 %281, %v24
    %v283 = vpop.permute.xlu0 %282
    %285 = vset.pattern.permute.xlu0 2
    %286 = vperm.xlu0 %285, %v25
    %v287 = vpop.permute.xlu0 %286
    %289 = vset.pattern.permute.xlu0 2
    %290 = vperm.xlu0 %289, %v26
    %v291 = vpop.permute.xlu0 %290
    %293 = vset.pattern.permute.xlu0 2
    %294 = vperm.xlu0 %293, %v27
    %v295 = vpop.permute.xlu0 %294
    %297 = vset.pattern.permute.xlu0 2
    %298 = vperm.xlu0 %297, %v28
    %v299 = vpop.permute.xlu0 %298
    %301 = vset.pattern.permute.xlu0 2
    %302 = vperm.xlu0 %301, %v29
    %v303 = vpop.permute.xlu0 %302
    %305 = vset.pattern.permute.xlu0 2
    %306 = vperm.xlu0 %305, %v30
    %v307 = vpop.permute.xlu0 %306
    %309 = vset.pattern.permute.xlu0 2
    %310 = vperm.xlu0 %309, %v31
    %v311 = vpop.permute.xlu0 %310
    %313 = vset.pattern.permute.xlu0 2
    %314 = vperm.xlu0 %313, %v32
    %v315 = vpop.permute.xlu0 %314
    %317 = vset.pattern.permute.xlu0 2
    %318 = vperm.xlu0 %317, %v33
    %v319 = vpop.permute.xlu0 %318
    %321 = vset.pattern.permute.xlu0 2
    %322 = vperm.xlu0 %321, %v34
    %v323 = vpop.permute.xlu0 %322
    %325 = vset.pattern.permute.xlu0 2
    %326 = vperm.xlu0 %325, %v35
    %v327 = vpop.permute.xlu0 %326
    %329 = vset.pattern.permute.xlu0 2
    %330 = vperm.xlu0 %329, %v36
    %v331 = vpop.permute.xlu0 %330
    %v333 = vlaneseq
    %v334 = vshrl.u32 %v333, 7
    %v335 = vsub.s32 2, %v334
    %v336 = vrot.slane %v17, %v335
    %v337 = vsub.f32 %v271, %v336
    %v338 = vsub.f32 %v275, %v336
    %v339 = vsub.f32 %v279, %v336
    %v340 = vsub.f32 %v283, %v336
    %v341 = vsub.f32 %v287, %v336
    %v342 = vsub.f32 %v291, %v336
    %v343 = vsub.f32 %v295, %v336
    %v344 = vsub.f32 %v299, %v336
    %v345 = vsub.f32 %v303, %v336
    %v346 = vsub.f32 %v307, %v336
    %v347 = vsub.f32 %v311, %v336
    %v348 = vsub.f32 %v315, %v336
    %v349 = vsub.f32 %v319, %v336
    %v350 = vsub.f32 %v323, %v336
    %v351 = vsub.f32 %v327, %v336
    %v352 = vsub.f32 %v331, %v336
    %v353 = vand.u32 2147483647, %v337
    %v354 = vand.u32 2147483647, %v338
    %v355 = vand.u32 2147483647, %v339
    %v356 = vand.u32 2147483647, %v340
    %v357 = vand.u32 2147483647, %v341
    %v358 = vand.u32 2147483647, %v342
    %v359 = vand.u32 2147483647, %v343
    %v360 = vand.u32 2147483647, %v344
    %v361 = vand.u32 2147483647, %v345
    %v362 = vand.u32 2147483647, %v346
    %v363 = vand.u32 2147483647, %v347
    %v364 = vand.u32 2147483647, %v348
    %v365 = vand.u32 2147483647, %v349
    %v366 = vand.u32 2147483647, %v350
    %v367 = vand.u32 2147483647, %v351
    %v368 = vand.u32 2147483647, %v352
    %v369 = vadd.f32 %v253, %v353
    %v370 = vadd.f32 %v254, %v354
    %v371 = vadd.f32 %v255, %v355
    %v372 = vadd.f32 %v256, %v356
    %v373 = vadd.f32 %v257, %v357
    %v374 = vadd.f32 %v258, %v358
    %v375 = vadd.f32 %v259, %v359
    %v376 = vadd.f32 %v260, %v360
    %v377 = vadd.f32 %v261, %v361
    %v378 = vadd.f32 %v262, %v362
    %v379 = vadd.f32 %v263, %v363
    %v380 = vadd.f32 %v264, %v364
    %v381 = vadd.f32 %v265, %v365
    %v382 = vadd.f32 %v266, %v366
    %v383 = vadd.f32 %v267, %v367
    %v384 = vadd.f32 %v268, %v368
    %385 = vset.pattern.permute.xlu0 3
    %386 = vperm.xlu0 %385, %v21
    %v387 = vpop.permute.xlu0 %386
    %389 = vset.pattern.permute.xlu0 3
    %390 = vperm.xlu0 %389, %v22
    %v391 = vpop.permute.xlu0 %390
    %393 = vset.pattern.permute.xlu0 3
    %394 = vperm.xlu0 %393, %v23
    %v395 = vpop.permute.xlu0 %394
    %397 = vset.pattern.permute.xlu0 3
    %398 = vperm.xlu0 %397, %v24
    %v399 = vpop.permute.xlu0 %398
    %401 = vset.pattern.permute.xlu0 3
    %402 = vperm.xlu0 %401, %v25
    %v403 = vpop.permute.xlu0 %402
    %405 = vset.pattern.permute.xlu0 3
    %406 = vperm.xlu0 %405, %v26
    %v407 = vpop.permute.xlu0 %406
    %409 = vset.pattern.permute.xlu0 3
    %410 = vperm.xlu0 %409, %v27
    %v411 = vpop.permute.xlu0 %410
    %413 = vset.pattern.permute.xlu0 3
    %414 = vperm.xlu0 %413, %v28
    %v415 = vpop.permute.xlu0 %414
    %417 = vset.pattern.permute.xlu0 3
    %418 = vperm.xlu0 %417, %v29
    %v419 = vpop.permute.xlu0 %418
    %421 = vset.pattern.permute.xlu0 3
    %422 = vperm.xlu0 %421, %v30
    %v423 = vpop.permute.xlu0 %422
    %425 = vset.pattern.permute.xlu0 3
    %426 = vperm.xlu0 %425, %v31
    %v427 = vpop.permute.xlu0 %426
    %429 = vset.pattern.permute.xlu0 3
    %430 = vperm.xlu0 %429, %v32
    %v431 = vpop.permute.xlu0 %430
    %433 = vset.pattern.permute.xlu0 3
    %434 = vperm.xlu0 %433, %v33
    %v435 = vpop.permute.xlu0 %434
    %437 = vset.pattern.permute.xlu0 3
    %438 = vperm.xlu0 %437, %v34
    %v439 = vpop.permute.xlu0 %438
    %441 = vset.pattern.permute.xlu0 3
    %442 = vperm.xlu0 %441, %v35
    %v443 = vpop.permute.xlu0 %442
    %445 = vset.pattern.permute.xlu0 3
    %446 = vperm.xlu0 %445, %v36
    %v447 = vpop.permute.xlu0 %446
    %v449 = vlaneseq
    %v450 = vshrl.u32 %v449, 7
    %v451 = vsub.s32 3, %v450
    %v452 = vrot.slane %v17, %v451
    %v453 = vsub.f32 %v387, %v452
    %v454 = vsub.f32 %v391, %v452
    %v455 = vsub.f32 %v395, %v452
    %v456 = vsub.f32 %v399, %v452
    %v457 = vsub.f32 %v403, %v452
    %v458 = vsub.f32 %v407, %v452
    %v459 = vsub.f32 %v411, %v452
    %v460 = vsub.f32 %v415, %v452
    %v461 = vsub.f32 %v419, %v452
    %v462 = vsub.f32 %v423, %v452
    %v463 = vsub.f32 %v427, %v452
    %v464 = vsub.f32 %v431, %v452
    %v465 = vsub.f32 %v435, %v452
    %v466 = vsub.f32 %v439, %v452
    %v467 = vsub.f32 %v443, %v452
    %v468 = vsub.f32 %v447, %v452
    %v469 = vand.u32 2147483647, %v453
    %v470 = vand.u32 2147483647, %v454
    %v471 = vand.u32 2147483647, %v455
    %v472 = vand.u32 2147483647, %v456
    %v473 = vand.u32 2147483647, %v457
    %v474 = vand.u32 2147483647, %v458
    %v475 = vand.u32 2147483647, %v459
    %v476 = vand.u32 2147483647, %v460
    %v477 = vand.u32 2147483647, %v461
    %v478 = vand.u32 2147483647, %v462
    %v479 = vand.u32 2147483647, %v463
    %v480 = vand.u32 2147483647, %v464
    %v481 = vand.u32 2147483647, %v465
    %v482 = vand.u32 2147483647, %v466
    %v483 = vand.u32 2147483647, %v467
    %v484 = vand.u32 2147483647, %v468
    %v485 = vadd.f32 %v369, %v469
    %v486 = vadd.f32 %v370, %v470
    %v487 = vadd.f32 %v371, %v471
    %v488 = vadd.f32 %v372, %v472
    %v489 = vadd.f32 %v373, %v473
    %v490 = vadd.f32 %v374, %v474
    %v491 = vadd.f32 %v375, %v475
    %v492 = vadd.f32 %v376, %v476
    %v493 = vadd.f32 %v377, %v477
    %v494 = vadd.f32 %v378, %v478
    %v495 = vadd.f32 %v379, %v479
    %v496 = vadd.f32 %v380, %v480
    %v497 = vadd.f32 %v381, %v481
    %v498 = vadd.f32 %v382, %v482
    %v499 = vadd.f32 %v383, %v483
    %v500 = vadd.f32 %v384, %v484
    %v501 = vsub.f32 0.0, %v485
    %v502 = vsub.f32 0.0, %v486
    %v503 = vsub.f32 0.0, %v487
    %v504 = vsub.f32 0.0, %v488
    %v505 = vsub.f32 0.0, %v489
    %v506 = vsub.f32 0.0, %v490
    %v507 = vsub.f32 0.0, %v491
    %v508 = vsub.f32 0.0, %v492
    %v509 = vsub.f32 0.0, %v493
    %v510 = vsub.f32 0.0, %v494
    %v511 = vsub.f32 0.0, %v495
    %v512 = vsub.f32 0.0, %v496
    %v513 = vsub.f32 0.0, %v497
    %v514 = vsub.f32 0.0, %v498
    %v515 = vsub.f32 0.0, %v499
    %v516 = vsub.f32 0.0, %v500
    %v517 = vmul.f32 %v501, 1.442695
    %v518 = vpow.pop %v517
    %v519 = vmul.f32 %v502, 1.442695
    %v520 = vpow.pop %v519
    %v521 = vmul.f32 %v503, 1.442695
    %v522 = vpow.pop %v521
    %v523 = vmul.f32 %v504, 1.442695
    %v524 = vpow.pop %v523
    %v525 = vmul.f32 %v505, 1.442695
    %v526 = vpow.pop %v525
    %v527 = vmul.f32 %v506, 1.442695
    %v528 = vpow.pop %v527
    %v529 = vmul.f32 %v507, 1.442695
    %v530 = vpow.pop %v529
    %v531 = vmul.f32 %v508, 1.442695
    %v532 = vpow.pop %v531
    %v533 = vmul.f32 %v509, 1.442695
    %v534 = vpow.pop %v533
    %v535 = vmul.f32 %v510, 1.442695
    %v536 = vpow.pop %v535
    %v537 = vmul.f32 %v511, 1.442695
    %v538 = vpow.pop %v537
    %v539 = vmul.f32 %v512, 1.442695
    %v540 = vpow.pop %v539
    %v541 = vmul.f32 %v513, 1.442695
    %v542 = vpow.pop %v541
    %v543 = vmul.f32 %v514, 1.442695
    %v544 = vpow.pop %v543
    %v545 = vmul.f32 %v515, 1.442695
    %v546 = vpow.pop %v545
    %v547 = vmul.f32 %v516, 1.442695
    %v548 = vpow.pop %v547
    %v549 = vadd.f32 %v518, %v520
    %v550 = vadd.f32 %v549, %v522
    %v551 = vadd.f32 %v550, %v524
    %v552 = vadd.f32 %v551, %v526
    %v553 = vadd.f32 %v552, %v528
    %v554 = vadd.f32 %v553, %v530
    %v555 = vadd.f32 %v554, %v532
    %v556 = vadd.f32 %v555, %v534
    %v557 = vadd.f32 %v556, %v536
    %v558 = vadd.f32 %v557, %v538
    %v559 = vadd.f32 %v558, %v540
    %v560 = vadd.f32 %v559, %v542
    %v561 = vadd.f32 %v560, %v544
    %v562 = vadd.f32 %v561, %v546
    %v563 = vadd.f32 %v562, %v548
    %v564 = vrot.slane %v563, 4
    %v565 = vadd.f32 %v563, %v564
    %v566 = vrot.slane %v565, 2
    %v567 = vadd.f32 %v565, %v566
    %v568 = vrot.slane %v567, 1
    %v569 = vadd.f32 %v567, %v568
    %570 = vset.pattern.permute.xlu0 4
    %571 = vperm.xlu0 %570, %v21
    %v572 = vpop.permute.xlu0 %571
    %574 = vset.pattern.permute.xlu0 4
    %575 = vperm.xlu0 %574, %v22
    %v576 = vpop.permute.xlu0 %575
    %578 = vset.pattern.permute.xlu0 4
    %579 = vperm.xlu0 %578, %v23
    %v580 = vpop.permute.xlu0 %579
    %582 = vset.pattern.permute.xlu0 4
    %583 = vperm.xlu0 %582, %v24
    %v584 = vpop.permute.xlu0 %583
    %586 = vset.pattern.permute.xlu0 4
    %587 = vperm.xlu0 %586, %v25
    %v588 = vpop.permute.xlu0 %587
    %590 = vset.pattern.permute.xlu0 4
    %591 = vperm.xlu0 %590, %v26
    %v592 = vpop.permute.xlu0 %591
    %594 = vset.pattern.permute.xlu0 4
    %595 = vperm.xlu0 %594, %v27
    %v596 = vpop.permute.xlu0 %595
    %598 = vset.pattern.permute.xlu0 4
    %599 = vperm.xlu0 %598, %v28
    %v600 = vpop.permute.xlu0 %599
    %602 = vset.pattern.permute.xlu0 4
    %603 = vperm.xlu0 %602, %v29
    %v604 = vpop.permute.xlu0 %603
    %606 = vset.pattern.permute.xlu0 4
    %607 = vperm.xlu0 %606, %v30
    %v608 = vpop.permute.xlu0 %607
    %610 = vset.pattern.permute.xlu0 4
    %611 = vperm.xlu0 %610, %v31
    %v612 = vpop.permute.xlu0 %611
    %614 = vset.pattern.permute.xlu0 4
    %615 = vperm.xlu0 %614, %v32
    %v616 = vpop.permute.xlu0 %615
    %618 = vset.pattern.permute.xlu0 4
    %619 = vperm.xlu0 %618, %v33
    %v620 = vpop.permute.xlu0 %619
    %622 = vset.pattern.permute.xlu0 4
    %623 = vperm.xlu0 %622, %v34
    %v624 = vpop.permute.xlu0 %623
    %626 = vset.pattern.permute.xlu0 4
    %627 = vperm.xlu0 %626, %v35
    %v628 = vpop.permute.xlu0 %627
    %630 = vset.pattern.permute.xlu0 4
    %631 = vperm.xlu0 %630, %v36
    %v632 = vpop.permute.xlu0 %631
    %v634 = vlaneseq
    %v635 = vshrl.u32 %v634, 7
    %v636 = vsub.s32 4, %v635
    %v637 = vrot.slane %v17, %v636
    %v638 = vsub.f32 %v572, %v637
    %v639 = vsub.f32 %v576, %v637
    %v640 = vsub.f32 %v580, %v637
    %v641 = vsub.f32 %v584, %v637
    %v642 = vsub.f32 %v588, %v637
    %v643 = vsub.f32 %v592, %v637
    %v644 = vsub.f32 %v596, %v637
    %v645 = vsub.f32 %v600, %v637
    %v646 = vsub.f32 %v604, %v637
    %v647 = vsub.f32 %v608, %v637
    %v648 = vsub.f32 %v612, %v637
    %v649 = vsub.f32 %v616, %v637
    %v650 = vsub.f32 %v620, %v637
    %v651 = vsub.f32 %v624, %v637
    %v652 = vsub.f32 %v628, %v637
    %v653 = vsub.f32 %v632, %v637
    %v654 = vand.u32 2147483647, %v638
    %v655 = vand.u32 2147483647, %v639
    %v656 = vand.u32 2147483647, %v640
    %v657 = vand.u32 2147483647, %v641
    %v658 = vand.u32 2147483647, %v642
    %v659 = vand.u32 2147483647, %v643
    %v660 = vand.u32 2147483647, %v644
    %v661 = vand.u32 2147483647, %v645
    %v662 = vand.u32 2147483647, %v646
    %v663 = vand.u32 2147483647, %v647
    %v664 = vand.u32 2147483647, %v648
    %v665 = vand.u32 2147483647, %v649
    %v666 = vand.u32 2147483647, %v650
    %v667 = vand.u32 2147483647, %v651
    %v668 = vand.u32 2147483647, %v652
    %v669 = vand.u32 2147483647, %v653
    %670 = vset.pattern.permute.xlu0 5
    %671 = vperm.xlu0 %670, %v21
    %v672 = vpop.permute.xlu0 %671
    %674 = vset.pattern.permute.xlu0 5
    %675 = vperm.xlu0 %674, %v22
    %v676 = vpop.permute.xlu0 %675
    %678 = vset.pattern.permute.xlu0 5
    %679 = vperm.xlu0 %678, %v23
    %v680 = vpop.permute.xlu0 %679
    %682 = vset.pattern.permute.xlu0 5
    %683 = vperm.xlu0 %682, %v24
    %v684 = vpop.permute.xlu0 %683
    %686 = vset.pattern.permute.xlu0 5
    %687 = vperm.xlu0 %686, %v25
    %v688 = vpop.permute.xlu0 %687
    %690 = vset.pattern.permute.xlu0 5
    %691 = vperm.xlu0 %690, %v26
    %v692 = vpop.permute.xlu0 %691
    %694 = vset.pattern.permute.xlu0 5
    %695 = vperm.xlu0 %694, %v27
    %v696 = vpop.permute.xlu0 %695
    %698 = vset.pattern.permute.xlu0 5
    %699 = vperm.xlu0 %698, %v28
    %v700 = vpop.permute.xlu0 %699
    %702 = vset.pattern.permute.xlu0 5
    %703 = vperm.xlu0 %702, %v29
    %v704 = vpop.permute.xlu0 %703
    %706 = vset.pattern.permute.xlu0 5
    %707 = vperm.xlu0 %706, %v30
    %v708 = vpop.permute.xlu0 %707
    %710 = vset.pattern.permute.xlu0 5
    %711 = vperm.xlu0 %710, %v31
    %v712 = vpop.permute.xlu0 %711
    %714 = vset.pattern.permute.xlu0 5
    %715 = vperm.xlu0 %714, %v32
    %v716 = vpop.permute.xlu0 %715
    %718 = vset.pattern.permute.xlu0 5
    %719 = vperm.xlu0 %718, %v33
    %v720 = vpop.permute.xlu0 %719
    %722 = vset.pattern.permute.xlu0 5
    %723 = vperm.xlu0 %722, %v34
    %v724 = vpop.permute.xlu0 %723
    %726 = vset.pattern.permute.xlu0 5
    %727 = vperm.xlu0 %726, %v35
    %v728 = vpop.permute.xlu0 %727
    %730 = vset.pattern.permute.xlu0 5
    %731 = vperm.xlu0 %730, %v36
    %v732 = vpop.permute.xlu0 %731
    %v734 = vlaneseq
    %v735 = vshrl.u32 %v734, 7
    %v736 = vsub.s32 5, %v735
    %v737 = vrot.slane %v17, %v736
    %v738 = vsub.f32 %v672, %v737
    %v739 = vsub.f32 %v676, %v737
    %v740 = vsub.f32 %v680, %v737
    %v741 = vsub.f32 %v684, %v737
    %v742 = vsub.f32 %v688, %v737
    %v743 = vsub.f32 %v692, %v737
    %v744 = vsub.f32 %v696, %v737
    %v745 = vsub.f32 %v700, %v737
    %v746 = vsub.f32 %v704, %v737
    %v747 = vsub.f32 %v708, %v737
    %v748 = vsub.f32 %v712, %v737
    %v749 = vsub.f32 %v716, %v737
    %v750 = vsub.f32 %v720, %v737
    %v751 = vsub.f32 %v724, %v737
    %v752 = vsub.f32 %v728, %v737
    %v753 = vsub.f32 %v732, %v737
    %v754 = vand.u32 2147483647, %v738
    %v755 = vand.u32 2147483647, %v739
    %v756 = vand.u32 2147483647, %v740
    %v757 = vand.u32 2147483647, %v741
    %v758 = vand.u32 2147483647, %v742
    %v759 = vand.u32 2147483647, %v743
    %v760 = vand.u32 2147483647, %v744
    %v761 = vand.u32 2147483647, %v745
    %v762 = vand.u32 2147483647, %v746
    %v763 = vand.u32 2147483647, %v747
    %v764 = vand.u32 2147483647, %v748
    %v765 = vand.u32 2147483647, %v749
    %v766 = vand.u32 2147483647, %v750
    %v767 = vand.u32 2147483647, %v751
    %v768 = vand.u32 2147483647, %v752
    %v769 = vand.u32 2147483647, %v753
    %v770 = vadd.f32 %v654, %v754
    %v771 = vadd.f32 %v655, %v755
    %v772 = vadd.f32 %v656, %v756
    %v773 = vadd.f32 %v657, %v757
    %v774 = vadd.f32 %v658, %v758
    %v775 = vadd.f32 %v659, %v759
    %v776 = vadd.f32 %v660, %v760
    %v777 = vadd.f32 %v661, %v761
    %v778 = vadd.f32 %v662, %v762
    %v779 = vadd.f32 %v663, %v763
    %v780 = vadd.f32 %v664, %v764
    %v781 = vadd.f32 %v665, %v765
    %v782 = vadd.f32 %v666, %v766
    %v783 = vadd.f32 %v667, %v767
    %v784 = vadd.f32 %v668, %v768
    %v785 = vadd.f32 %v669, %v769
    %786 = vset.pattern.permute.xlu0 6
    %787 = vperm.xlu0 %786, %v21
    %v788 = vpop.permute.xlu0 %787
    %790 = vset.pattern.permute.xlu0 6
    %791 = vperm.xlu0 %790, %v22
    %v792 = vpop.permute.xlu0 %791
    %794 = vset.pattern.permute.xlu0 6
    %795 = vperm.xlu0 %794, %v23
    %v796 = vpop.permute.xlu0 %795
    %798 = vset.pattern.permute.xlu0 6
    %799 = vperm.xlu0 %798, %v24
    %v800 = vpop.permute.xlu0 %799
    %802 = vset.pattern.permute.xlu0 6
    %803 = vperm.xlu0 %802, %v25
    %v804 = vpop.permute.xlu0 %803
    %806 = vset.pattern.permute.xlu0 6
    %807 = vperm.xlu0 %806, %v26
    %v808 = vpop.permute.xlu0 %807
    %810 = vset.pattern.permute.xlu0 6
    %811 = vperm.xlu0 %810, %v27
    %v812 = vpop.permute.xlu0 %811
    %814 = vset.pattern.permute.xlu0 6
    %815 = vperm.xlu0 %814, %v28
    %v816 = vpop.permute.xlu0 %815
    %818 = vset.pattern.permute.xlu0 6
    %819 = vperm.xlu0 %818, %v29
    %v820 = vpop.permute.xlu0 %819
    %822 = vset.pattern.permute.xlu0 6
    %823 = vperm.xlu0 %822, %v30
    %v824 = vpop.permute.xlu0 %823
    %826 = vset.pattern.permute.xlu0 6
    %827 = vperm.xlu0 %826, %v31
    %v828 = vpop.permute.xlu0 %827
    %830 = vset.pattern.permute.xlu0 6
    %831 = vperm.xlu0 %830, %v32
    %v832 = vpop.permute.xlu0 %831
    %834 = vset.pattern.permute.xlu0 6
    %835 = vperm.xlu0 %834, %v33
    %v836 = vpop.permute.xlu0 %835
    %838 = vset.pattern.permute.xlu0 6
    %839 = vperm.xlu0 %838, %v34
    %v840 = vpop.permute.xlu0 %839
    %842 = vset.pattern.permute.xlu0 6
    %843 = vperm.xlu0 %842, %v35
    %v844 = vpop.permute.xlu0 %843
    %846 = vset.pattern.permute.xlu0 6
    %847 = vperm.xlu0 %846, %v36
    %v848 = vpop.permute.xlu0 %847
    %v850 = vlaneseq
    %v851 = vshrl.u32 %v850, 7
    %v852 = vsub.s32 6, %v851
    %v853 = vrot.slane %v17, %v852
    %v854 = vsub.f32 %v788, %v853
    %v855 = vsub.f32 %v792, %v853
    %v856 = vsub.f32 %v796, %v853
    %v857 = vsub.f32 %v800, %v853
    %v858 = vsub.f32 %v804, %v853
    %v859 = vsub.f32 %v808, %v853
    %v860 = vsub.f32 %v812, %v853
    %v861 = vsub.f32 %v816, %v853
    %v862 = vsub.f32 %v820, %v853
    %v863 = vsub.f32 %v824, %v853
    %v864 = vsub.f32 %v828, %v853
    %v865 = vsub.f32 %v832, %v853
    %v866 = vsub.f32 %v836, %v853
    %v867 = vsub.f32 %v840, %v853
    %v868 = vsub.f32 %v844, %v853
    %v869 = vsub.f32 %v848, %v853
    %v870 = vand.u32 2147483647, %v854
    %v871 = vand.u32 2147483647, %v855
    %v872 = vand.u32 2147483647, %v856
    %v873 = vand.u32 2147483647, %v857
    %v874 = vand.u32 2147483647, %v858
    %v875 = vand.u32 2147483647, %v859
    %v876 = vand.u32 2147483647, %v860
    %v877 = vand.u32 2147483647, %v861
    %v878 = vand.u32 2147483647, %v862
    %v879 = vand.u32 2147483647, %v863
    %v880 = vand.u32 2147483647, %v864
    %v881 = vand.u32 2147483647, %v865
    %v882 = vand.u32 2147483647, %v866
    %v883 = vand.u32 2147483647, %v867
    %v884 = vand.u32 2147483647, %v868
    %v885 = vand.u32 2147483647, %v869
    %v886 = vadd.f32 %v770, %v870
    %v887 = vadd.f32 %v771, %v871
    %v888 = vadd.f32 %v772, %v872
    %v889 = vadd.f32 %v773, %v873
    %v890 = vadd.f32 %v774, %v874
    %v891 = vadd.f32 %v775, %v875
    %v892 = vadd.f32 %v776, %v876
    %v893 = vadd.f32 %v777, %v877
    %v894 = vadd.f32 %v778, %v878
    %v895 = vadd.f32 %v779, %v879
    %v896 = vadd.f32 %v780, %v880
    %v897 = vadd.f32 %v781, %v881
    %v898 = vadd.f32 %v782, %v882
    %v899 = vadd.f32 %v783, %v883
    %v900 = vadd.f32 %v784, %v884
    %v901 = vadd.f32 %v785, %v885
    %902 = vset.pattern.permute.xlu0 7
    %903 = vperm.xlu0 %902, %v21
    %v904 = vpop.permute.xlu0 %903
    %906 = vset.pattern.permute.xlu0 7
    %907 = vperm.xlu0 %906, %v22
    %v908 = vpop.permute.xlu0 %907
    %910 = vset.pattern.permute.xlu0 7
    %911 = vperm.xlu0 %910, %v23
    %v912 = vpop.permute.xlu0 %911
    %914 = vset.pattern.permute.xlu0 7
    %915 = vperm.xlu0 %914, %v24
    %v916 = vpop.permute.xlu0 %915
    %918 = vset.pattern.permute.xlu0 7
    %919 = vperm.xlu0 %918, %v25
    %v920 = vpop.permute.xlu0 %919
    %922 = vset.pattern.permute.xlu0 7
    %923 = vperm.xlu0 %922, %v26
    %v924 = vpop.permute.xlu0 %923
    %926 = vset.pattern.permute.xlu0 7
    %927 = vperm.xlu0 %926, %v27
    %v928 = vpop.permute.xlu0 %927
    %930 = vset.pattern.permute.xlu0 7
    %931 = vperm.xlu0 %930, %v28
    %v932 = vpop.permute.xlu0 %931
    %934 = vset.pattern.permute.xlu0 7
    %935 = vperm.xlu0 %934, %v29
    %v936 = vpop.permute.xlu0 %935
    %938 = vset.pattern.permute.xlu0 7
    %939 = vperm.xlu0 %938, %v30
    %v940 = vpop.permute.xlu0 %939
    %942 = vset.pattern.permute.xlu0 7
    %943 = vperm.xlu0 %942, %v31
    %v944 = vpop.permute.xlu0 %943
    %946 = vset.pattern.permute.xlu0 7
    %947 = vperm.xlu0 %946, %v32
    %v948 = vpop.permute.xlu0 %947
    %950 = vset.pattern.permute.xlu0 7
    %951 = vperm.xlu0 %950, %v33
    %v952 = vpop.permute.xlu0 %951
    %954 = vset.pattern.permute.xlu0 7
    %955 = vperm.xlu0 %954, %v34
    %v956 = vpop.permute.xlu0 %955
    %958 = vset.pattern.permute.xlu0 7
    %959 = vperm.xlu0 %958, %v35
    %v960 = vpop.permute.xlu0 %959
    %962 = vset.pattern.permute.xlu0 7
    %963 = vperm.xlu0 %962, %v36
    %v964 = vpop.permute.xlu0 %963
    %v966 = vlaneseq
    %v967 = vshrl.u32 %v966, 7
    %v968 = vsub.s32 7, %v967
    %v969 = vrot.slane %v17, %v968
    %v970 = vsub.f32 %v904, %v969
    %v971 = vsub.f32 %v908, %v969
    %v972 = vsub.f32 %v912, %v969
    %v973 = vsub.f32 %v916, %v969
    %v974 = vsub.f32 %v920, %v969
    %v975 = vsub.f32 %v924, %v969
    %v976 = vsub.f32 %v928, %v969
    %v977 = vsub.f32 %v932, %v969
    %v978 = vsub.f32 %v936, %v969
    %v979 = vsub.f32 %v940, %v969
    %v980 = vsub.f32 %v944, %v969
    %v981 = vsub.f32 %v948, %v969
    %v982 = vsub.f32 %v952, %v969
    %v983 = vsub.f32 %v956, %v969
    %v984 = vsub.f32 %v960, %v969
    %v985 = vsub.f32 %v964, %v969
    %v986 = vand.u32 2147483647, %v970
    %v987 = vand.u32 2147483647, %v971
    %v988 = vand.u32 2147483647, %v972
    %v989 = vand.u32 2147483647, %v973
    %v990 = vand.u32 2147483647, %v974
    %v991 = vand.u32 2147483647, %v975
    %v992 = vand.u32 2147483647, %v976
    %v993 = vand.u32 2147483647, %v977
    %v994 = vand.u32 2147483647, %v978
    %v995 = vand.u32 2147483647, %v979
    %v996 = vand.u32 2147483647, %v980
    %v997 = vand.u32 2147483647, %v981
    %v998 = vand.u32 2147483647, %v982
    %v999 = vand.u32 2147483647, %v983
    %v1000 = vand.u32 2147483647, %v984
    %v1001 = vand.u32 2147483647, %v985
    %v1002 = vadd.f32 %v886, %v986
    %v1003 = vadd.f32 %v887, %v987
    %v1004 = vadd.f32 %v888, %v988
    %v1005 = vadd.f32 %v889, %v989
    %v1006 = vadd.f32 %v890, %v990
    %v1007 = vadd.f32 %v891, %v991
    %v1008 = vadd.f32 %v892, %v992
    %v1009 = vadd.f32 %v893, %v993
    %v1010 = vadd.f32 %v894, %v994
    %v1011 = vadd.f32 %v895, %v995
    %v1012 = vadd.f32 %v896, %v996
    %v1013 = vadd.f32 %v897, %v997
    %v1014 = vadd.f32 %v898, %v998
    %v1015 = vadd.f32 %v899, %v999
    %v1016 = vadd.f32 %v900, %v1000
    %v1017 = vadd.f32 %v901, %v1001
    %v1018 = vsub.f32 0.0, %v1002
    %v1019 = vsub.f32 0.0, %v1003
    %v1020 = vsub.f32 0.0, %v1004
    %v1021 = vsub.f32 0.0, %v1005
    %v1022 = vsub.f32 0.0, %v1006
    %v1023 = vsub.f32 0.0, %v1007
    %v1024 = vsub.f32 0.0, %v1008
    %v1025 = vsub.f32 0.0, %v1009
    %v1026 = vsub.f32 0.0, %v1010
    %v1027 = vsub.f32 0.0, %v1011
    %v1028 = vsub.f32 0.0, %v1012
    %v1029 = vsub.f32 0.0, %v1013
    %v1030 = vsub.f32 0.0, %v1014
    %v1031 = vsub.f32 0.0, %v1015
    %v1032 = vsub.f32 0.0, %v1016
    %v1033 = vsub.f32 0.0, %v1017
    %v1034 = vmul.f32 %v1018, 1.442695
    %v1035 = vpow.pop %v1034
    %v1036 = vmul.f32 %v1019, 1.442695
    %v1037 = vpow.pop %v1036
    %v1038 = vmul.f32 %v1020, 1.442695
    %v1039 = vpow.pop %v1038
    %v1040 = vmul.f32 %v1021, 1.442695
    %v1041 = vpow.pop %v1040
    %v1042 = vmul.f32 %v1022, 1.442695
    %v1043 = vpow.pop %v1042
    %v1044 = vmul.f32 %v1023, 1.442695
    %v1045 = vpow.pop %v1044
    %v1046 = vmul.f32 %v1024, 1.442695
    %v1047 = vpow.pop %v1046
    %v1048 = vmul.f32 %v1025, 1.442695
    %v1049 = vpow.pop %v1048
    %v1050 = vmul.f32 %v1026, 1.442695
    %v1051 = vpow.pop %v1050
    %v1052 = vmul.f32 %v1027, 1.442695
    %v1053 = vpow.pop %v1052
    %v1054 = vmul.f32 %v1028, 1.442695
    %v1055 = vpow.pop %v1054
    %v1056 = vmul.f32 %v1029, 1.442695
    %v1057 = vpow.pop %v1056
    %v1058 = vmul.f32 %v1030, 1.442695
    %v1059 = vpow.pop %v1058
    %v1060 = vmul.f32 %v1031, 1.442695
    %v1061 = vpow.pop %v1060
    %v1062 = vmul.f32 %v1032, 1.442695
    %v1063 = vpow.pop %v1062
    %v1064 = vmul.f32 %v1033, 1.442695
    %v1065 = vpow.pop %v1064
    %v1066 = vadd.f32 %v1035, %v1037
    %v1067 = vadd.f32 %v1066, %v1039
    %v1068 = vadd.f32 %v1067, %v1041
    %v1069 = vadd.f32 %v1068, %v1043
    %v1070 = vadd.f32 %v1069, %v1045
    %v1071 = vadd.f32 %v1070, %v1047
    %v1072 = vadd.f32 %v1071, %v1049
    %v1073 = vadd.f32 %v1072, %v1051
    %v1074 = vadd.f32 %v1073, %v1053
    %v1075 = vadd.f32 %v1074, %v1055
    %v1076 = vadd.f32 %v1075, %v1057
    %v1077 = vadd.f32 %v1076, %v1059
    %v1078 = vadd.f32 %v1077, %v1061
    %v1079 = vadd.f32 %v1078, %v1063
    %v1080 = vadd.f32 %v1079, %v1065
    %v1081 = vrot.slane %v1080, 4
    %v1082 = vadd.f32 %v1080, %v1081
    %v1083 = vrot.slane %v1082, 2
    %v1084 = vadd.f32 %v1082, %v1083
    %v1085 = vrot.slane %v1084, 1
    %v1086 = vadd.f32 %v1084, %v1085
    %1087 = vset.pattern.permute.xlu0 8
    %1088 = vperm.xlu0 %1087, %v21
    %v1089 = vpop.permute.xlu0 %1088
    %1091 = vset.pattern.permute.xlu0 8
    %1092 = vperm.xlu0 %1091, %v22
    %v1093 = vpop.permute.xlu0 %1092
    %1095 = vset.pattern.permute.xlu0 8
    %1096 = vperm.xlu0 %1095, %v23
    %v1097 = vpop.permute.xlu0 %1096
    %1099 = vset.pattern.permute.xlu0 8
    %1100 = vperm.xlu0 %1099, %v24
    %v1101 = vpop.permute.xlu0 %1100
    %1103 = vset.pattern.permute.xlu0 8
    %1104 = vperm.xlu0 %1103, %v25
    %v1105 = vpop.permute.xlu0 %1104
    %1107 = vset.pattern.permute.xlu0 8
    %1108 = vperm.xlu0 %1107, %v26
    %v1109 = vpop.permute.xlu0 %1108
    %1111 = vset.pattern.permute.xlu0 8
    %1112 = vperm.xlu0 %1111, %v27
    %v1113 = vpop.permute.xlu0 %1112
    %1115 = vset.pattern.permute.xlu0 8
    %1116 = vperm.xlu0 %1115, %v28
    %v1117 = vpop.permute.xlu0 %1116
    %1119 = vset.pattern.permute.xlu0 8
    %1120 = vperm.xlu0 %1119, %v29
    %v1121 = vpop.permute.xlu0 %1120
    %1123 = vset.pattern.permute.xlu0 8
    %1124 = vperm.xlu0 %1123, %v30
    %v1125 = vpop.permute.xlu0 %1124
    %1127 = vset.pattern.permute.xlu0 8
    %1128 = vperm.xlu0 %1127, %v31
    %v1129 = vpop.permute.xlu0 %1128
    %1131 = vset.pattern.permute.xlu0 8
    %1132 = vperm.xlu0 %1131, %v32
    %v1133 = vpop.permute.xlu0 %1132
    %1135 = vset.pattern.permute.xlu0 8
    %1136 = vperm.xlu0 %1135, %v33
    %v1137 = vpop.permute.xlu0 %1136
    %1139 = vset.pattern.permute.xlu0 8
    %1140 = vperm.xlu0 %1139, %v34
    %v1141 = vpop.permute.xlu0 %1140
    %1143 = vset.pattern.permute.xlu0 8
    %1144 = vperm.xlu0 %1143, %v35
    %v1145 = vpop.permute.xlu0 %1144
    %1147 = vset.pattern.permute.xlu0 8
    %1148 = vperm.xlu0 %1147, %v36
    %v1149 = vpop.permute.xlu0 %1148
    %v1151 = vlaneseq
    %v1152 = vshrl.u32 %v1151, 7
    %v1153 = vsub.s32 0, %v1152
    %v1154 = vrot.slane %v18, %v1153
    %v1155 = vsub.f32 %v1089, %v1154
    %v1156 = vsub.f32 %v1093, %v1154
    %v1157 = vsub.f32 %v1097, %v1154
    %v1158 = vsub.f32 %v1101, %v1154
    %v1159 = vsub.f32 %v1105, %v1154
    %v1160 = vsub.f32 %v1109, %v1154
    %v1161 = vsub.f32 %v1113, %v1154
    %v1162 = vsub.f32 %v1117, %v1154
    %v1163 = vsub.f32 %v1121, %v1154
    %v1164 = vsub.f32 %v1125, %v1154
    %v1165 = vsub.f32 %v1129, %v1154
    %v1166 = vsub.f32 %v1133, %v1154
    %v1167 = vsub.f32 %v1137, %v1154
    %v1168 = vsub.f32 %v1141, %v1154
    %v1169 = vsub.f32 %v1145, %v1154
    %v1170 = vsub.f32 %v1149, %v1154
    %v1171 = vand.u32 2147483647, %v1155
    %v1172 = vand.u32 2147483647, %v1156
    %v1173 = vand.u32 2147483647, %v1157
    %v1174 = vand.u32 2147483647, %v1158
    %v1175 = vand.u32 2147483647, %v1159
    %v1176 = vand.u32 2147483647, %v1160
    %v1177 = vand.u32 2147483647, %v1161
    %v1178 = vand.u32 2147483647, %v1162
    %v1179 = vand.u32 2147483647, %v1163
    %v1180 = vand.u32 2147483647, %v1164
    %v1181 = vand.u32 2147483647, %v1165
    %v1182 = vand.u32 2147483647, %v1166
    %v1183 = vand.u32 2147483647, %v1167
    %v1184 = vand.u32 2147483647, %v1168
    %v1185 = vand.u32 2147483647, %v1169
    %v1186 = vand.u32 2147483647, %v1170
    %1187 = vset.pattern.permute.xlu0 9
    %1188 = vperm.xlu0 %1187, %v21
    %v1189 = vpop.permute.xlu0 %1188
    %1191 = vset.pattern.permute.xlu0 9
    %1192 = vperm.xlu0 %1191, %v22
    %v1193 = vpop.permute.xlu0 %1192
    %1195 = vset.pattern.permute.xlu0 9
    %1196 = vperm.xlu0 %1195, %v23
    %v1197 = vpop.permute.xlu0 %1196
    %1199 = vset.pattern.permute.xlu0 9
    %1200 = vperm.xlu0 %1199, %v24
    %v1201 = vpop.permute.xlu0 %1200
    %1203 = vset.pattern.permute.xlu0 9
    %1204 = vperm.xlu0 %1203, %v25
    %v1205 = vpop.permute.xlu0 %1204
    %1207 = vset.pattern.permute.xlu0 9
    %1208 = vperm.xlu0 %1207, %v26
    %v1209 = vpop.permute.xlu0 %1208
    %1211 = vset.pattern.permute.xlu0 9
    %1212 = vperm.xlu0 %1211, %v27
    %v1213 = vpop.permute.xlu0 %1212
    %1215 = vset.pattern.permute.xlu0 9
    %1216 = vperm.xlu0 %1215, %v28
    %v1217 = vpop.permute.xlu0 %1216
    %1219 = vset.pattern.permute.xlu0 9
    %1220 = vperm.xlu0 %1219, %v29
    %v1221 = vpop.permute.xlu0 %1220
    %1223 = vset.pattern.permute.xlu0 9
    %1224 = vperm.xlu0 %1223, %v30
    %v1225 = vpop.permute.xlu0 %1224
    %1227 = vset.pattern.permute.xlu0 9
    %1228 = vperm.xlu0 %1227, %v31
    %v1229 = vpop.permute.xlu0 %1228
    %1231 = vset.pattern.permute.xlu0 9
    %1232 = vperm.xlu0 %1231, %v32
    %v1233 = vpop.permute.xlu0 %1232
    %1235 = vset.pattern.permute.xlu0 9
    %1236 = vperm.xlu0 %1235, %v33
    %v1237 = vpop.permute.xlu0 %1236
    %1239 = vset.pattern.permute.xlu0 9
    %1240 = vperm.xlu0 %1239, %v34
    %v1241 = vpop.permute.xlu0 %1240
    %1243 = vset.pattern.permute.xlu0 9
    %1244 = vperm.xlu0 %1243, %v35
    %v1245 = vpop.permute.xlu0 %1244
    %1247 = vset.pattern.permute.xlu0 9
    %1248 = vperm.xlu0 %1247, %v36
    %v1249 = vpop.permute.xlu0 %1248
    %v1251 = vlaneseq
    %v1252 = vshrl.u32 %v1251, 7
    %v1253 = vsub.s32 1, %v1252
    %v1254 = vrot.slane %v18, %v1253
    %v1255 = vsub.f32 %v1189, %v1254
    %v1256 = vsub.f32 %v1193, %v1254
    %v1257 = vsub.f32 %v1197, %v1254
    %v1258 = vsub.f32 %v1201, %v1254
    %v1259 = vsub.f32 %v1205, %v1254
    %v1260 = vsub.f32 %v1209, %v1254
    %v1261 = vsub.f32 %v1213, %v1254
    %v1262 = vsub.f32 %v1217, %v1254
    %v1263 = vsub.f32 %v1221, %v1254
    %v1264 = vsub.f32 %v1225, %v1254
    %v1265 = vsub.f32 %v1229, %v1254
    %v1266 = vsub.f32 %v1233, %v1254
    %v1267 = vsub.f32 %v1237, %v1254
    %v1268 = vsub.f32 %v1241, %v1254
    %v1269 = vsub.f32 %v1245, %v1254
    %v1270 = vsub.f32 %v1249, %v1254
    %v1271 = vand.u32 2147483647, %v1255
    %v1272 = vand.u32 2147483647, %v1256
    %v1273 = vand.u32 2147483647, %v1257
    %v1274 = vand.u32 2147483647, %v1258
    %v1275 = vand.u32 2147483647, %v1259
    %v1276 = vand.u32 2147483647, %v1260
    %v1277 = vand.u32 2147483647, %v1261
    %v1278 = vand.u32 2147483647, %v1262
    %v1279 = vand.u32 2147483647, %v1263
    %v1280 = vand.u32 2147483647, %v1264
    %v1281 = vand.u32 2147483647, %v1265
    %v1282 = vand.u32 2147483647, %v1266
    %v1283 = vand.u32 2147483647, %v1267
    %v1284 = vand.u32 2147483647, %v1268
    %v1285 = vand.u32 2147483647, %v1269
    %v1286 = vand.u32 2147483647, %v1270
    %v1287 = vadd.f32 %v1171, %v1271
    %v1288 = vadd.f32 %v1172, %v1272
    %v1289 = vadd.f32 %v1173, %v1273
    %v1290 = vadd.f32 %v1174, %v1274
    %v1291 = vadd.f32 %v1175, %v1275
    %v1292 = vadd.f32 %v1176, %v1276
    %v1293 = vadd.f32 %v1177, %v1277
    %v1294 = vadd.f32 %v1178, %v1278
    %v1295 = vadd.f32 %v1179, %v1279
    %v1296 = vadd.f32 %v1180, %v1280
    %v1297 = vadd.f32 %v1181, %v1281
    %v1298 = vadd.f32 %v1182, %v1282
    %v1299 = vadd.f32 %v1183, %v1283
    %v1300 = vadd.f32 %v1184, %v1284
    %v1301 = vadd.f32 %v1185, %v1285
    %v1302 = vadd.f32 %v1186, %v1286
    %1303 = vset.pattern.permute.xlu0 10
    %1304 = vperm.xlu0 %1303, %v21
    %v1305 = vpop.permute.xlu0 %1304
    %1307 = vset.pattern.permute.xlu0 10
    %1308 = vperm.xlu0 %1307, %v22
    %v1309 = vpop.permute.xlu0 %1308
    %1311 = vset.pattern.permute.xlu0 10
    %1312 = vperm.xlu0 %1311, %v23
    %v1313 = vpop.permute.xlu0 %1312
    %1315 = vset.pattern.permute.xlu0 10
    %1316 = vperm.xlu0 %1315, %v24
    %v1317 = vpop.permute.xlu0 %1316
    %1319 = vset.pattern.permute.xlu0 10
    %1320 = vperm.xlu0 %1319, %v25
    %v1321 = vpop.permute.xlu0 %1320
    %1323 = vset.pattern.permute.xlu0 10
    %1324 = vperm.xlu0 %1323, %v26
    %v1325 = vpop.permute.xlu0 %1324
    %1327 = vset.pattern.permute.xlu0 10
    %1328 = vperm.xlu0 %1327, %v27
    %v1329 = vpop.permute.xlu0 %1328
    %1331 = vset.pattern.permute.xlu0 10
    %1332 = vperm.xlu0 %1331, %v28
    %v1333 = vpop.permute.xlu0 %1332
    %1335 = vset.pattern.permute.xlu0 10
    %1336 = vperm.xlu0 %1335, %v29
    %v1337 = vpop.permute.xlu0 %1336
    %1339 = vset.pattern.permute.xlu0 10
    %1340 = vperm.xlu0 %1339, %v30
    %v1341 = vpop.permute.xlu0 %1340
    %1343 = vset.pattern.permute.xlu0 10
    %1344 = vperm.xlu0 %1343, %v31
    %v1345 = vpop.permute.xlu0 %1344
    %1347 = vset.pattern.permute.xlu0 10
    %1348 = vperm.xlu0 %1347, %v32
    %v1349 = vpop.permute.xlu0 %1348
    %1351 = vset.pattern.permute.xlu0 10
    %1352 = vperm.xlu0 %1351, %v33
    %v1353 = vpop.permute.xlu0 %1352
    %1355 = vset.pattern.permute.xlu0 10
    %1356 = vperm.xlu0 %1355, %v34
    %v1357 = vpop.permute.xlu0 %1356
    %1359 = vset.pattern.permute.xlu0 10
    %1360 = vperm.xlu0 %1359, %v35
    %v1361 = vpop.permute.xlu0 %1360
    %1363 = vset.pattern.permute.xlu0 10
    %1364 = vperm.xlu0 %1363, %v36
    %v1365 = vpop.permute.xlu0 %1364
    %v1367 = vlaneseq
    %v1368 = vshrl.u32 %v1367, 7
    %v1369 = vsub.s32 2, %v1368
    %v1370 = vrot.slane %v18, %v1369
    %v1371 = vsub.f32 %v1305, %v1370
    %v1372 = vsub.f32 %v1309, %v1370
    %v1373 = vsub.f32 %v1313, %v1370
    %v1374 = vsub.f32 %v1317, %v1370
    %v1375 = vsub.f32 %v1321, %v1370
    %v1376 = vsub.f32 %v1325, %v1370
    %v1377 = vsub.f32 %v1329, %v1370
    %v1378 = vsub.f32 %v1333, %v1370
    %v1379 = vsub.f32 %v1337, %v1370
    %v1380 = vsub.f32 %v1341, %v1370
    %v1381 = vsub.f32 %v1345, %v1370
    %v1382 = vsub.f32 %v1349, %v1370
    %v1383 = vsub.f32 %v1353, %v1370
    %v1384 = vsub.f32 %v1357, %v1370
    %v1385 = vsub.f32 %v1361, %v1370
    %v1386 = vsub.f32 %v1365, %v1370
    %v1387 = vand.u32 2147483647, %v1371
    %v1388 = vand.u32 2147483647, %v1372
    %v1389 = vand.u32 2147483647, %v1373
    %v1390 = vand.u32 2147483647, %v1374
    %v1391 = vand.u32 2147483647, %v1375
    %v1392 = vand.u32 2147483647, %v1376
    %v1393 = vand.u32 2147483647, %v1377
    %v1394 = vand.u32 2147483647, %v1378
    %v1395 = vand.u32 2147483647, %v1379
    %v1396 = vand.u32 2147483647, %v1380
    %v1397 = vand.u32 2147483647, %v1381
    %v1398 = vand.u32 2147483647, %v1382
    %v1399 = vand.u32 2147483647, %v1383
    %v1400 = vand.u32 2147483647, %v1384
    %v1401 = vand.u32 2147483647, %v1385
    %v1402 = vand.u32 2147483647, %v1386
    %v1403 = vadd.f32 %v1287, %v1387
    %v1404 = vadd.f32 %v1288, %v1388
    %v1405 = vadd.f32 %v1289, %v1389
    %v1406 = vadd.f32 %v1290, %v1390
    %v1407 = vadd.f32 %v1291, %v1391
    %v1408 = vadd.f32 %v1292, %v1392
    %v1409 = vadd.f32 %v1293, %v1393
    %v1410 = vadd.f32 %v1294, %v1394
    %v1411 = vadd.f32 %v1295, %v1395
    %v1412 = vadd.f32 %v1296, %v1396
    %v1413 = vadd.f32 %v1297, %v1397
    %v1414 = vadd.f32 %v1298, %v1398
    %v1415 = vadd.f32 %v1299, %v1399
    %v1416 = vadd.f32 %v1300, %v1400
    %v1417 = vadd.f32 %v1301, %v1401
    %v1418 = vadd.f32 %v1302, %v1402
    %1419 = vset.pattern.permute.xlu0 11
    %1420 = vperm.xlu0 %1419, %v21
    %v1421 = vpop.permute.xlu0 %1420
    %1423 = vset.pattern.permute.xlu0 11
    %1424 = vperm.xlu0 %1423, %v22
    %v1425 = vpop.permute.xlu0 %1424
    %1427 = vset.pattern.permute.xlu0 11
    %1428 = vperm.xlu0 %1427, %v23
    %v1429 = vpop.permute.xlu0 %1428
    %1431 = vset.pattern.permute.xlu0 11
    %1432 = vperm.xlu0 %1431, %v24
    %v1433 = vpop.permute.xlu0 %1432
    %1435 = vset.pattern.permute.xlu0 11
    %1436 = vperm.xlu0 %1435, %v25
    %v1437 = vpop.permute.xlu0 %1436
    %1439 = vset.pattern.permute.xlu0 11
    %1440 = vperm.xlu0 %1439, %v26
    %v1441 = vpop.permute.xlu0 %1440
    %1443 = vset.pattern.permute.xlu0 11
    %1444 = vperm.xlu0 %1443, %v27
    %v1445 = vpop.permute.xlu0 %1444
    %1447 = vset.pattern.permute.xlu0 11
    %1448 = vperm.xlu0 %1447, %v28
    %v1449 = vpop.permute.xlu0 %1448
    %1451 = vset.pattern.permute.xlu0 11
    %1452 = vperm.xlu0 %1451, %v29
    %v1453 = vpop.permute.xlu0 %1452
    %1455 = vset.pattern.permute.xlu0 11
    %1456 = vperm.xlu0 %1455, %v30
    %v1457 = vpop.permute.xlu0 %1456
    %1459 = vset.pattern.permute.xlu0 11
    %1460 = vperm.xlu0 %1459, %v31
    %v1461 = vpop.permute.xlu0 %1460
    %1463 = vset.pattern.permute.xlu0 11
    %1464 = vperm.xlu0 %1463, %v32
    %v1465 = vpop.permute.xlu0 %1464
    %1467 = vset.pattern.permute.xlu0 11
    %1468 = vperm.xlu0 %1467, %v33
    %v1469 = vpop.permute.xlu0 %1468
    %1471 = vset.pattern.permute.xlu0 11
    %1472 = vperm.xlu0 %1471, %v34
    %v1473 = vpop.permute.xlu0 %1472
    %1475 = vset.pattern.permute.xlu0 11
    %1476 = vperm.xlu0 %1475, %v35
    %v1477 = vpop.permute.xlu0 %1476
    %1479 = vset.pattern.permute.xlu0 11
    %1480 = vperm.xlu0 %1479, %v36
    %v1481 = vpop.permute.xlu0 %1480
    %v1483 = vlaneseq
    %v1484 = vshrl.u32 %v1483, 7
    %v1485 = vsub.s32 3, %v1484
    %v1486 = vrot.slane %v18, %v1485
    %v1487 = vsub.f32 %v1421, %v1486
    %v1488 = vsub.f32 %v1425, %v1486
    %v1489 = vsub.f32 %v1429, %v1486
    %v1490 = vsub.f32 %v1433, %v1486
    %v1491 = vsub.f32 %v1437, %v1486
    %v1492 = vsub.f32 %v1441, %v1486
    %v1493 = vsub.f32 %v1445, %v1486
    %v1494 = vsub.f32 %v1449, %v1486
    %v1495 = vsub.f32 %v1453, %v1486
    %v1496 = vsub.f32 %v1457, %v1486
    %v1497 = vsub.f32 %v1461, %v1486
    %v1498 = vsub.f32 %v1465, %v1486
    %v1499 = vsub.f32 %v1469, %v1486
    %v1500 = vsub.f32 %v1473, %v1486
    %v1501 = vsub.f32 %v1477, %v1486
    %v1502 = vsub.f32 %v1481, %v1486
    %v1503 = vand.u32 2147483647, %v1487
    %v1504 = vand.u32 2147483647, %v1488
    %v1505 = vand.u32 2147483647, %v1489
    %v1506 = vand.u32 2147483647, %v1490
    %v1507 = vand.u32 2147483647, %v1491
    %v1508 = vand.u32 2147483647, %v1492
    %v1509 = vand.u32 2147483647, %v1493
    %v1510 = vand.u32 2147483647, %v1494
    %v1511 = vand.u32 2147483647, %v1495
    %v1512 = vand.u32 2147483647, %v1496
    %v1513 = vand.u32 2147483647, %v1497
    %v1514 = vand.u32 2147483647, %v1498
    %v1515 = vand.u32 2147483647, %v1499
    %v1516 = vand.u32 2147483647, %v1500
    %v1517 = vand.u32 2147483647, %v1501
    %v1518 = vand.u32 2147483647, %v1502
    %v1519 = vadd.f32 %v1403, %v1503
    %v1520 = vadd.f32 %v1404, %v1504
    %v1521 = vadd.f32 %v1405, %v1505
    %v1522 = vadd.f32 %v1406, %v1506
    %v1523 = vadd.f32 %v1407, %v1507
    %v1524 = vadd.f32 %v1408, %v1508
    %v1525 = vadd.f32 %v1409, %v1509
    %v1526 = vadd.f32 %v1410, %v1510
    %v1527 = vadd.f32 %v1411, %v1511
    %v1528 = vadd.f32 %v1412, %v1512
    %v1529 = vadd.f32 %v1413, %v1513
    %v1530 = vadd.f32 %v1414, %v1514
    %v1531 = vadd.f32 %v1415, %v1515
    %v1532 = vadd.f32 %v1416, %v1516
    %v1533 = vadd.f32 %v1417, %v1517
    %v1534 = vadd.f32 %v1418, %v1518
    %v1535 = vsub.f32 0.0, %v1519
    %v1536 = vsub.f32 0.0, %v1520
    %v1537 = vsub.f32 0.0, %v1521
    %v1538 = vsub.f32 0.0, %v1522
    %v1539 = vsub.f32 0.0, %v1523
    %v1540 = vsub.f32 0.0, %v1524
    %v1541 = vsub.f32 0.0, %v1525
    %v1542 = vsub.f32 0.0, %v1526
    %v1543 = vsub.f32 0.0, %v1527
    %v1544 = vsub.f32 0.0, %v1528
    %v1545 = vsub.f32 0.0, %v1529
    %v1546 = vsub.f32 0.0, %v1530
    %v1547 = vsub.f32 0.0, %v1531
    %v1548 = vsub.f32 0.0, %v1532
    %v1549 = vsub.f32 0.0, %v1533
    %v1550 = vsub.f32 0.0, %v1534
    %v1551 = vmul.f32 %v1535, 1.442695
    %v1552 = vpow.pop %v1551
    %v1553 = vmul.f32 %v1536, 1.442695
    %v1554 = vpow.pop %v1553
    %v1555 = vmul.f32 %v1537, 1.442695
    %v1556 = vpow.pop %v1555
    %v1557 = vmul.f32 %v1538, 1.442695
    %v1558 = vpow.pop %v1557
    %v1559 = vmul.f32 %v1539, 1.442695
    %v1560 = vpow.pop %v1559
    %v1561 = vmul.f32 %v1540, 1.442695
    %v1562 = vpow.pop %v1561
    %v1563 = vmul.f32 %v1541, 1.442695
    %v1564 = vpow.pop %v1563
    %v1565 = vmul.f32 %v1542, 1.442695
    %v1566 = vpow.pop %v1565
    %v1567 = vmul.f32 %v1543, 1.442695
    %v1568 = vpow.pop %v1567
    %v1569 = vmul.f32 %v1544, 1.442695
    %v1570 = vpow.pop %v1569
    %v1571 = vmul.f32 %v1545, 1.442695
    %v1572 = vpow.pop %v1571
    %v1573 = vmul.f32 %v1546, 1.442695
    %v1574 = vpow.pop %v1573
    %v1575 = vmul.f32 %v1547, 1.442695
    %v1576 = vpow.pop %v1575
    %v1577 = vmul.f32 %v1548, 1.442695
    %v1578 = vpow.pop %v1577
    %v1579 = vmul.f32 %v1549, 1.442695
    %v1580 = vpow.pop %v1579
    %v1581 = vmul.f32 %v1550, 1.442695
    %v1582 = vpow.pop %v1581
    %v1583 = vadd.f32 %v1552, %v1554
    %v1584 = vadd.f32 %v1583, %v1556
    %v1585 = vadd.f32 %v1584, %v1558
    %v1586 = vadd.f32 %v1585, %v1560
    %v1587 = vadd.f32 %v1586, %v1562
    %v1588 = vadd.f32 %v1587, %v1564
    %v1589 = vadd.f32 %v1588, %v1566
    %v1590 = vadd.f32 %v1589, %v1568
    %v1591 = vadd.f32 %v1590, %v1570
    %v1592 = vadd.f32 %v1591, %v1572
    %v1593 = vadd.f32 %v1592, %v1574
    %v1594 = vadd.f32 %v1593, %v1576
    %v1595 = vadd.f32 %v1594, %v1578
    %v1596 = vadd.f32 %v1595, %v1580
    %v1597 = vadd.f32 %v1596, %v1582
    %v1598 = vrot.slane %v1597, 4
    %v1599 = vadd.f32 %v1597, %v1598
    %v1600 = vrot.slane %v1599, 2
    %v1601 = vadd.f32 %v1599, %v1600
    %v1602 = vrot.slane %v1601, 1
    %v1603 = vadd.f32 %v1601, %v1602
    %1604 = vset.pattern.permute.xlu0 12
    %1605 = vperm.xlu0 %1604, %v21
    %v1606 = vpop.permute.xlu0 %1605
    %1608 = vset.pattern.permute.xlu0 12
    %1609 = vperm.xlu0 %1608, %v22
    %v1610 = vpop.permute.xlu0 %1609
    %1612 = vset.pattern.permute.xlu0 12
    %1613 = vperm.xlu0 %1612, %v23
    %v1614 = vpop.permute.xlu0 %1613
    %1616 = vset.pattern.permute.xlu0 12
    %1617 = vperm.xlu0 %1616, %v24
    %v1618 = vpop.permute.xlu0 %1617
    %1620 = vset.pattern.permute.xlu0 12
    %1621 = vperm.xlu0 %1620, %v25
    %v1622 = vpop.permute.xlu0 %1621
    %1624 = vset.pattern.permute.xlu0 12
    %1625 = vperm.xlu0 %1624, %v26
    %v1626 = vpop.permute.xlu0 %1625
    %1628 = vset.pattern.permute.xlu0 12
    %1629 = vperm.xlu0 %1628, %v27
    %v1630 = vpop.permute.xlu0 %1629
    %1632 = vset.pattern.permute.xlu0 12
    %1633 = vperm.xlu0 %1632, %v28
    %v1634 = vpop.permute.xlu0 %1633
    %1636 = vset.pattern.permute.xlu0 12
    %1637 = vperm.xlu0 %1636, %v29
    %v1638 = vpop.permute.xlu0 %1637
    %1640 = vset.pattern.permute.xlu0 12
    %1641 = vperm.xlu0 %1640, %v30
    %v1642 = vpop.permute.xlu0 %1641
    %1644 = vset.pattern.permute.xlu0 12
    %1645 = vperm.xlu0 %1644, %v31
    %v1646 = vpop.permute.xlu0 %1645
    %1648 = vset.pattern.permute.xlu0 12
    %1649 = vperm.xlu0 %1648, %v32
    %v1650 = vpop.permute.xlu0 %1649
    %1652 = vset.pattern.permute.xlu0 12
    %1653 = vperm.xlu0 %1652, %v33
    %v1654 = vpop.permute.xlu0 %1653
    %1656 = vset.pattern.permute.xlu0 12
    %1657 = vperm.xlu0 %1656, %v34
    %v1658 = vpop.permute.xlu0 %1657
    %1660 = vset.pattern.permute.xlu0 12
    %1661 = vperm.xlu0 %1660, %v35
    %v1662 = vpop.permute.xlu0 %1661
    %1664 = vset.pattern.permute.xlu0 12
    %1665 = vperm.xlu0 %1664, %v36
    %v1666 = vpop.permute.xlu0 %1665
    %v1668 = vlaneseq
    %v1669 = vshrl.u32 %v1668, 7
    %v1670 = vsub.s32 4, %v1669
    %v1671 = vrot.slane %v18, %v1670
    %v1672 = vsub.f32 %v1606, %v1671
    %v1673 = vsub.f32 %v1610, %v1671
    %v1674 = vsub.f32 %v1614, %v1671
    %v1675 = vsub.f32 %v1618, %v1671
    %v1676 = vsub.f32 %v1622, %v1671
    %v1677 = vsub.f32 %v1626, %v1671
    %v1678 = vsub.f32 %v1630, %v1671
    %v1679 = vsub.f32 %v1634, %v1671
    %v1680 = vsub.f32 %v1638, %v1671
    %v1681 = vsub.f32 %v1642, %v1671
    %v1682 = vsub.f32 %v1646, %v1671
    %v1683 = vsub.f32 %v1650, %v1671
    %v1684 = vsub.f32 %v1654, %v1671
    %v1685 = vsub.f32 %v1658, %v1671
    %v1686 = vsub.f32 %v1662, %v1671
    %v1687 = vsub.f32 %v1666, %v1671
    %v1688 = vand.u32 2147483647, %v1672
    %v1689 = vand.u32 2147483647, %v1673
    %v1690 = vand.u32 2147483647, %v1674
    %v1691 = vand.u32 2147483647, %v1675
    %v1692 = vand.u32 2147483647, %v1676
    %v1693 = vand.u32 2147483647, %v1677
    %v1694 = vand.u32 2147483647, %v1678
    %v1695 = vand.u32 2147483647, %v1679
    %v1696 = vand.u32 2147483647, %v1680
    %v1697 = vand.u32 2147483647, %v1681
    %v1698 = vand.u32 2147483647, %v1682
    %v1699 = vand.u32 2147483647, %v1683
    %v1700 = vand.u32 2147483647, %v1684
    %v1701 = vand.u32 2147483647, %v1685
    %v1702 = vand.u32 2147483647, %v1686
    %v1703 = vand.u32 2147483647, %v1687
    %1704 = vset.pattern.permute.xlu0 13
    %1705 = vperm.xlu0 %1704, %v21
    %v1706 = vpop.permute.xlu0 %1705
    %1708 = vset.pattern.permute.xlu0 13
    %1709 = vperm.xlu0 %1708, %v22
    %v1710 = vpop.permute.xlu0 %1709
    %1712 = vset.pattern.permute.xlu0 13
    %1713 = vperm.xlu0 %1712, %v23
    %v1714 = vpop.permute.xlu0 %1713
    %1716 = vset.pattern.permute.xlu0 13
    %1717 = vperm.xlu0 %1716, %v24
    %v1718 = vpop.permute.xlu0 %1717
    %1720 = vset.pattern.permute.xlu0 13
    %1721 = vperm.xlu0 %1720, %v25
    %v1722 = vpop.permute.xlu0 %1721
    %1724 = vset.pattern.permute.xlu0 13
    %1725 = vperm.xlu0 %1724, %v26
    %v1726 = vpop.permute.xlu0 %1725
    %1728 = vset.pattern.permute.xlu0 13
    %1729 = vperm.xlu0 %1728, %v27
    %v1730 = vpop.permute.xlu0 %1729
    %1732 = vset.pattern.permute.xlu0 13
    %1733 = vperm.xlu0 %1732, %v28
    %v1734 = vpop.permute.xlu0 %1733
    %1736 = vset.pattern.permute.xlu0 13
    %1737 = vperm.xlu0 %1736, %v29
    %v1738 = vpop.permute.xlu0 %1737
    %1740 = vset.pattern.permute.xlu0 13
    %1741 = vperm.xlu0 %1740, %v30
    %v1742 = vpop.permute.xlu0 %1741
    %1744 = vset.pattern.permute.xlu0 13
    %1745 = vperm.xlu0 %1744, %v31
    %v1746 = vpop.permute.xlu0 %1745
    %1748 = vset.pattern.permute.xlu0 13
    %1749 = vperm.xlu0 %1748, %v32
    %v1750 = vpop.permute.xlu0 %1749
    %1752 = vset.pattern.permute.xlu0 13
    %1753 = vperm.xlu0 %1752, %v33
    %v1754 = vpop.permute.xlu0 %1753
    %1756 = vset.pattern.permute.xlu0 13
    %1757 = vperm.xlu0 %1756, %v34
    %v1758 = vpop.permute.xlu0 %1757
    %1760 = vset.pattern.permute.xlu0 13
    %1761 = vperm.xlu0 %1760, %v35
    %v1762 = vpop.permute.xlu0 %1761
    %1764 = vset.pattern.permute.xlu0 13
    %1765 = vperm.xlu0 %1764, %v36
    %v1766 = vpop.permute.xlu0 %1765
    %v1768 = vlaneseq
    %v1769 = vshrl.u32 %v1768, 7
    %v1770 = vsub.s32 5, %v1769
    %v1771 = vrot.slane %v18, %v1770
    %v1772 = vsub.f32 %v1706, %v1771
    %v1773 = vsub.f32 %v1710, %v1771
    %v1774 = vsub.f32 %v1714, %v1771
    %v1775 = vsub.f32 %v1718, %v1771
    %v1776 = vsub.f32 %v1722, %v1771
    %v1777 = vsub.f32 %v1726, %v1771
    %v1778 = vsub.f32 %v1730, %v1771
    %v1779 = vsub.f32 %v1734, %v1771
    %v1780 = vsub.f32 %v1738, %v1771
    %v1781 = vsub.f32 %v1742, %v1771
    %v1782 = vsub.f32 %v1746, %v1771
    %v1783 = vsub.f32 %v1750, %v1771
    %v1784 = vsub.f32 %v1754, %v1771
    %v1785 = vsub.f32 %v1758, %v1771
    %v1786 = vsub.f32 %v1762, %v1771
    %v1787 = vsub.f32 %v1766, %v1771
    %v1788 = vand.u32 2147483647, %v1772
    %v1789 = vand.u32 2147483647, %v1773
    %v1790 = vand.u32 2147483647, %v1774
    %v1791 = vand.u32 2147483647, %v1775
    %v1792 = vand.u32 2147483647, %v1776
    %v1793 = vand.u32 2147483647, %v1777
    %v1794 = vand.u32 2147483647, %v1778
    %v1795 = vand.u32 2147483647, %v1779
    %v1796 = vand.u32 2147483647, %v1780
    %v1797 = vand.u32 2147483647, %v1781
    %v1798 = vand.u32 2147483647, %v1782
    %v1799 = vand.u32 2147483647, %v1783
    %v1800 = vand.u32 2147483647, %v1784
    %v1801 = vand.u32 2147483647, %v1785
    %v1802 = vand.u32 2147483647, %v1786
    %v1803 = vand.u32 2147483647, %v1787
    %v1804 = vadd.f32 %v1688, %v1788
    %v1805 = vadd.f32 %v1689, %v1789
    %v1806 = vadd.f32 %v1690, %v1790
    %v1807 = vadd.f32 %v1691, %v1791
    %v1808 = vadd.f32 %v1692, %v1792
    %v1809 = vadd.f32 %v1693, %v1793
    %v1810 = vadd.f32 %v1694, %v1794
    %v1811 = vadd.f32 %v1695, %v1795
    %v1812 = vadd.f32 %v1696, %v1796
    %v1813 = vadd.f32 %v1697, %v1797
    %v1814 = vadd.f32 %v1698, %v1798
    %v1815 = vadd.f32 %v1699, %v1799
    %v1816 = vadd.f32 %v1700, %v1800
    %v1817 = vadd.f32 %v1701, %v1801
    %v1818 = vadd.f32 %v1702, %v1802
    %v1819 = vadd.f32 %v1703, %v1803
    %1820 = vset.pattern.permute.xlu0 14
    %1821 = vperm.xlu0 %1820, %v21
    %v1822 = vpop.permute.xlu0 %1821
    %1824 = vset.pattern.permute.xlu0 14
    %1825 = vperm.xlu0 %1824, %v22
    %v1826 = vpop.permute.xlu0 %1825
    %1828 = vset.pattern.permute.xlu0 14
    %1829 = vperm.xlu0 %1828, %v23
    %v1830 = vpop.permute.xlu0 %1829
    %1832 = vset.pattern.permute.xlu0 14
    %1833 = vperm.xlu0 %1832, %v24
    %v1834 = vpop.permute.xlu0 %1833
    %1836 = vset.pattern.permute.xlu0 14
    %1837 = vperm.xlu0 %1836, %v25
    %v1838 = vpop.permute.xlu0 %1837
    %1840 = vset.pattern.permute.xlu0 14
    %1841 = vperm.xlu0 %1840, %v26
    %v1842 = vpop.permute.xlu0 %1841
    %1844 = vset.pattern.permute.xlu0 14
    %1845 = vperm.xlu0 %1844, %v27
    %v1846 = vpop.permute.xlu0 %1845
    %1848 = vset.pattern.permute.xlu0 14
    %1849 = vperm.xlu0 %1848, %v28
    %v1850 = vpop.permute.xlu0 %1849
    %1852 = vset.pattern.permute.xlu0 14
    %1853 = vperm.xlu0 %1852, %v29
    %v1854 = vpop.permute.xlu0 %1853
    %1856 = vset.pattern.permute.xlu0 14
    %1857 = vperm.xlu0 %1856, %v30
    %v1858 = vpop.permute.xlu0 %1857
    %1860 = vset.pattern.permute.xlu0 14
    %1861 = vperm.xlu0 %1860, %v31
    %v1862 = vpop.permute.xlu0 %1861
    %1864 = vset.pattern.permute.xlu0 14
    %1865 = vperm.xlu0 %1864, %v32
    %v1866 = vpop.permute.xlu0 %1865
    %1868 = vset.pattern.permute.xlu0 14
    %1869 = vperm.xlu0 %1868, %v33
    %v1870 = vpop.permute.xlu0 %1869
    %1872 = vset.pattern.permute.xlu0 14
    %1873 = vperm.xlu0 %1872, %v34
    %v1874 = vpop.permute.xlu0 %1873
    %1876 = vset.pattern.permute.xlu0 14
    %1877 = vperm.xlu0 %1876, %v35
    %v1878 = vpop.permute.xlu0 %1877
    %1880 = vset.pattern.permute.xlu0 14
    %1881 = vperm.xlu0 %1880, %v36
    %v1882 = vpop.permute.xlu0 %1881
    %v1884 = vlaneseq
    %v1885 = vshrl.u32 %v1884, 7
    %v1886 = vsub.s32 6, %v1885
    %v1887 = vrot.slane %v18, %v1886
    %v1888 = vsub.f32 %v1822, %v1887
    %v1889 = vsub.f32 %v1826, %v1887
    %v1890 = vsub.f32 %v1830, %v1887
    %v1891 = vsub.f32 %v1834, %v1887
    %v1892 = vsub.f32 %v1838, %v1887
    %v1893 = vsub.f32 %v1842, %v1887
    %v1894 = vsub.f32 %v1846, %v1887
    %v1895 = vsub.f32 %v1850, %v1887
    %v1896 = vsub.f32 %v1854, %v1887
    %v1897 = vsub.f32 %v1858, %v1887
    %v1898 = vsub.f32 %v1862, %v1887
    %v1899 = vsub.f32 %v1866, %v1887
    %v1900 = vsub.f32 %v1870, %v1887
    %v1901 = vsub.f32 %v1874, %v1887
    %v1902 = vsub.f32 %v1878, %v1887
    %v1903 = vsub.f32 %v1882, %v1887
    %v1904 = vand.u32 2147483647, %v1888
    %v1905 = vand.u32 2147483647, %v1889
    %v1906 = vand.u32 2147483647, %v1890
    %v1907 = vand.u32 2147483647, %v1891
    %v1908 = vand.u32 2147483647, %v1892
    %v1909 = vand.u32 2147483647, %v1893
    %v1910 = vand.u32 2147483647, %v1894
    %v1911 = vand.u32 2147483647, %v1895
    %v1912 = vand.u32 2147483647, %v1896
    %v1913 = vand.u32 2147483647, %v1897
    %v1914 = vand.u32 2147483647, %v1898
    %v1915 = vand.u32 2147483647, %v1899
    %v1916 = vand.u32 2147483647, %v1900
    %v1917 = vand.u32 2147483647, %v1901
    %v1918 = vand.u32 2147483647, %v1902
    %v1919 = vand.u32 2147483647, %v1903
    %v1920 = vadd.f32 %v1804, %v1904
    %v1921 = vadd.f32 %v1805, %v1905
    %v1922 = vadd.f32 %v1806, %v1906
    %v1923 = vadd.f32 %v1807, %v1907
    %v1924 = vadd.f32 %v1808, %v1908
    %v1925 = vadd.f32 %v1809, %v1909
    %v1926 = vadd.f32 %v1810, %v1910
    %v1927 = vadd.f32 %v1811, %v1911
    %v1928 = vadd.f32 %v1812, %v1912
    %v1929 = vadd.f32 %v1813, %v1913
    %v1930 = vadd.f32 %v1814, %v1914
    %v1931 = vadd.f32 %v1815, %v1915
    %v1932 = vadd.f32 %v1816, %v1916
    %v1933 = vadd.f32 %v1817, %v1917
    %v1934 = vadd.f32 %v1818, %v1918
    %v1935 = vadd.f32 %v1819, %v1919
    %1936 = vset.pattern.permute.xlu0 15
    %1937 = vperm.xlu0 %1936, %v21
    %v1938 = vpop.permute.xlu0 %1937
    %1940 = vset.pattern.permute.xlu0 15
    %1941 = vperm.xlu0 %1940, %v22
    %v1942 = vpop.permute.xlu0 %1941
    %1944 = vset.pattern.permute.xlu0 15
    %1945 = vperm.xlu0 %1944, %v23
    %v1946 = vpop.permute.xlu0 %1945
    %1948 = vset.pattern.permute.xlu0 15
    %1949 = vperm.xlu0 %1948, %v24
    %v1950 = vpop.permute.xlu0 %1949
    %1952 = vset.pattern.permute.xlu0 15
    %1953 = vperm.xlu0 %1952, %v25
    %v1954 = vpop.permute.xlu0 %1953
    %1956 = vset.pattern.permute.xlu0 15
    %1957 = vperm.xlu0 %1956, %v26
    %v1958 = vpop.permute.xlu0 %1957
    %1960 = vset.pattern.permute.xlu0 15
    %1961 = vperm.xlu0 %1960, %v27
    %v1962 = vpop.permute.xlu0 %1961
    %1964 = vset.pattern.permute.xlu0 15
    %1965 = vperm.xlu0 %1964, %v28
    %v1966 = vpop.permute.xlu0 %1965
    %1968 = vset.pattern.permute.xlu0 15
    %1969 = vperm.xlu0 %1968, %v29
    %v1970 = vpop.permute.xlu0 %1969
    %1972 = vset.pattern.permute.xlu0 15
    %1973 = vperm.xlu0 %1972, %v30
    %v1974 = vpop.permute.xlu0 %1973
    %1976 = vset.pattern.permute.xlu0 15
    %1977 = vperm.xlu0 %1976, %v31
    %v1978 = vpop.permute.xlu0 %1977
    %1980 = vset.pattern.permute.xlu0 15
    %1981 = vperm.xlu0 %1980, %v32
    %v1982 = vpop.permute.xlu0 %1981
    %1984 = vset.pattern.permute.xlu0 15
    %1985 = vperm.xlu0 %1984, %v33
    %v1986 = vpop.permute.xlu0 %1985
    %1988 = vset.pattern.permute.xlu0 15
    %1989 = vperm.xlu0 %1988, %v34
    %v1990 = vpop.permute.xlu0 %1989
    %1992 = vset.pattern.permute.xlu0 15
    %1993 = vperm.xlu0 %1992, %v35
    %v1994 = vpop.permute.xlu0 %1993
    %1996 = vset.pattern.permute.xlu0 15
    %1997 = vperm.xlu0 %1996, %v36
    %v1998 = vpop.permute.xlu0 %1997
    %v2000 = vlaneseq
    %v2001 = vshrl.u32 %v2000, 7
    %v2002 = vsub.s32 7, %v2001
    %v2003 = vrot.slane %v18, %v2002
    %v2004 = vsub.f32 %v1938, %v2003
    %v2005 = vsub.f32 %v1942, %v2003
    %v2006 = vsub.f32 %v1946, %v2003
    %v2007 = vsub.f32 %v1950, %v2003
    %v2008 = vsub.f32 %v1954, %v2003
    %v2009 = vsub.f32 %v1958, %v2003
    %v2010 = vsub.f32 %v1962, %v2003
    %v2011 = vsub.f32 %v1966, %v2003
    %v2012 = vsub.f32 %v1970, %v2003
    %v2013 = vsub.f32 %v1974, %v2003
    %v2014 = vsub.f32 %v1978, %v2003
    %v2015 = vsub.f32 %v1982, %v2003
    %v2016 = vsub.f32 %v1986, %v2003
    %v2017 = vsub.f32 %v1990, %v2003
    %v2018 = vsub.f32 %v1994, %v2003
    %v2019 = vsub.f32 %v1998, %v2003
    %v2020 = vand.u32 2147483647, %v2004
    %v2021 = vand.u32 2147483647, %v2005
    %v2022 = vand.u32 2147483647, %v2006
    %v2023 = vand.u32 2147483647, %v2007
    %v2024 = vand.u32 2147483647, %v2008
    %v2025 = vand.u32 2147483647, %v2009
    %v2026 = vand.u32 2147483647, %v2010
    %v2027 = vand.u32 2147483647, %v2011
    %v2028 = vand.u32 2147483647, %v2012
    %v2029 = vand.u32 2147483647, %v2013
    %v2030 = vand.u32 2147483647, %v2014
    %v2031 = vand.u32 2147483647, %v2015
    %v2032 = vand.u32 2147483647, %v2016
    %v2033 = vand.u32 2147483647, %v2017
    %v2034 = vand.u32 2147483647, %v2018
    %v2035 = vand.u32 2147483647, %v2019
    %v2036 = vadd.f32 %v1920, %v2020
    %v2037 = vadd.f32 %v1921, %v2021
    %v2038 = vadd.f32 %v1922, %v2022
    %v2039 = vadd.f32 %v1923, %v2023
    %v2040 = vadd.f32 %v1924, %v2024
    %v2041 = vadd.f32 %v1925, %v2025
    %v2042 = vadd.f32 %v1926, %v2026
    %v2043 = vadd.f32 %v1927, %v2027
    %v2044 = vadd.f32 %v1928, %v2028
    %v2045 = vadd.f32 %v1929, %v2029
    %v2046 = vadd.f32 %v1930, %v2030
    %v2047 = vadd.f32 %v1931, %v2031
    %v2048 = vadd.f32 %v1932, %v2032
    %v2049 = vadd.f32 %v1933, %v2033
    %v2050 = vadd.f32 %v1934, %v2034
    %v2051 = vadd.f32 %v1935, %v2035
    %v2052 = vsub.f32 0.0, %v2036
    %v2053 = vsub.f32 0.0, %v2037
    %v2054 = vsub.f32 0.0, %v2038
    %v2055 = vsub.f32 0.0, %v2039
    %v2056 = vsub.f32 0.0, %v2040
    %v2057 = vsub.f32 0.0, %v2041
    %v2058 = vsub.f32 0.0, %v2042
    %v2059 = vsub.f32 0.0, %v2043
    %v2060 = vsub.f32 0.0, %v2044
    %v2061 = vsub.f32 0.0, %v2045
    %v2062 = vsub.f32 0.0, %v2046
    %v2063 = vsub.f32 0.0, %v2047
    %v2064 = vsub.f32 0.0, %v2048
    %v2065 = vsub.f32 0.0, %v2049
    %v2066 = vsub.f32 0.0, %v2050
    %v2067 = vsub.f32 0.0, %v2051
    %v2068 = vmul.f32 %v2052, 1.442695
    %v2069 = vpow.pop %v2068
    %v2070 = vmul.f32 %v2053, 1.442695
    %v2071 = vpow.pop %v2070
    %v2072 = vmul.f32 %v2054, 1.442695
    %v2073 = vpow.pop %v2072
    %v2074 = vmul.f32 %v2055, 1.442695
    %v2075 = vpow.pop %v2074
    %v2076 = vmul.f32 %v2056, 1.442695
    %v2077 = vpow.pop %v2076
    %v2078 = vmul.f32 %v2057, 1.442695
    %v2079 = vpow.pop %v2078
    %v2080 = vmul.f32 %v2058, 1.442695
    %v2081 = vpow.pop %v2080
    %v2082 = vmul.f32 %v2059, 1.442695
    %v2083 = vpow.pop %v2082
    %v2084 = vmul.f32 %v2060, 1.442695
    %v2085 = vpow.pop %v2084
    %v2086 = vmul.f32 %v2061, 1.442695
    %v2087 = vpow.pop %v2086
    %v2088 = vmul.f32 %v2062, 1.442695
    %v2089 = vpow.pop %v2088
    %v2090 = vmul.f32 %v2063, 1.442695
    %v2091 = vpow.pop %v2090
    %v2092 = vmul.f32 %v2064, 1.442695
    %v2093 = vpow.pop %v2092
    %v2094 = vmul.f32 %v2065, 1.442695
    %v2095 = vpow.pop %v2094
    %v2096 = vmul.f32 %v2066, 1.442695
    %v2097 = vpow.pop %v2096
    %v2098 = vmul.f32 %v2067, 1.442695
    %v2099 = vpow.pop %v2098
    %v2100 = vadd.f32 %v2069, %v2071
    %v2101 = vadd.f32 %v2100, %v2073
    %v2102 = vadd.f32 %v2101, %v2075
    %v2103 = vadd.f32 %v2102, %v2077
    %v2104 = vadd.f32 %v2103, %v2079
    %v2105 = vadd.f32 %v2104, %v2081
    %v2106 = vadd.f32 %v2105, %v2083
    %v2107 = vadd.f32 %v2106, %v2085
    %v2108 = vadd.f32 %v2107, %v2087
    %v2109 = vadd.f32 %v2108, %v2089
    %v2110 = vadd.f32 %v2109, %v2091
    %v2111 = vadd.f32 %v2110, %v2093
    %v2112 = vadd.f32 %v2111, %v2095
    %v2113 = vadd.f32 %v2112, %v2097
    %v2114 = vadd.f32 %v2113, %v2099
    %v2115 = vrot.slane %v2114, 4
    %v2116 = vadd.f32 %v2114, %v2115
    %v2117 = vrot.slane %v2116, 2
    %v2118 = vadd.f32 %v2116, %v2117
    %v2119 = vrot.slane %v2118, 1
    %v2120 = vadd.f32 %v2118, %v2119
    %2121 = vset.pattern.permute.xlu0 16
    %2122 = vperm.xlu0 %2121, %v21
    %v2123 = vpop.permute.xlu0 %2122
    %2125 = vset.pattern.permute.xlu0 16
    %2126 = vperm.xlu0 %2125, %v22
    %v2127 = vpop.permute.xlu0 %2126
    %2129 = vset.pattern.permute.xlu0 16
    %2130 = vperm.xlu0 %2129, %v23
    %v2131 = vpop.permute.xlu0 %2130
    %2133 = vset.pattern.permute.xlu0 16
    %2134 = vperm.xlu0 %2133, %v24
    %v2135 = vpop.permute.xlu0 %2134
    %2137 = vset.pattern.permute.xlu0 16
    %2138 = vperm.xlu0 %2137, %v25
    %v2139 = vpop.permute.xlu0 %2138
    %2141 = vset.pattern.permute.xlu0 16
    %2142 = vperm.xlu0 %2141, %v26
    %v2143 = vpop.permute.xlu0 %2142
    %2145 = vset.pattern.permute.xlu0 16
    %2146 = vperm.xlu0 %2145, %v27
    %v2147 = vpop.permute.xlu0 %2146
    %2149 = vset.pattern.permute.xlu0 16
    %2150 = vperm.xlu0 %2149, %v28
    %v2151 = vpop.permute.xlu0 %2150
    %2153 = vset.pattern.permute.xlu0 16
    %2154 = vperm.xlu0 %2153, %v29
    %v2155 = vpop.permute.xlu0 %2154
    %2157 = vset.pattern.permute.xlu0 16
    %2158 = vperm.xlu0 %2157, %v30
    %v2159 = vpop.permute.xlu0 %2158
    %2161 = vset.pattern.permute.xlu0 16
    %2162 = vperm.xlu0 %2161, %v31
    %v2163 = vpop.permute.xlu0 %2162
    %2165 = vset.pattern.permute.xlu0 16
    %2166 = vperm.xlu0 %2165, %v32
    %v2167 = vpop.permute.xlu0 %2166
    %2169 = vset.pattern.permute.xlu0 16
    %2170 = vperm.xlu0 %2169, %v33
    %v2171 = vpop.permute.xlu0 %2170
    %2173 = vset.pattern.permute.xlu0 16
    %2174 = vperm.xlu0 %2173, %v34
    %v2175 = vpop.permute.xlu0 %2174
    %2177 = vset.pattern.permute.xlu0 16
    %2178 = vperm.xlu0 %2177, %v35
    %v2179 = vpop.permute.xlu0 %2178
    %2181 = vset.pattern.permute.xlu0 16
    %2182 = vperm.xlu0 %2181, %v36
    %v2183 = vpop.permute.xlu0 %2182
    %v2185 = vlaneseq
    %v2186 = vshrl.u32 %v2185, 7
    %v2187 = vsub.s32 0, %v2186
    %v2188 = vrot.slane %v19, %v2187
    %v2189 = vsub.f32 %v2123, %v2188
    %v2190 = vsub.f32 %v2127, %v2188
    %v2191 = vsub.f32 %v2131, %v2188
    %v2192 = vsub.f32 %v2135, %v2188
    %v2193 = vsub.f32 %v2139, %v2188
    %v2194 = vsub.f32 %v2143, %v2188
    %v2195 = vsub.f32 %v2147, %v2188
    %v2196 = vsub.f32 %v2151, %v2188
    %v2197 = vsub.f32 %v2155, %v2188
    %v2198 = vsub.f32 %v2159, %v2188
    %v2199 = vsub.f32 %v2163, %v2188
    %v2200 = vsub.f32 %v2167, %v2188
    %v2201 = vsub.f32 %v2171, %v2188
    %v2202 = vsub.f32 %v2175, %v2188
    %v2203 = vsub.f32 %v2179, %v2188
    %v2204 = vsub.f32 %v2183, %v2188
    %v2205 = vand.u32 2147483647, %v2189
    %v2206 = vand.u32 2147483647, %v2190
    %v2207 = vand.u32 2147483647, %v2191
    %v2208 = vand.u32 2147483647, %v2192
    %v2209 = vand.u32 2147483647, %v2193
    %v2210 = vand.u32 2147483647, %v2194
    %v2211 = vand.u32 2147483647, %v2195
    %v2212 = vand.u32 2147483647, %v2196
    %v2213 = vand.u32 2147483647, %v2197
    %v2214 = vand.u32 2147483647, %v2198
    %v2215 = vand.u32 2147483647, %v2199
    %v2216 = vand.u32 2147483647, %v2200
    %v2217 = vand.u32 2147483647, %v2201
    %v2218 = vand.u32 2147483647, %v2202
    %v2219 = vand.u32 2147483647, %v2203
    %v2220 = vand.u32 2147483647, %v2204
    %2221 = vset.pattern.permute.xlu0 17
    %2222 = vperm.xlu0 %2221, %v21
    %v2223 = vpop.permute.xlu0 %2222
    %2225 = vset.pattern.permute.xlu0 17
    %2226 = vperm.xlu0 %2225, %v22
    %v2227 = vpop.permute.xlu0 %2226
    %2229 = vset.pattern.permute.xlu0 17
    %2230 = vperm.xlu0 %2229, %v23
    %v2231 = vpop.permute.xlu0 %2230
    %2233 = vset.pattern.permute.xlu0 17
    %2234 = vperm.xlu0 %2233, %v24
    %v2235 = vpop.permute.xlu0 %2234
    %2237 = vset.pattern.permute.xlu0 17
    %2238 = vperm.xlu0 %2237, %v25
    %v2239 = vpop.permute.xlu0 %2238
    %2241 = vset.pattern.permute.xlu0 17
    %2242 = vperm.xlu0 %2241, %v26
    %v2243 = vpop.permute.xlu0 %2242
    %2245 = vset.pattern.permute.xlu0 17
    %2246 = vperm.xlu0 %2245, %v27
    %v2247 = vpop.permute.xlu0 %2246
    %2249 = vset.pattern.permute.xlu0 17
    %2250 = vperm.xlu0 %2249, %v28
    %v2251 = vpop.permute.xlu0 %2250
    %2253 = vset.pattern.permute.xlu0 17
    %2254 = vperm.xlu0 %2253, %v29
    %v2255 = vpop.permute.xlu0 %2254
    %2257 = vset.pattern.permute.xlu0 17
    %2258 = vperm.xlu0 %2257, %v30
    %v2259 = vpop.permute.xlu0 %2258
    %2261 = vset.pattern.permute.xlu0 17
    %2262 = vperm.xlu0 %2261, %v31
    %v2263 = vpop.permute.xlu0 %2262
    %2265 = vset.pattern.permute.xlu0 17
    %2266 = vperm.xlu0 %2265, %v32
    %v2267 = vpop.permute.xlu0 %2266
    %2269 = vset.pattern.permute.xlu0 17
    %2270 = vperm.xlu0 %2269, %v33
    %v2271 = vpop.permute.xlu0 %2270
    %2273 = vset.pattern.permute.xlu0 17
    %2274 = vperm.xlu0 %2273, %v34
    %v2275 = vpop.permute.xlu0 %2274
    %2277 = vset.pattern.permute.xlu0 17
    %2278 = vperm.xlu0 %2277, %v35
    %v2279 = vpop.permute.xlu0 %2278
    %2281 = vset.pattern.permute.xlu0 17
    %2282 = vperm.xlu0 %2281, %v36
    %v2283 = vpop.permute.xlu0 %2282
    %v2285 = vlaneseq
    %v2286 = vshrl.u32 %v2285, 7
    %v2287 = vsub.s32 1, %v2286
    %v2288 = vrot.slane %v19, %v2287
    %v2289 = vsub.f32 %v2223, %v2288
    %v2290 = vsub.f32 %v2227, %v2288
    %v2291 = vsub.f32 %v2231, %v2288
    %v2292 = vsub.f32 %v2235, %v2288
    %v2293 = vsub.f32 %v2239, %v2288
    %v2294 = vsub.f32 %v2243, %v2288
    %v2295 = vsub.f32 %v2247, %v2288
    %v2296 = vsub.f32 %v2251, %v2288
    %v2297 = vsub.f32 %v2255, %v2288
    %v2298 = vsub.f32 %v2259, %v2288
    %v2299 = vsub.f32 %v2263, %v2288
    %v2300 = vsub.f32 %v2267, %v2288
    %v2301 = vsub.f32 %v2271, %v2288
    %v2302 = vsub.f32 %v2275, %v2288
    %v2303 = vsub.f32 %v2279, %v2288
    %v2304 = vsub.f32 %v2283, %v2288
    %v2305 = vand.u32 2147483647, %v2289
    %v2306 = vand.u32 2147483647, %v2290
    %v2307 = vand.u32 2147483647, %v2291
    %v2308 = vand.u32 2147483647, %v2292
    %v2309 = vand.u32 2147483647, %v2293
    %v2310 = vand.u32 2147483647, %v2294
    %v2311 = vand.u32 2147483647, %v2295
    %v2312 = vand.u32 2147483647, %v2296
    %v2313 = vand.u32 2147483647, %v2297
    %v2314 = vand.u32 2147483647, %v2298
    %v2315 = vand.u32 2147483647, %v2299
    %v2316 = vand.u32 2147483647, %v2300
    %v2317 = vand.u32 2147483647, %v2301
    %v2318 = vand.u32 2147483647, %v2302
    %v2319 = vand.u32 2147483647, %v2303
    %v2320 = vand.u32 2147483647, %v2304
    %v2321 = vadd.f32 %v2205, %v2305
    %v2322 = vadd.f32 %v2206, %v2306
    %v2323 = vadd.f32 %v2207, %v2307
    %v2324 = vadd.f32 %v2208, %v2308
    %v2325 = vadd.f32 %v2209, %v2309
    %v2326 = vadd.f32 %v2210, %v2310
    %v2327 = vadd.f32 %v2211, %v2311
    %v2328 = vadd.f32 %v2212, %v2312
    %v2329 = vadd.f32 %v2213, %v2313
    %v2330 = vadd.f32 %v2214, %v2314
    %v2331 = vadd.f32 %v2215, %v2315
    %v2332 = vadd.f32 %v2216, %v2316
    %v2333 = vadd.f32 %v2217, %v2317
    %v2334 = vadd.f32 %v2218, %v2318
    %v2335 = vadd.f32 %v2219, %v2319
    %v2336 = vadd.f32 %v2220, %v2320
    %2337 = vset.pattern.permute.xlu0 18
    %2338 = vperm.xlu0 %2337, %v21
    %v2339 = vpop.permute.xlu0 %2338
    %2341 = vset.pattern.permute.xlu0 18
    %2342 = vperm.xlu0 %2341, %v22
    %v2343 = vpop.permute.xlu0 %2342
    %2345 = vset.pattern.permute.xlu0 18
    %2346 = vperm.xlu0 %2345, %v23
    %v2347 = vpop.permute.xlu0 %2346
    %2349 = vset.pattern.permute.xlu0 18
    %2350 = vperm.xlu0 %2349, %v24
    %v2351 = vpop.permute.xlu0 %2350
    %2353 = vset.pattern.permute.xlu0 18
    %2354 = vperm.xlu0 %2353, %v25
    %v2355 = vpop.permute.xlu0 %2354
    %2357 = vset.pattern.permute.xlu0 18
    %2358 = vperm.xlu0 %2357, %v26
    %v2359 = vpop.permute.xlu0 %2358
    %2361 = vset.pattern.permute.xlu0 18
    %2362 = vperm.xlu0 %2361, %v27
    %v2363 = vpop.permute.xlu0 %2362
    %2365 = vset.pattern.permute.xlu0 18
    %2366 = vperm.xlu0 %2365, %v28
    %v2367 = vpop.permute.xlu0 %2366
    %2369 = vset.pattern.permute.xlu0 18
    %2370 = vperm.xlu0 %2369, %v29
    %v2371 = vpop.permute.xlu0 %2370
    %2373 = vset.pattern.permute.xlu0 18
    %2374 = vperm.xlu0 %2373, %v30
    %v2375 = vpop.permute.xlu0 %2374
    %2377 = vset.pattern.permute.xlu0 18
    %2378 = vperm.xlu0 %2377, %v31
    %v2379 = vpop.permute.xlu0 %2378
    %2381 = vset.pattern.permute.xlu0 18
    %2382 = vperm.xlu0 %2381, %v32
    %v2383 = vpop.permute.xlu0 %2382
    %2385 = vset.pattern.permute.xlu0 18
    %2386 = vperm.xlu0 %2385, %v33
    %v2387 = vpop.permute.xlu0 %2386
    %2389 = vset.pattern.permute.xlu0 18
    %2390 = vperm.xlu0 %2389, %v34
    %v2391 = vpop.permute.xlu0 %2390
    %2393 = vset.pattern.permute.xlu0 18
    %2394 = vperm.xlu0 %2393, %v35
    %v2395 = vpop.permute.xlu0 %2394
    %2397 = vset.pattern.permute.xlu0 18
    %2398 = vperm.xlu0 %2397, %v36
    %v2399 = vpop.permute.xlu0 %2398
    %v2401 = vlaneseq
    %v2402 = vshrl.u32 %v2401, 7
    %v2403 = vsub.s32 2, %v2402
    %v2404 = vrot.slane %v19, %v2403
    %v2405 = vsub.f32 %v2339, %v2404
    %v2406 = vsub.f32 %v2343, %v2404
    %v2407 = vsub.f32 %v2347, %v2404
    %v2408 = vsub.f32 %v2351, %v2404
    %v2409 = vsub.f32 %v2355, %v2404
    %v2410 = vsub.f32 %v2359, %v2404
    %v2411 = vsub.f32 %v2363, %v2404
    %v2412 = vsub.f32 %v2367, %v2404
    %v2413 = vsub.f32 %v2371, %v2404
    %v2414 = vsub.f32 %v2375, %v2404
    %v2415 = vsub.f32 %v2379, %v2404
    %v2416 = vsub.f32 %v2383, %v2404
    %v2417 = vsub.f32 %v2387, %v2404
    %v2418 = vsub.f32 %v2391, %v2404
    %v2419 = vsub.f32 %v2395, %v2404
    %v2420 = vsub.f32 %v2399, %v2404
    %v2421 = vand.u32 2147483647, %v2405
    %v2422 = vand.u32 2147483647, %v2406
    %v2423 = vand.u32 2147483647, %v2407
    %v2424 = vand.u32 2147483647, %v2408
    %v2425 = vand.u32 2147483647, %v2409
    %v2426 = vand.u32 2147483647, %v2410
    %v2427 = vand.u32 2147483647, %v2411
    %v2428 = vand.u32 2147483647, %v2412
    %v2429 = vand.u32 2147483647, %v2413
    %v2430 = vand.u32 2147483647, %v2414
    %v2431 = vand.u32 2147483647, %v2415
    %v2432 = vand.u32 2147483647, %v2416
    %v2433 = vand.u32 2147483647, %v2417
    %v2434 = vand.u32 2147483647, %v2418
    %v2435 = vand.u32 2147483647, %v2419
    %v2436 = vand.u32 2147483647, %v2420
    %v2437 = vadd.f32 %v2321, %v2421
    %v2438 = vadd.f32 %v2322, %v2422
    %v2439 = vadd.f32 %v2323, %v2423
    %v2440 = vadd.f32 %v2324, %v2424
    %v2441 = vadd.f32 %v2325, %v2425
    %v2442 = vadd.f32 %v2326, %v2426
    %v2443 = vadd.f32 %v2327, %v2427
    %v2444 = vadd.f32 %v2328, %v2428
    %v2445 = vadd.f32 %v2329, %v2429
    %v2446 = vadd.f32 %v2330, %v2430
    %v2447 = vadd.f32 %v2331, %v2431
    %v2448 = vadd.f32 %v2332, %v2432
    %v2449 = vadd.f32 %v2333, %v2433
    %v2450 = vadd.f32 %v2334, %v2434
    %v2451 = vadd.f32 %v2335, %v2435
    %v2452 = vadd.f32 %v2336, %v2436
    %2453 = vset.pattern.permute.xlu0 19
    %2454 = vperm.xlu0 %2453, %v21
    %v2455 = vpop.permute.xlu0 %2454
    %2457 = vset.pattern.permute.xlu0 19
    %2458 = vperm.xlu0 %2457, %v22
    %v2459 = vpop.permute.xlu0 %2458
    %2461 = vset.pattern.permute.xlu0 19
    %2462 = vperm.xlu0 %2461, %v23
    %v2463 = vpop.permute.xlu0 %2462
    %2465 = vset.pattern.permute.xlu0 19
    %2466 = vperm.xlu0 %2465, %v24
    %v2467 = vpop.permute.xlu0 %2466
    %2469 = vset.pattern.permute.xlu0 19
    %2470 = vperm.xlu0 %2469, %v25
    %v2471 = vpop.permute.xlu0 %2470
    %2473 = vset.pattern.permute.xlu0 19
    %2474 = vperm.xlu0 %2473, %v26
    %v2475 = vpop.permute.xlu0 %2474
    %2477 = vset.pattern.permute.xlu0 19
    %2478 = vperm.xlu0 %2477, %v27
    %v2479 = vpop.permute.xlu0 %2478
    %2481 = vset.pattern.permute.xlu0 19
    %2482 = vperm.xlu0 %2481, %v28
    %v2483 = vpop.permute.xlu0 %2482
    %2485 = vset.pattern.permute.xlu0 19
    %2486 = vperm.xlu0 %2485, %v29
    %v2487 = vpop.permute.xlu0 %2486
    %2489 = vset.pattern.permute.xlu0 19
    %2490 = vperm.xlu0 %2489, %v30
    %v2491 = vpop.permute.xlu0 %2490
    %2493 = vset.pattern.permute.xlu0 19
    %2494 = vperm.xlu0 %2493, %v31
    %v2495 = vpop.permute.xlu0 %2494
    %2497 = vset.pattern.permute.xlu0 19
    %2498 = vperm.xlu0 %2497, %v32
    %v2499 = vpop.permute.xlu0 %2498
    %2501 = vset.pattern.permute.xlu0 19
    %2502 = vperm.xlu0 %2501, %v33
    %v2503 = vpop.permute.xlu0 %2502
    %2505 = vset.pattern.permute.xlu0 19
    %2506 = vperm.xlu0 %2505, %v34
    %v2507 = vpop.permute.xlu0 %2506
    %2509 = vset.pattern.permute.xlu0 19
    %2510 = vperm.xlu0 %2509, %v35
    %v2511 = vpop.permute.xlu0 %2510
    %2513 = vset.pattern.permute.xlu0 19
    %2514 = vperm.xlu0 %2513, %v36
    %v2515 = vpop.permute.xlu0 %2514
    %v2517 = vlaneseq
    %v2518 = vshrl.u32 %v2517, 7
    %v2519 = vsub.s32 3, %v2518
    %v2520 = vrot.slane %v19, %v2519
    %v2521 = vsub.f32 %v2455, %v2520
    %v2522 = vsub.f32 %v2459, %v2520
    %v2523 = vsub.f32 %v2463, %v2520
    %v2524 = vsub.f32 %v2467, %v2520
    %v2525 = vsub.f32 %v2471, %v2520
    %v2526 = vsub.f32 %v2475, %v2520
    %v2527 = vsub.f32 %v2479, %v2520
    %v2528 = vsub.f32 %v2483, %v2520
    %v2529 = vsub.f32 %v2487, %v2520
    %v2530 = vsub.f32 %v2491, %v2520
    %v2531 = vsub.f32 %v2495, %v2520
    %v2532 = vsub.f32 %v2499, %v2520
    %v2533 = vsub.f32 %v2503, %v2520
    %v2534 = vsub.f32 %v2507, %v2520
    %v2535 = vsub.f32 %v2511, %v2520
    %v2536 = vsub.f32 %v2515, %v2520
    %v2537 = vand.u32 2147483647, %v2521
    %v2538 = vand.u32 2147483647, %v2522
    %v2539 = vand.u32 2147483647, %v2523
    %v2540 = vand.u32 2147483647, %v2524
    %v2541 = vand.u32 2147483647, %v2525
    %v2542 = vand.u32 2147483647, %v2526
    %v2543 = vand.u32 2147483647, %v2527
    %v2544 = vand.u32 2147483647, %v2528
    %v2545 = vand.u32 2147483647, %v2529
    %v2546 = vand.u32 2147483647, %v2530
    %v2547 = vand.u32 2147483647, %v2531
    %v2548 = vand.u32 2147483647, %v2532
    %v2549 = vand.u32 2147483647, %v2533
    %v2550 = vand.u32 2147483647, %v2534
    %v2551 = vand.u32 2147483647, %v2535
    %v2552 = vand.u32 2147483647, %v2536
    %v2553 = vadd.f32 %v2437, %v2537
    %v2554 = vadd.f32 %v2438, %v2538
    %v2555 = vadd.f32 %v2439, %v2539
    %v2556 = vadd.f32 %v2440, %v2540
    %v2557 = vadd.f32 %v2441, %v2541
    %v2558 = vadd.f32 %v2442, %v2542
    %v2559 = vadd.f32 %v2443, %v2543
    %v2560 = vadd.f32 %v2444, %v2544
    %v2561 = vadd.f32 %v2445, %v2545
    %v2562 = vadd.f32 %v2446, %v2546
    %v2563 = vadd.f32 %v2447, %v2547
    %v2564 = vadd.f32 %v2448, %v2548
    %v2565 = vadd.f32 %v2449, %v2549
    %v2566 = vadd.f32 %v2450, %v2550
    %v2567 = vadd.f32 %v2451, %v2551
    %v2568 = vadd.f32 %v2452, %v2552
    %v2569 = vsub.f32 0.0, %v2553
    %v2570 = vsub.f32 0.0, %v2554
    %v2571 = vsub.f32 0.0, %v2555
    %v2572 = vsub.f32 0.0, %v2556
    %v2573 = vsub.f32 0.0, %v2557
    %v2574 = vsub.f32 0.0, %v2558
    %v2575 = vsub.f32 0.0, %v2559
    %v2576 = vsub.f32 0.0, %v2560
    %v2577 = vsub.f32 0.0, %v2561
    %v2578 = vsub.f32 0.0, %v2562
    %v2579 = vsub.f32 0.0, %v2563
    %v2580 = vsub.f32 0.0, %v2564
    %v2581 = vsub.f32 0.0, %v2565
    %v2582 = vsub.f32 0.0, %v2566
    %v2583 = vsub.f32 0.0, %v2567
    %v2584 = vsub.f32 0.0, %v2568
    %v2585 = vmul.f32 %v2569, 1.442695
    %v2586 = vpow.pop %v2585
    %v2587 = vmul.f32 %v2570, 1.442695
    %v2588 = vpow.pop %v2587
    %v2589 = vmul.f32 %v2571, 1.442695
    %v2590 = vpow.pop %v2589
    %v2591 = vmul.f32 %v2572, 1.442695
    %v2592 = vpow.pop %v2591
    %v2593 = vmul.f32 %v2573, 1.442695
    %v2594 = vpow.pop %v2593
    %v2595 = vmul.f32 %v2574, 1.442695
    %v2596 = vpow.pop %v2595
    %v2597 = vmul.f32 %v2575, 1.442695
    %v2598 = vpow.pop %v2597
    %v2599 = vmul.f32 %v2576, 1.442695
    %v2600 = vpow.pop %v2599
    %v2601 = vmul.f32 %v2577, 1.442695
    %v2602 = vpow.pop %v2601
    %v2603 = vmul.f32 %v2578, 1.442695
    %v2604 = vpow.pop %v2603
    %v2605 = vmul.f32 %v2579, 1.442695
    %v2606 = vpow.pop %v2605
    %v2607 = vmul.f32 %v2580, 1.442695
    %v2608 = vpow.pop %v2607
    %v2609 = vmul.f32 %v2581, 1.442695
    %v2610 = vpow.pop %v2609
    %v2611 = vmul.f32 %v2582, 1.442695
    %v2612 = vpow.pop %v2611
    %v2613 = vmul.f32 %v2583, 1.442695
    %v2614 = vpow.pop %v2613
    %v2615 = vmul.f32 %v2584, 1.442695
    %v2616 = vpow.pop %v2615
    %v2617 = vadd.f32 %v2586, %v2588
    %v2618 = vadd.f32 %v2617, %v2590
    %v2619 = vadd.f32 %v2618, %v2592
    %v2620 = vadd.f32 %v2619, %v2594
    %v2621 = vadd.f32 %v2620, %v2596
    %v2622 = vadd.f32 %v2621, %v2598
    %v2623 = vadd.f32 %v2622, %v2600
    %v2624 = vadd.f32 %v2623, %v2602
    %v2625 = vadd.f32 %v2624, %v2604
    %v2626 = vadd.f32 %v2625, %v2606
    %v2627 = vadd.f32 %v2626, %v2608
    %v2628 = vadd.f32 %v2627, %v2610
    %v2629 = vadd.f32 %v2628, %v2612
    %v2630 = vadd.f32 %v2629, %v2614
    %v2631 = vadd.f32 %v2630, %v2616
    %v2632 = vrot.slane %v2631, 4
    %v2633 = vadd.f32 %v2631, %v2632
    %v2634 = vrot.slane %v2633, 2
    %v2635 = vadd.f32 %v2633, %v2634
    %v2636 = vrot.slane %v2635, 1
    %v2637 = vadd.f32 %v2635, %v2636
    %2638 = vset.pattern.permute.xlu0 20
    %2639 = vperm.xlu0 %2638, %v21
    %v2640 = vpop.permute.xlu0 %2639
    %2642 = vset.pattern.permute.xlu0 20
    %2643 = vperm.xlu0 %2642, %v22
    %v2644 = vpop.permute.xlu0 %2643
    %2646 = vset.pattern.permute.xlu0 20
    %2647 = vperm.xlu0 %2646, %v23
    %v2648 = vpop.permute.xlu0 %2647
    %2650 = vset.pattern.permute.xlu0 20
    %2651 = vperm.xlu0 %2650, %v24
    %v2652 = vpop.permute.xlu0 %2651
    %2654 = vset.pattern.permute.xlu0 20
    %2655 = vperm.xlu0 %2654, %v25
    %v2656 = vpop.permute.xlu0 %2655
    %2658 = vset.pattern.permute.xlu0 20
    %2659 = vperm.xlu0 %2658, %v26
    %v2660 = vpop.permute.xlu0 %2659
    %2662 = vset.pattern.permute.xlu0 20
    %2663 = vperm.xlu0 %2662, %v27
    %v2664 = vpop.permute.xlu0 %2663
    %2666 = vset.pattern.permute.xlu0 20
    %2667 = vperm.xlu0 %2666, %v28
    %v2668 = vpop.permute.xlu0 %2667
    %2670 = vset.pattern.permute.xlu0 20
    %2671 = vperm.xlu0 %2670, %v29
    %v2672 = vpop.permute.xlu0 %2671
    %2674 = vset.pattern.permute.xlu0 20
    %2675 = vperm.xlu0 %2674, %v30
    %v2676 = vpop.permute.xlu0 %2675
    %2678 = vset.pattern.permute.xlu0 20
    %2679 = vperm.xlu0 %2678, %v31
    %v2680 = vpop.permute.xlu0 %2679
    %2682 = vset.pattern.permute.xlu0 20
    %2683 = vperm.xlu0 %2682, %v32
    %v2684 = vpop.permute.xlu0 %2683
    %2686 = vset.pattern.permute.xlu0 20
    %2687 = vperm.xlu0 %2686, %v33
    %v2688 = vpop.permute.xlu0 %2687
    %2690 = vset.pattern.permute.xlu0 20
    %2691 = vperm.xlu0 %2690, %v34
    %v2692 = vpop.permute.xlu0 %2691
    %2694 = vset.pattern.permute.xlu0 20
    %2695 = vperm.xlu0 %2694, %v35
    %v2696 = vpop.permute.xlu0 %2695
    %2698 = vset.pattern.permute.xlu0 20
    %2699 = vperm.xlu0 %2698, %v36
    %v2700 = vpop.permute.xlu0 %2699
    %v2702 = vlaneseq
    %v2703 = vshrl.u32 %v2702, 7
    %v2704 = vsub.s32 4, %v2703
    %v2705 = vrot.slane %v19, %v2704
    %v2706 = vsub.f32 %v2640, %v2705
    %v2707 = vsub.f32 %v2644, %v2705
    %v2708 = vsub.f32 %v2648, %v2705
    %v2709 = vsub.f32 %v2652, %v2705
    %v2710 = vsub.f32 %v2656, %v2705
    %v2711 = vsub.f32 %v2660, %v2705
    %v2712 = vsub.f32 %v2664, %v2705
    %v2713 = vsub.f32 %v2668, %v2705
    %v2714 = vsub.f32 %v2672, %v2705
    %v2715 = vsub.f32 %v2676, %v2705
    %v2716 = vsub.f32 %v2680, %v2705
    %v2717 = vsub.f32 %v2684, %v2705
    %v2718 = vsub.f32 %v2688, %v2705
    %v2719 = vsub.f32 %v2692, %v2705
    %v2720 = vsub.f32 %v2696, %v2705
    %v2721 = vsub.f32 %v2700, %v2705
    %v2722 = vand.u32 2147483647, %v2706
    %v2723 = vand.u32 2147483647, %v2707
    %v2724 = vand.u32 2147483647, %v2708
    %v2725 = vand.u32 2147483647, %v2709
    %v2726 = vand.u32 2147483647, %v2710
    %v2727 = vand.u32 2147483647, %v2711
    %v2728 = vand.u32 2147483647, %v2712
    %v2729 = vand.u32 2147483647, %v2713
    %v2730 = vand.u32 2147483647, %v2714
    %v2731 = vand.u32 2147483647, %v2715
    %v2732 = vand.u32 2147483647, %v2716
    %v2733 = vand.u32 2147483647, %v2717
    %v2734 = vand.u32 2147483647, %v2718
    %v2735 = vand.u32 2147483647, %v2719
    %v2736 = vand.u32 2147483647, %v2720
    %v2737 = vand.u32 2147483647, %v2721
    %2738 = vset.pattern.permute.xlu0 21
    %2739 = vperm.xlu0 %2738, %v21
    %v2740 = vpop.permute.xlu0 %2739
    %2742 = vset.pattern.permute.xlu0 21
    %2743 = vperm.xlu0 %2742, %v22
    %v2744 = vpop.permute.xlu0 %2743
    %2746 = vset.pattern.permute.xlu0 21
    %2747 = vperm.xlu0 %2746, %v23
    %v2748 = vpop.permute.xlu0 %2747
    %2750 = vset.pattern.permute.xlu0 21
    %2751 = vperm.xlu0 %2750, %v24
    %v2752 = vpop.permute.xlu0 %2751
    %2754 = vset.pattern.permute.xlu0 21
    %2755 = vperm.xlu0 %2754, %v25
    %v2756 = vpop.permute.xlu0 %2755
    %2758 = vset.pattern.permute.xlu0 21
    %2759 = vperm.xlu0 %2758, %v26
    %v2760 = vpop.permute.xlu0 %2759
    %2762 = vset.pattern.permute.xlu0 21
    %2763 = vperm.xlu0 %2762, %v27
    %v2764 = vpop.permute.xlu0 %2763
    %2766 = vset.pattern.permute.xlu0 21
    %2767 = vperm.xlu0 %2766, %v28
    %v2768 = vpop.permute.xlu0 %2767
    %2770 = vset.pattern.permute.xlu0 21
    %2771 = vperm.xlu0 %2770, %v29
    %v2772 = vpop.permute.xlu0 %2771
    %2774 = vset.pattern.permute.xlu0 21
    %2775 = vperm.xlu0 %2774, %v30
    %v2776 = vpop.permute.xlu0 %2775
    %2778 = vset.pattern.permute.xlu0 21
    %2779 = vperm.xlu0 %2778, %v31
    %v2780 = vpop.permute.xlu0 %2779
    %2782 = vset.pattern.permute.xlu0 21
    %2783 = vperm.xlu0 %2782, %v32
    %v2784 = vpop.permute.xlu0 %2783
    %2786 = vset.pattern.permute.xlu0 21
    %2787 = vperm.xlu0 %2786, %v33
    %v2788 = vpop.permute.xlu0 %2787
    %2790 = vset.pattern.permute.xlu0 21
    %2791 = vperm.xlu0 %2790, %v34
    %v2792 = vpop.permute.xlu0 %2791
    %2794 = vset.pattern.permute.xlu0 21
    %2795 = vperm.xlu0 %2794, %v35
    %v2796 = vpop.permute.xlu0 %2795
    %2798 = vset.pattern.permute.xlu0 21
    %2799 = vperm.xlu0 %2798, %v36
    %v2800 = vpop.permute.xlu0 %2799
    %v2802 = vlaneseq
    %v2803 = vshrl.u32 %v2802, 7
    %v2804 = vsub.s32 5, %v2803
    %v2805 = vrot.slane %v19, %v2804
    %v2806 = vsub.f32 %v2740, %v2805
    %v2807 = vsub.f32 %v2744, %v2805
    %v2808 = vsub.f32 %v2748, %v2805
    %v2809 = vsub.f32 %v2752, %v2805
    %v2810 = vsub.f32 %v2756, %v2805
    %v2811 = vsub.f32 %v2760, %v2805
    %v2812 = vsub.f32 %v2764, %v2805
    %v2813 = vsub.f32 %v2768, %v2805
    %v2814 = vsub.f32 %v2772, %v2805
    %v2815 = vsub.f32 %v2776, %v2805
    %v2816 = vsub.f32 %v2780, %v2805
    %v2817 = vsub.f32 %v2784, %v2805
    %v2818 = vsub.f32 %v2788, %v2805
    %v2819 = vsub.f32 %v2792, %v2805
    %v2820 = vsub.f32 %v2796, %v2805
    %v2821 = vsub.f32 %v2800, %v2805
    %v2822 = vand.u32 2147483647, %v2806
    %v2823 = vand.u32 2147483647, %v2807
    %v2824 = vand.u32 2147483647, %v2808
    %v2825 = vand.u32 2147483647, %v2809
    %v2826 = vand.u32 2147483647, %v2810
    %v2827 = vand.u32 2147483647, %v2811
    %v2828 = vand.u32 2147483647, %v2812
    %v2829 = vand.u32 2147483647, %v2813
    %v2830 = vand.u32 2147483647, %v2814
    %v2831 = vand.u32 2147483647, %v2815
    %v2832 = vand.u32 2147483647, %v2816
    %v2833 = vand.u32 2147483647, %v2817
    %v2834 = vand.u32 2147483647, %v2818
    %v2835 = vand.u32 2147483647, %v2819
    %v2836 = vand.u32 2147483647, %v2820
    %v2837 = vand.u32 2147483647, %v2821
    %v2838 = vadd.f32 %v2722, %v2822
    %v2839 = vadd.f32 %v2723, %v2823
    %v2840 = vadd.f32 %v2724, %v2824
    %v2841 = vadd.f32 %v2725, %v2825
    %v2842 = vadd.f32 %v2726, %v2826
    %v2843 = vadd.f32 %v2727, %v2827
    %v2844 = vadd.f32 %v2728, %v2828
    %v2845 = vadd.f32 %v2729, %v2829
    %v2846 = vadd.f32 %v2730, %v2830
    %v2847 = vadd.f32 %v2731, %v2831
    %v2848 = vadd.f32 %v2732, %v2832
    %v2849 = vadd.f32 %v2733, %v2833
    %v2850 = vadd.f32 %v2734, %v2834
    %v2851 = vadd.f32 %v2735, %v2835
    %v2852 = vadd.f32 %v2736, %v2836
    %v2853 = vadd.f32 %v2737, %v2837
    %2854 = vset.pattern.permute.xlu0 22
    %2855 = vperm.xlu0 %2854, %v21
    %v2856 = vpop.permute.xlu0 %2855
    %2858 = vset.pattern.permute.xlu0 22
    %2859 = vperm.xlu0 %2858, %v22
    %v2860 = vpop.permute.xlu0 %2859
    %2862 = vset.pattern.permute.xlu0 22
    %2863 = vperm.xlu0 %2862, %v23
    %v2864 = vpop.permute.xlu0 %2863
    %2866 = vset.pattern.permute.xlu0 22
    %2867 = vperm.xlu0 %2866, %v24
    %v2868 = vpop.permute.xlu0 %2867
    %2870 = vset.pattern.permute.xlu0 22
    %2871 = vperm.xlu0 %2870, %v25
    %v2872 = vpop.permute.xlu0 %2871
    %2874 = vset.pattern.permute.xlu0 22
    %2875 = vperm.xlu0 %2874, %v26
    %v2876 = vpop.permute.xlu0 %2875
    %2878 = vset.pattern.permute.xlu0 22
    %2879 = vperm.xlu0 %2878, %v27
    %v2880 = vpop.permute.xlu0 %2879
    %2882 = vset.pattern.permute.xlu0 22
    %2883 = vperm.xlu0 %2882, %v28
    %v2884 = vpop.permute.xlu0 %2883
    %2886 = vset.pattern.permute.xlu0 22
    %2887 = vperm.xlu0 %2886, %v29
    %v2888 = vpop.permute.xlu0 %2887
    %2890 = vset.pattern.permute.xlu0 22
    %2891 = vperm.xlu0 %2890, %v30
    %v2892 = vpop.permute.xlu0 %2891
    %2894 = vset.pattern.permute.xlu0 22
    %2895 = vperm.xlu0 %2894, %v31
    %v2896 = vpop.permute.xlu0 %2895
    %2898 = vset.pattern.permute.xlu0 22
    %2899 = vperm.xlu0 %2898, %v32
    %v2900 = vpop.permute.xlu0 %2899
    %2902 = vset.pattern.permute.xlu0 22
    %2903 = vperm.xlu0 %2902, %v33
    %v2904 = vpop.permute.xlu0 %2903
    %2906 = vset.pattern.permute.xlu0 22
    %2907 = vperm.xlu0 %2906, %v34
    %v2908 = vpop.permute.xlu0 %2907
    %2910 = vset.pattern.permute.xlu0 22
    %2911 = vperm.xlu0 %2910, %v35
    %v2912 = vpop.permute.xlu0 %2911
    %2914 = vset.pattern.permute.xlu0 22
    %2915 = vperm.xlu0 %2914, %v36
    %v2916 = vpop.permute.xlu0 %2915
    %v2918 = vlaneseq
    %v2919 = vshrl.u32 %v2918, 7
    %v2920 = vsub.s32 6, %v2919
    %v2921 = vrot.slane %v19, %v2920
    %v2922 = vsub.f32 %v2856, %v2921
    %v2923 = vsub.f32 %v2860, %v2921
    %v2924 = vsub.f32 %v2864, %v2921
    %v2925 = vsub.f32 %v2868, %v2921
    %v2926 = vsub.f32 %v2872, %v2921
    %v2927 = vsub.f32 %v2876, %v2921
    %v2928 = vsub.f32 %v2880, %v2921
    %v2929 = vsub.f32 %v2884, %v2921
    %v2930 = vsub.f32 %v2888, %v2921
    %v2931 = vsub.f32 %v2892, %v2921
    %v2932 = vsub.f32 %v2896, %v2921
    %v2933 = vsub.f32 %v2900, %v2921
    %v2934 = vsub.f32 %v2904, %v2921
    %v2935 = vsub.f32 %v2908, %v2921
    %v2936 = vsub.f32 %v2912, %v2921
    %v2937 = vsub.f32 %v2916, %v2921
    %v2938 = vand.u32 2147483647, %v2922
    %v2939 = vand.u32 2147483647, %v2923
    %v2940 = vand.u32 2147483647, %v2924
    %v2941 = vand.u32 2147483647, %v2925
    %v2942 = vand.u32 2147483647, %v2926
    %v2943 = vand.u32 2147483647, %v2927
    %v2944 = vand.u32 2147483647, %v2928
    %v2945 = vand.u32 2147483647, %v2929
    %v2946 = vand.u32 2147483647, %v2930
    %v2947 = vand.u32 2147483647, %v2931
    %v2948 = vand.u32 2147483647, %v2932
    %v2949 = vand.u32 2147483647, %v2933
    %v2950 = vand.u32 2147483647, %v2934
    %v2951 = vand.u32 2147483647, %v2935
    %v2952 = vand.u32 2147483647, %v2936
    %v2953 = vand.u32 2147483647, %v2937
    %v2954 = vadd.f32 %v2838, %v2938
    %v2955 = vadd.f32 %v2839, %v2939
    %v2956 = vadd.f32 %v2840, %v2940
    %v2957 = vadd.f32 %v2841, %v2941
    %v2958 = vadd.f32 %v2842, %v2942
    %v2959 = vadd.f32 %v2843, %v2943
    %v2960 = vadd.f32 %v2844, %v2944
    %v2961 = vadd.f32 %v2845, %v2945
    %v2962 = vadd.f32 %v2846, %v2946
    %v2963 = vadd.f32 %v2847, %v2947
    %v2964 = vadd.f32 %v2848, %v2948
    %v2965 = vadd.f32 %v2849, %v2949
    %v2966 = vadd.f32 %v2850, %v2950
    %v2967 = vadd.f32 %v2851, %v2951
    %v2968 = vadd.f32 %v2852, %v2952
    %v2969 = vadd.f32 %v2853, %v2953
    %2970 = vset.pattern.permute.xlu0 23
    %2971 = vperm.xlu0 %2970, %v21
    %v2972 = vpop.permute.xlu0 %2971
    %2974 = vset.pattern.permute.xlu0 23
    %2975 = vperm.xlu0 %2974, %v22
    %v2976 = vpop.permute.xlu0 %2975
    %2978 = vset.pattern.permute.xlu0 23
    %2979 = vperm.xlu0 %2978, %v23
    %v2980 = vpop.permute.xlu0 %2979
    %2982 = vset.pattern.permute.xlu0 23
    %2983 = vperm.xlu0 %2982, %v24
    %v2984 = vpop.permute.xlu0 %2983
    %2986 = vset.pattern.permute.xlu0 23
    %2987 = vperm.xlu0 %2986, %v25
    %v2988 = vpop.permute.xlu0 %2987
    %2990 = vset.pattern.permute.xlu0 23
    %2991 = vperm.xlu0 %2990, %v26
    %v2992 = vpop.permute.xlu0 %2991
    %2994 = vset.pattern.permute.xlu0 23
    %2995 = vperm.xlu0 %2994, %v27
    %v2996 = vpop.permute.xlu0 %2995
    %2998 = vset.pattern.permute.xlu0 23
    %2999 = vperm.xlu0 %2998, %v28
    %v3000 = vpop.permute.xlu0 %2999
    %3002 = vset.pattern.permute.xlu0 23
    %3003 = vperm.xlu0 %3002, %v29
    %v3004 = vpop.permute.xlu0 %3003
    %3006 = vset.pattern.permute.xlu0 23
    %3007 = vperm.xlu0 %3006, %v30
    %v3008 = vpop.permute.xlu0 %3007
    %3010 = vset.pattern.permute.xlu0 23
    %3011 = vperm.xlu0 %3010, %v31
    %v3012 = vpop.permute.xlu0 %3011
    %3014 = vset.pattern.permute.xlu0 23
    %3015 = vperm.xlu0 %3014, %v32
    %v3016 = vpop.permute.xlu0 %3015
    %3018 = vset.pattern.permute.xlu0 23
    %3019 = vperm.xlu0 %3018, %v33
    %v3020 = vpop.permute.xlu0 %3019
    %3022 = vset.pattern.permute.xlu0 23
    %3023 = vperm.xlu0 %3022, %v34
    %v3024 = vpop.permute.xlu0 %3023
    %3026 = vset.pattern.permute.xlu0 23
    %3027 = vperm.xlu0 %3026, %v35
    %v3028 = vpop.permute.xlu0 %3027
    %3030 = vset.pattern.permute.xlu0 23
    %3031 = vperm.xlu0 %3030, %v36
    %v3032 = vpop.permute.xlu0 %3031
    %v3034 = vlaneseq
    %v3035 = vshrl.u32 %v3034, 7
    %v3036 = vsub.s32 7, %v3035
    %v3037 = vrot.slane %v19, %v3036
    %v3038 = vsub.f32 %v2972, %v3037
    %v3039 = vsub.f32 %v2976, %v3037
    %v3040 = vsub.f32 %v2980, %v3037
    %v3041 = vsub.f32 %v2984, %v3037
    %v3042 = vsub.f32 %v2988, %v3037
    %v3043 = vsub.f32 %v2992, %v3037
    %v3044 = vsub.f32 %v2996, %v3037
    %v3045 = vsub.f32 %v3000, %v3037
    %v3046 = vsub.f32 %v3004, %v3037
    %v3047 = vsub.f32 %v3008, %v3037
    %v3048 = vsub.f32 %v3012, %v3037
    %v3049 = vsub.f32 %v3016, %v3037
    %v3050 = vsub.f32 %v3020, %v3037
    %v3051 = vsub.f32 %v3024, %v3037
    %v3052 = vsub.f32 %v3028, %v3037
    %v3053 = vsub.f32 %v3032, %v3037
    %v3054 = vand.u32 2147483647, %v3038
    %v3055 = vand.u32 2147483647, %v3039
    %v3056 = vand.u32 2147483647, %v3040
    %v3057 = vand.u32 2147483647, %v3041
    %v3058 = vand.u32 2147483647, %v3042
    %v3059 = vand.u32 2147483647, %v3043
    %v3060 = vand.u32 2147483647, %v3044
    %v3061 = vand.u32 2147483647, %v3045
    %v3062 = vand.u32 2147483647, %v3046
    %v3063 = vand.u32 2147483647, %v3047
    %v3064 = vand.u32 2147483647, %v3048
    %v3065 = vand.u32 2147483647, %v3049
    %v3066 = vand.u32 2147483647, %v3050
    %v3067 = vand.u32 2147483647, %v3051
    %v3068 = vand.u32 2147483647, %v3052
    %v3069 = vand.u32 2147483647, %v3053
    %v3070 = vadd.f32 %v2954, %v3054
    %v3071 = vadd.f32 %v2955, %v3055
    %v3072 = vadd.f32 %v2956, %v3056
    %v3073 = vadd.f32 %v2957, %v3057
    %v3074 = vadd.f32 %v2958, %v3058
    %v3075 = vadd.f32 %v2959, %v3059
    %v3076 = vadd.f32 %v2960, %v3060
    %v3077 = vadd.f32 %v2961, %v3061
    %v3078 = vadd.f32 %v2962, %v3062
    %v3079 = vadd.f32 %v2963, %v3063
    %v3080 = vadd.f32 %v2964, %v3064
    %v3081 = vadd.f32 %v2965, %v3065
    %v3082 = vadd.f32 %v2966, %v3066
    %v3083 = vadd.f32 %v2967, %v3067
    %v3084 = vadd.f32 %v2968, %v3068
    %v3085 = vadd.f32 %v2969, %v3069
    %v3086 = vsub.f32 0.0, %v3070
    %v3087 = vsub.f32 0.0, %v3071
    %v3088 = vsub.f32 0.0, %v3072
    %v3089 = vsub.f32 0.0, %v3073
    %v3090 = vsub.f32 0.0, %v3074
    %v3091 = vsub.f32 0.0, %v3075
    %v3092 = vsub.f32 0.0, %v3076
    %v3093 = vsub.f32 0.0, %v3077
    %v3094 = vsub.f32 0.0, %v3078
    %v3095 = vsub.f32 0.0, %v3079
    %v3096 = vsub.f32 0.0, %v3080
    %v3097 = vsub.f32 0.0, %v3081
    %v3098 = vsub.f32 0.0, %v3082
    %v3099 = vsub.f32 0.0, %v3083
    %v3100 = vsub.f32 0.0, %v3084
    %v3101 = vsub.f32 0.0, %v3085
    %v3102 = vmul.f32 %v3086, 1.442695
    %v3103 = vpow.pop %v3102
    %v3104 = vmul.f32 %v3087, 1.442695
    %v3105 = vpow.pop %v3104
    %v3106 = vmul.f32 %v3088, 1.442695
    %v3107 = vpow.pop %v3106
    %v3108 = vmul.f32 %v3089, 1.442695
    %v3109 = vpow.pop %v3108
    %v3110 = vmul.f32 %v3090, 1.442695
    %v3111 = vpow.pop %v3110
    %v3112 = vmul.f32 %v3091, 1.442695
    %v3113 = vpow.pop %v3112
    %v3114 = vmul.f32 %v3092, 1.442695
    %v3115 = vpow.pop %v3114
    %v3116 = vmul.f32 %v3093, 1.442695
    %v3117 = vpow.pop %v3116
    %v3118 = vmul.f32 %v3094, 1.442695
    %v3119 = vpow.pop %v3118
    %v3120 = vmul.f32 %v3095, 1.442695
    %v3121 = vpow.pop %v3120
    %v3122 = vmul.f32 %v3096, 1.442695
    %v3123 = vpow.pop %v3122
    %v3124 = vmul.f32 %v3097, 1.442695
    %v3125 = vpow.pop %v3124
    %v3126 = vmul.f32 %v3098, 1.442695
    %v3127 = vpow.pop %v3126
    %v3128 = vmul.f32 %v3099, 1.442695
    %v3129 = vpow.pop %v3128
    %v3130 = vmul.f32 %v3100, 1.442695
    %v3131 = vpow.pop %v3130
    %v3132 = vmul.f32 %v3101, 1.442695
    %v3133 = vpow.pop %v3132
    %v3134 = vadd.f32 %v3103, %v3105
    %v3135 = vadd.f32 %v3134, %v3107
    %v3136 = vadd.f32 %v3135, %v3109
    %v3137 = vadd.f32 %v3136, %v3111
    %v3138 = vadd.f32 %v3137, %v3113
    %v3139 = vadd.f32 %v3138, %v3115
    %v3140 = vadd.f32 %v3139, %v3117
    %v3141 = vadd.f32 %v3140, %v3119
    %v3142 = vadd.f32 %v3141, %v3121
    %v3143 = vadd.f32 %v3142, %v3123
    %v3144 = vadd.f32 %v3143, %v3125
    %v3145 = vadd.f32 %v3144, %v3127
    %v3146 = vadd.f32 %v3145, %v3129
    %v3147 = vadd.f32 %v3146, %v3131
    %v3148 = vadd.f32 %v3147, %v3133
    %v3149 = vrot.slane %v3148, 4
    %v3150 = vadd.f32 %v3148, %v3149
    %v3151 = vrot.slane %v3150, 2
    %v3152 = vadd.f32 %v3150, %v3151
    %v3153 = vrot.slane %v3152, 1
    %v3154 = vadd.f32 %v3152, %v3153
    %3155 = vset.pattern.permute.xlu0 24
    %3156 = vperm.xlu0 %3155, %v21
    %v3157 = vpop.permute.xlu0 %3156
    %3159 = vset.pattern.permute.xlu0 24
    %3160 = vperm.xlu0 %3159, %v22
    %v3161 = vpop.permute.xlu0 %3160
    %3163 = vset.pattern.permute.xlu0 24
    %3164 = vperm.xlu0 %3163, %v23
    %v3165 = vpop.permute.xlu0 %3164
    %3167 = vset.pattern.permute.xlu0 24
    %3168 = vperm.xlu0 %3167, %v24
    %v3169 = vpop.permute.xlu0 %3168
    %3171 = vset.pattern.permute.xlu0 24
    %3172 = vperm.xlu0 %3171, %v25
    %v3173 = vpop.permute.xlu0 %3172
    %3175 = vset.pattern.permute.xlu0 24
    %3176 = vperm.xlu0 %3175, %v26
    %v3177 = vpop.permute.xlu0 %3176
    %3179 = vset.pattern.permute.xlu0 24
    %3180 = vperm.xlu0 %3179, %v27
    %v3181 = vpop.permute.xlu0 %3180
    %3183 = vset.pattern.permute.xlu0 24
    %3184 = vperm.xlu0 %3183, %v28
    %v3185 = vpop.permute.xlu0 %3184
    %3187 = vset.pattern.permute.xlu0 24
    %3188 = vperm.xlu0 %3187, %v29
    %v3189 = vpop.permute.xlu0 %3188
    %3191 = vset.pattern.permute.xlu0 24
    %3192 = vperm.xlu0 %3191, %v30
    %v3193 = vpop.permute.xlu0 %3192
    %3195 = vset.pattern.permute.xlu0 24
    %3196 = vperm.xlu0 %3195, %v31
    %v3197 = vpop.permute.xlu0 %3196
    %3199 = vset.pattern.permute.xlu0 24
    %3200 = vperm.xlu0 %3199, %v32
    %v3201 = vpop.permute.xlu0 %3200
    %3203 = vset.pattern.permute.xlu0 24
    %3204 = vperm.xlu0 %3203, %v33
    %v3205 = vpop.permute.xlu0 %3204
    %3207 = vset.pattern.permute.xlu0 24
    %3208 = vperm.xlu0 %3207, %v34
    %v3209 = vpop.permute.xlu0 %3208
    %3211 = vset.pattern.permute.xlu0 24
    %3212 = vperm.xlu0 %3211, %v35
    %v3213 = vpop.permute.xlu0 %3212
    %3215 = vset.pattern.permute.xlu0 24
    %3216 = vperm.xlu0 %3215, %v36
    %v3217 = vpop.permute.xlu0 %3216
    %v3219 = vlaneseq
    %v3220 = vshrl.u32 %v3219, 7
    %v3221 = vsub.s32 0, %v3220
    %v3222 = vrot.slane %v20, %v3221
    %v3223 = vsub.f32 %v3157, %v3222
    %v3224 = vsub.f32 %v3161, %v3222
    %v3225 = vsub.f32 %v3165, %v3222
    %v3226 = vsub.f32 %v3169, %v3222
    %v3227 = vsub.f32 %v3173, %v3222
    %v3228 = vsub.f32 %v3177, %v3222
    %v3229 = vsub.f32 %v3181, %v3222
    %v3230 = vsub.f32 %v3185, %v3222
    %v3231 = vsub.f32 %v3189, %v3222
    %v3232 = vsub.f32 %v3193, %v3222
    %v3233 = vsub.f32 %v3197, %v3222
    %v3234 = vsub.f32 %v3201, %v3222
    %v3235 = vsub.f32 %v3205, %v3222
    %v3236 = vsub.f32 %v3209, %v3222
    %v3237 = vsub.f32 %v3213, %v3222
    %v3238 = vsub.f32 %v3217, %v3222
    %v3239 = vand.u32 2147483647, %v3223
    %v3240 = vand.u32 2147483647, %v3224
    %v3241 = vand.u32 2147483647, %v3225
    %v3242 = vand.u32 2147483647, %v3226
    %v3243 = vand.u32 2147483647, %v3227
    %v3244 = vand.u32 2147483647, %v3228
    %v3245 = vand.u32 2147483647, %v3229
    %v3246 = vand.u32 2147483647, %v3230
    %v3247 = vand.u32 2147483647, %v3231
    %v3248 = vand.u32 2147483647, %v3232
    %v3249 = vand.u32 2147483647, %v3233
    %v3250 = vand.u32 2147483647, %v3234
    %v3251 = vand.u32 2147483647, %v3235
    %v3252 = vand.u32 2147483647, %v3236
    %v3253 = vand.u32 2147483647, %v3237
    %v3254 = vand.u32 2147483647, %v3238
    %3255 = vset.pattern.permute.xlu0 25
    %3256 = vperm.xlu0 %3255, %v21
    %v3257 = vpop.permute.xlu0 %3256
    %3259 = vset.pattern.permute.xlu0 25
    %3260 = vperm.xlu0 %3259, %v22
    %v3261 = vpop.permute.xlu0 %3260
    %3263 = vset.pattern.permute.xlu0 25
    %3264 = vperm.xlu0 %3263, %v23
    %v3265 = vpop.permute.xlu0 %3264
    %3267 = vset.pattern.permute.xlu0 25
    %3268 = vperm.xlu0 %3267, %v24
    %v3269 = vpop.permute.xlu0 %3268
    %3271 = vset.pattern.permute.xlu0 25
    %3272 = vperm.xlu0 %3271, %v25
    %v3273 = vpop.permute.xlu0 %3272
    %3275 = vset.pattern.permute.xlu0 25
    %3276 = vperm.xlu0 %3275, %v26
    %v3277 = vpop.permute.xlu0 %3276
    %3279 = vset.pattern.permute.xlu0 25
    %3280 = vperm.xlu0 %3279, %v27
    %v3281 = vpop.permute.xlu0 %3280
    %3283 = vset.pattern.permute.xlu0 25
    %3284 = vperm.xlu0 %3283, %v28
    %v3285 = vpop.permute.xlu0 %3284
    %3287 = vset.pattern.permute.xlu0 25
    %3288 = vperm.xlu0 %3287, %v29
    %v3289 = vpop.permute.xlu0 %3288
    %3291 = vset.pattern.permute.xlu0 25
    %3292 = vperm.xlu0 %3291, %v30
    %v3293 = vpop.permute.xlu0 %3292
    %3295 = vset.pattern.permute.xlu0 25
    %3296 = vperm.xlu0 %3295, %v31
    %v3297 = vpop.permute.xlu0 %3296
    %3299 = vset.pattern.permute.xlu0 25
    %3300 = vperm.xlu0 %3299, %v32
    %v3301 = vpop.permute.xlu0 %3300
    %3303 = vset.pattern.permute.xlu0 25
    %3304 = vperm.xlu0 %3303, %v33
    %v3305 = vpop.permute.xlu0 %3304
    %3307 = vset.pattern.permute.xlu0 25
    %3308 = vperm.xlu0 %3307, %v34
    %v3309 = vpop.permute.xlu0 %3308
    %3311 = vset.pattern.permute.xlu0 25
    %3312 = vperm.xlu0 %3311, %v35
    %v3313 = vpop.permute.xlu0 %3312
    %3315 = vset.pattern.permute.xlu0 25
    %3316 = vperm.xlu0 %3315, %v36
    %v3317 = vpop.permute.xlu0 %3316
    %v3319 = vlaneseq
    %v3320 = vshrl.u32 %v3319, 7
    %v3321 = vsub.s32 1, %v3320
    %v3322 = vrot.slane %v20, %v3321
    %v3323 = vsub.f32 %v3257, %v3322
    %v3324 = vsub.f32 %v3261, %v3322
    %v3325 = vsub.f32 %v3265, %v3322
    %v3326 = vsub.f32 %v3269, %v3322
    %v3327 = vsub.f32 %v3273, %v3322
    %v3328 = vsub.f32 %v3277, %v3322
    %v3329 = vsub.f32 %v3281, %v3322
    %v3330 = vsub.f32 %v3285, %v3322
    %v3331 = vsub.f32 %v3289, %v3322
    %v3332 = vsub.f32 %v3293, %v3322
    %v3333 = vsub.f32 %v3297, %v3322
    %v3334 = vsub.f32 %v3301, %v3322
    %v3335 = vsub.f32 %v3305, %v3322
    %v3336 = vsub.f32 %v3309, %v3322
    %v3337 = vsub.f32 %v3313, %v3322
    %v3338 = vsub.f32 %v3317, %v3322
    %v3339 = vand.u32 2147483647, %v3323
    %v3340 = vand.u32 2147483647, %v3324
    %v3341 = vand.u32 2147483647, %v3325
    %v3342 = vand.u32 2147483647, %v3326
    %v3343 = vand.u32 2147483647, %v3327
    %v3344 = vand.u32 2147483647, %v3328
    %v3345 = vand.u32 2147483647, %v3329
    %v3346 = vand.u32 2147483647, %v3330
    %v3347 = vand.u32 2147483647, %v3331
    %v3348 = vand.u32 2147483647, %v3332
    %v3349 = vand.u32 2147483647, %v3333
    %v3350 = vand.u32 2147483647, %v3334
    %v3351 = vand.u32 2147483647, %v3335
    %v3352 = vand.u32 2147483647, %v3336
    %v3353 = vand.u32 2147483647, %v3337
    %v3354 = vand.u32 2147483647, %v3338
    %v3355 = vadd.f32 %v3239, %v3339
    %v3356 = vadd.f32 %v3240, %v3340
    %v3357 = vadd.f32 %v3241, %v3341
    %v3358 = vadd.f32 %v3242, %v3342
    %v3359 = vadd.f32 %v3243, %v3343
    %v3360 = vadd.f32 %v3244, %v3344
    %v3361 = vadd.f32 %v3245, %v3345
    %v3362 = vadd.f32 %v3246, %v3346
    %v3363 = vadd.f32 %v3247, %v3347
    %v3364 = vadd.f32 %v3248, %v3348
    %v3365 = vadd.f32 %v3249, %v3349
    %v3366 = vadd.f32 %v3250, %v3350
    %v3367 = vadd.f32 %v3251, %v3351
    %v3368 = vadd.f32 %v3252, %v3352
    %v3369 = vadd.f32 %v3253, %v3353
    %v3370 = vadd.f32 %v3254, %v3354
    %3371 = vset.pattern.permute.xlu0 26
    %3372 = vperm.xlu0 %3371, %v21
    %v3373 = vpop.permute.xlu0 %3372
    %3375 = vset.pattern.permute.xlu0 26
    %3376 = vperm.xlu0 %3375, %v22
    %v3377 = vpop.permute.xlu0 %3376
    %3379 = vset.pattern.permute.xlu0 26
    %3380 = vperm.xlu0 %3379, %v23
    %v3381 = vpop.permute.xlu0 %3380
    %3383 = vset.pattern.permute.xlu0 26
    %3384 = vperm.xlu0 %3383, %v24
    %v3385 = vpop.permute.xlu0 %3384
    %3387 = vset.pattern.permute.xlu0 26
    %3388 = vperm.xlu0 %3387, %v25
    %v3389 = vpop.permute.xlu0 %3388
    %3391 = vset.pattern.permute.xlu0 26
    %3392 = vperm.xlu0 %3391, %v26
    %v3393 = vpop.permute.xlu0 %3392
    %3395 = vset.pattern.permute.xlu0 26
    %3396 = vperm.xlu0 %3395, %v27
    %v3397 = vpop.permute.xlu0 %3396
    %3399 = vset.pattern.permute.xlu0 26
    %3400 = vperm.xlu0 %3399, %v28
    %v3401 = vpop.permute.xlu0 %3400
    %3403 = vset.pattern.permute.xlu0 26
    %3404 = vperm.xlu0 %3403, %v29
    %v3405 = vpop.permute.xlu0 %3404
    %3407 = vset.pattern.permute.xlu0 26
    %3408 = vperm.xlu0 %3407, %v30
    %v3409 = vpop.permute.xlu0 %3408
    %3411 = vset.pattern.permute.xlu0 26
    %3412 = vperm.xlu0 %3411, %v31
    %v3413 = vpop.permute.xlu0 %3412
    %3415 = vset.pattern.permute.xlu0 26
    %3416 = vperm.xlu0 %3415, %v32
    %v3417 = vpop.permute.xlu0 %3416
    %3419 = vset.pattern.permute.xlu0 26
    %3420 = vperm.xlu0 %3419, %v33
    %v3421 = vpop.permute.xlu0 %3420
    %3423 = vset.pattern.permute.xlu0 26
    %3424 = vperm.xlu0 %3423, %v34
    %v3425 = vpop.permute.xlu0 %3424
    %3427 = vset.pattern.permute.xlu0 26
    %3428 = vperm.xlu0 %3427, %v35
    %v3429 = vpop.permute.xlu0 %3428
    %3431 = vset.pattern.permute.xlu0 26
    %3432 = vperm.xlu0 %3431, %v36
    %v3433 = vpop.permute.xlu0 %3432
    %v3435 = vlaneseq
    %v3436 = vshrl.u32 %v3435, 7
    %v3437 = vsub.s32 2, %v3436
    %v3438 = vrot.slane %v20, %v3437
    %v3439 = vsub.f32 %v3373, %v3438
    %v3440 = vsub.f32 %v3377, %v3438
    %v3441 = vsub.f32 %v3381, %v3438
    %v3442 = vsub.f32 %v3385, %v3438
    %v3443 = vsub.f32 %v3389, %v3438
    %v3444 = vsub.f32 %v3393, %v3438
    %v3445 = vsub.f32 %v3397, %v3438
    %v3446 = vsub.f32 %v3401, %v3438
    %v3447 = vsub.f32 %v3405, %v3438
    %v3448 = vsub.f32 %v3409, %v3438
    %v3449 = vsub.f32 %v3413, %v3438
    %v3450 = vsub.f32 %v3417, %v3438
    %v3451 = vsub.f32 %v3421, %v3438
    %v3452 = vsub.f32 %v3425, %v3438
    %v3453 = vsub.f32 %v3429, %v3438
    %v3454 = vsub.f32 %v3433, %v3438
    %v3455 = vand.u32 2147483647, %v3439
    %v3456 = vand.u32 2147483647, %v3440
    %v3457 = vand.u32 2147483647, %v3441
    %v3458 = vand.u32 2147483647, %v3442
    %v3459 = vand.u32 2147483647, %v3443
    %v3460 = vand.u32 2147483647, %v3444
    %v3461 = vand.u32 2147483647, %v3445
    %v3462 = vand.u32 2147483647, %v3446
    %v3463 = vand.u32 2147483647, %v3447
    %v3464 = vand.u32 2147483647, %v3448
    %v3465 = vand.u32 2147483647, %v3449
    %v3466 = vand.u32 2147483647, %v3450
    %v3467 = vand.u32 2147483647, %v3451
    %v3468 = vand.u32 2147483647, %v3452
    %v3469 = vand.u32 2147483647, %v3453
    %v3470 = vand.u32 2147483647, %v3454
    %v3471 = vadd.f32 %v3355, %v3455
    %v3472 = vadd.f32 %v3356, %v3456
    %v3473 = vadd.f32 %v3357, %v3457
    %v3474 = vadd.f32 %v3358, %v3458
    %v3475 = vadd.f32 %v3359, %v3459
    %v3476 = vadd.f32 %v3360, %v3460
    %v3477 = vadd.f32 %v3361, %v3461
    %v3478 = vadd.f32 %v3362, %v3462
    %v3479 = vadd.f32 %v3363, %v3463
    %v3480 = vadd.f32 %v3364, %v3464
    %v3481 = vadd.f32 %v3365, %v3465
    %v3482 = vadd.f32 %v3366, %v3466
    %v3483 = vadd.f32 %v3367, %v3467
    %v3484 = vadd.f32 %v3368, %v3468
    %v3485 = vadd.f32 %v3369, %v3469
    %v3486 = vadd.f32 %v3370, %v3470
    %3487 = vset.pattern.permute.xlu0 27
    %3488 = vperm.xlu0 %3487, %v21
    %v3489 = vpop.permute.xlu0 %3488
    %3491 = vset.pattern.permute.xlu0 27
    %3492 = vperm.xlu0 %3491, %v22
    %v3493 = vpop.permute.xlu0 %3492
    %3495 = vset.pattern.permute.xlu0 27
    %3496 = vperm.xlu0 %3495, %v23
    %v3497 = vpop.permute.xlu0 %3496
    %3499 = vset.pattern.permute.xlu0 27
    %3500 = vperm.xlu0 %3499, %v24
    %v3501 = vpop.permute.xlu0 %3500
    %3503 = vset.pattern.permute.xlu0 27
    %3504 = vperm.xlu0 %3503, %v25
    %v3505 = vpop.permute.xlu0 %3504
    %3507 = vset.pattern.permute.xlu0 27
    %3508 = vperm.xlu0 %3507, %v26
    %v3509 = vpop.permute.xlu0 %3508
    %3511 = vset.pattern.permute.xlu0 27
    %3512 = vperm.xlu0 %3511, %v27
    %v3513 = vpop.permute.xlu0 %3512
    %3515 = vset.pattern.permute.xlu0 27
    %3516 = vperm.xlu0 %3515, %v28
    %v3517 = vpop.permute.xlu0 %3516
    %3519 = vset.pattern.permute.xlu0 27
    %3520 = vperm.xlu0 %3519, %v29
    %v3521 = vpop.permute.xlu0 %3520
    %3523 = vset.pattern.permute.xlu0 27
    %3524 = vperm.xlu0 %3523, %v30
    %v3525 = vpop.permute.xlu0 %3524
    %3527 = vset.pattern.permute.xlu0 27
    %3528 = vperm.xlu0 %3527, %v31
    %v3529 = vpop.permute.xlu0 %3528
    %3531 = vset.pattern.permute.xlu0 27
    %3532 = vperm.xlu0 %3531, %v32
    %v3533 = vpop.permute.xlu0 %3532
    %3535 = vset.pattern.permute.xlu0 27
    %3536 = vperm.xlu0 %3535, %v33
    %v3537 = vpop.permute.xlu0 %3536
    %3539 = vset.pattern.permute.xlu0 27
    %3540 = vperm.xlu0 %3539, %v34
    %v3541 = vpop.permute.xlu0 %3540
    %3543 = vset.pattern.permute.xlu0 27
    %3544 = vperm.xlu0 %3543, %v35
    %v3545 = vpop.permute.xlu0 %3544
    %3547 = vset.pattern.permute.xlu0 27
    %3548 = vperm.xlu0 %3547, %v36
    %v3549 = vpop.permute.xlu0 %3548
    %v3551 = vlaneseq
    %v3552 = vshrl.u32 %v3551, 7
    %v3553 = vsub.s32 3, %v3552
    %v3554 = vrot.slane %v20, %v3553
    %v3555 = vsub.f32 %v3489, %v3554
    %v3556 = vsub.f32 %v3493, %v3554
    %v3557 = vsub.f32 %v3497, %v3554
    %v3558 = vsub.f32 %v3501, %v3554
    %v3559 = vsub.f32 %v3505, %v3554
    %v3560 = vsub.f32 %v3509, %v3554
    %v3561 = vsub.f32 %v3513, %v3554
    %v3562 = vsub.f32 %v3517, %v3554
    %v3563 = vsub.f32 %v3521, %v3554
    %v3564 = vsub.f32 %v3525, %v3554
    %v3565 = vsub.f32 %v3529, %v3554
    %v3566 = vsub.f32 %v3533, %v3554
    %v3567 = vsub.f32 %v3537, %v3554
    %v3568 = vsub.f32 %v3541, %v3554
    %v3569 = vsub.f32 %v3545, %v3554
    %v3570 = vsub.f32 %v3549, %v3554
    %v3571 = vand.u32 2147483647, %v3555
    %v3572 = vand.u32 2147483647, %v3556
    %v3573 = vand.u32 2147483647, %v3557
    %v3574 = vand.u32 2147483647, %v3558
    %v3575 = vand.u32 2147483647, %v3559
    %v3576 = vand.u32 2147483647, %v3560
    %v3577 = vand.u32 2147483647, %v3561
    %v3578 = vand.u32 2147483647, %v3562
    %v3579 = vand.u32 2147483647, %v3563
    %v3580 = vand.u32 2147483647, %v3564
    %v3581 = vand.u32 2147483647, %v3565
    %v3582 = vand.u32 2147483647, %v3566
    %v3583 = vand.u32 2147483647, %v3567
    %v3584 = vand.u32 2147483647, %v3568
    %v3585 = vand.u32 2147483647, %v3569
    %v3586 = vand.u32 2147483647, %v3570
    %v3587 = vadd.f32 %v3471, %v3571
    %v3588 = vadd.f32 %v3472, %v3572
    %v3589 = vadd.f32 %v3473, %v3573
    %v3590 = vadd.f32 %v3474, %v3574
    %v3591 = vadd.f32 %v3475, %v3575
    %v3592 = vadd.f32 %v3476, %v3576
    %v3593 = vadd.f32 %v3477, %v3577
    %v3594 = vadd.f32 %v3478, %v3578
    %v3595 = vadd.f32 %v3479, %v3579
    %v3596 = vadd.f32 %v3480, %v3580
    %v3597 = vadd.f32 %v3481, %v3581
    %v3598 = vadd.f32 %v3482, %v3582
    %v3599 = vadd.f32 %v3483, %v3583
    %v3600 = vadd.f32 %v3484, %v3584
    %v3601 = vadd.f32 %v3485, %v3585
    %v3602 = vadd.f32 %v3486, %v3586
    %v3603 = vsub.f32 0.0, %v3587
    %v3604 = vsub.f32 0.0, %v3588
    %v3605 = vsub.f32 0.0, %v3589
    %v3606 = vsub.f32 0.0, %v3590
    %v3607 = vsub.f32 0.0, %v3591
    %v3608 = vsub.f32 0.0, %v3592
    %v3609 = vsub.f32 0.0, %v3593
    %v3610 = vsub.f32 0.0, %v3594
    %v3611 = vsub.f32 0.0, %v3595
    %v3612 = vsub.f32 0.0, %v3596
    %v3613 = vsub.f32 0.0, %v3597
    %v3614 = vsub.f32 0.0, %v3598
    %v3615 = vsub.f32 0.0, %v3599
    %v3616 = vsub.f32 0.0, %v3600
    %v3617 = vsub.f32 0.0, %v3601
    %v3618 = vsub.f32 0.0, %v3602
    %v3619 = vmul.f32 %v3603, 1.442695
    %v3620 = vpow.pop %v3619
    %v3621 = vmul.f32 %v3604, 1.442695
    %v3622 = vpow.pop %v3621
    %v3623 = vmul.f32 %v3605, 1.442695
    %v3624 = vpow.pop %v3623
    %v3625 = vmul.f32 %v3606, 1.442695
    %v3626 = vpow.pop %v3625
    %v3627 = vmul.f32 %v3607, 1.442695
    %v3628 = vpow.pop %v3627
    %v3629 = vmul.f32 %v3608, 1.442695
    %v3630 = vpow.pop %v3629
    %v3631 = vmul.f32 %v3609, 1.442695
    %v3632 = vpow.pop %v3631
    %v3633 = vmul.f32 %v3610, 1.442695
    %v3634 = vpow.pop %v3633
    %v3635 = vmul.f32 %v3611, 1.442695
    %v3636 = vpow.pop %v3635
    %v3637 = vmul.f32 %v3612, 1.442695
    %v3638 = vpow.pop %v3637
    %v3639 = vmul.f32 %v3613, 1.442695
    %v3640 = vpow.pop %v3639
    %v3641 = vmul.f32 %v3614, 1.442695
    %v3642 = vpow.pop %v3641
    %v3643 = vmul.f32 %v3615, 1.442695
    %v3644 = vpow.pop %v3643
    %v3645 = vmul.f32 %v3616, 1.442695
    %v3646 = vpow.pop %v3645
    %v3647 = vmul.f32 %v3617, 1.442695
    %v3648 = vpow.pop %v3647
    %v3649 = vmul.f32 %v3618, 1.442695
    %v3650 = vpow.pop %v3649
    %v3651 = vadd.f32 %v3620, %v3622
    %v3652 = vadd.f32 %v3651, %v3624
    %v3653 = vadd.f32 %v3652, %v3626
    %v3654 = vadd.f32 %v3653, %v3628
    %v3655 = vadd.f32 %v3654, %v3630
    %v3656 = vadd.f32 %v3655, %v3632
    %v3657 = vadd.f32 %v3656, %v3634
    %v3658 = vadd.f32 %v3657, %v3636
    %v3659 = vadd.f32 %v3658, %v3638
    %v3660 = vadd.f32 %v3659, %v3640
    %v3661 = vadd.f32 %v3660, %v3642
    %v3662 = vadd.f32 %v3661, %v3644
    %v3663 = vadd.f32 %v3662, %v3646
    %v3664 = vadd.f32 %v3663, %v3648
    %v3665 = vadd.f32 %v3664, %v3650
    %v3666 = vrot.slane %v3665, 4
    %v3667 = vadd.f32 %v3665, %v3666
    %v3668 = vrot.slane %v3667, 2
    %v3669 = vadd.f32 %v3667, %v3668
    %v3670 = vrot.slane %v3669, 1
    %v3671 = vadd.f32 %v3669, %v3670
    %3672 = vset.pattern.permute.xlu0 28
    %3673 = vperm.xlu0 %3672, %v21
    %v3674 = vpop.permute.xlu0 %3673
    %3676 = vset.pattern.permute.xlu0 28
    %3677 = vperm.xlu0 %3676, %v22
    %v3678 = vpop.permute.xlu0 %3677
    %3680 = vset.pattern.permute.xlu0 28
    %3681 = vperm.xlu0 %3680, %v23
    %v3682 = vpop.permute.xlu0 %3681
    %3684 = vset.pattern.permute.xlu0 28
    %3685 = vperm.xlu0 %3684, %v24
    %v3686 = vpop.permute.xlu0 %3685
    %3688 = vset.pattern.permute.xlu0 28
    %3689 = vperm.xlu0 %3688, %v25
    %v3690 = vpop.permute.xlu0 %3689
    %3692 = vset.pattern.permute.xlu0 28
    %3693 = vperm.xlu0 %3692, %v26
    %v3694 = vpop.permute.xlu0 %3693
    %3696 = vset.pattern.permute.xlu0 28
    %3697 = vperm.xlu0 %3696, %v27
    %v3698 = vpop.permute.xlu0 %3697
    %3700 = vset.pattern.permute.xlu0 28
    %3701 = vperm.xlu0 %3700, %v28
    %v3702 = vpop.permute.xlu0 %3701
    %3704 = vset.pattern.permute.xlu0 28
    %3705 = vperm.xlu0 %3704, %v29
    %v3706 = vpop.permute.xlu0 %3705
    %3708 = vset.pattern.permute.xlu0 28
    %3709 = vperm.xlu0 %3708, %v30
    %v3710 = vpop.permute.xlu0 %3709
    %3712 = vset.pattern.permute.xlu0 28
    %3713 = vperm.xlu0 %3712, %v31
    %v3714 = vpop.permute.xlu0 %3713
    %3716 = vset.pattern.permute.xlu0 28
    %3717 = vperm.xlu0 %3716, %v32
    %v3718 = vpop.permute.xlu0 %3717
    %3720 = vset.pattern.permute.xlu0 28
    %3721 = vperm.xlu0 %3720, %v33
    %v3722 = vpop.permute.xlu0 %3721
    %3724 = vset.pattern.permute.xlu0 28
    %3725 = vperm.xlu0 %3724, %v34
    %v3726 = vpop.permute.xlu0 %3725
    %3728 = vset.pattern.permute.xlu0 28
    %3729 = vperm.xlu0 %3728, %v35
    %v3730 = vpop.permute.xlu0 %3729
    %3732 = vset.pattern.permute.xlu0 28
    %3733 = vperm.xlu0 %3732, %v36
    %v3734 = vpop.permute.xlu0 %3733
    %v3736 = vlaneseq
    %v3737 = vshrl.u32 %v3736, 7
    %v3738 = vsub.s32 4, %v3737
    %v3739 = vrot.slane %v20, %v3738
    %v3740 = vsub.f32 %v3674, %v3739
    %v3741 = vsub.f32 %v3678, %v3739
    %v3742 = vsub.f32 %v3682, %v3739
    %v3743 = vsub.f32 %v3686, %v3739
    %v3744 = vsub.f32 %v3690, %v3739
    %v3745 = vsub.f32 %v3694, %v3739
    %v3746 = vsub.f32 %v3698, %v3739
    %v3747 = vsub.f32 %v3702, %v3739
    %v3748 = vsub.f32 %v3706, %v3739
    %v3749 = vsub.f32 %v3710, %v3739
    %v3750 = vsub.f32 %v3714, %v3739
    %v3751 = vsub.f32 %v3718, %v3739
    %v3752 = vsub.f32 %v3722, %v3739
    %v3753 = vsub.f32 %v3726, %v3739
    %v3754 = vsub.f32 %v3730, %v3739
    %v3755 = vsub.f32 %v3734, %v3739
    %v3756 = vand.u32 2147483647, %v3740
    %v3757 = vand.u32 2147483647, %v3741
    %v3758 = vand.u32 2147483647, %v3742
    %v3759 = vand.u32 2147483647, %v3743
    %v3760 = vand.u32 2147483647, %v3744
    %v3761 = vand.u32 2147483647, %v3745
    %v3762 = vand.u32 2147483647, %v3746
    %v3763 = vand.u32 2147483647, %v3747
    %v3764 = vand.u32 2147483647, %v3748
    %v3765 = vand.u32 2147483647, %v3749
    %v3766 = vand.u32 2147483647, %v3750
    %v3767 = vand.u32 2147483647, %v3751
    %v3768 = vand.u32 2147483647, %v3752
    %v3769 = vand.u32 2147483647, %v3753
    %v3770 = vand.u32 2147483647, %v3754
    %v3771 = vand.u32 2147483647, %v3755
    %3772 = vset.pattern.permute.xlu0 29
    %3773 = vperm.xlu0 %3772, %v21
    %v3774 = vpop.permute.xlu0 %3773
    %3776 = vset.pattern.permute.xlu0 29
    %3777 = vperm.xlu0 %3776, %v22
    %v3778 = vpop.permute.xlu0 %3777
    %3780 = vset.pattern.permute.xlu0 29
    %3781 = vperm.xlu0 %3780, %v23
    %v3782 = vpop.permute.xlu0 %3781
    %3784 = vset.pattern.permute.xlu0 29
    %3785 = vperm.xlu0 %3784, %v24
    %v3786 = vpop.permute.xlu0 %3785
    %3788 = vset.pattern.permute.xlu0 29
    %3789 = vperm.xlu0 %3788, %v25
    %v3790 = vpop.permute.xlu0 %3789
    %3792 = vset.pattern.permute.xlu0 29
    %3793 = vperm.xlu0 %3792, %v26
    %v3794 = vpop.permute.xlu0 %3793
    %3796 = vset.pattern.permute.xlu0 29
    %3797 = vperm.xlu0 %3796, %v27
    %v3798 = vpop.permute.xlu0 %3797
    %3800 = vset.pattern.permute.xlu0 29
    %3801 = vperm.xlu0 %3800, %v28
    %v3802 = vpop.permute.xlu0 %3801
    %3804 = vset.pattern.permute.xlu0 29
    %3805 = vperm.xlu0 %3804, %v29
    %v3806 = vpop.permute.xlu0 %3805
    %3808 = vset.pattern.permute.xlu0 29
    %3809 = vperm.xlu0 %3808, %v30
    %v3810 = vpop.permute.xlu0 %3809
    %3812 = vset.pattern.permute.xlu0 29
    %3813 = vperm.xlu0 %3812, %v31
    %v3814 = vpop.permute.xlu0 %3813
    %3816 = vset.pattern.permute.xlu0 29
    %3817 = vperm.xlu0 %3816, %v32
    %v3818 = vpop.permute.xlu0 %3817
    %3820 = vset.pattern.permute.xlu0 29
    %3821 = vperm.xlu0 %3820, %v33
    %v3822 = vpop.permute.xlu0 %3821
    %3824 = vset.pattern.permute.xlu0 29
    %3825 = vperm.xlu0 %3824, %v34
    %v3826 = vpop.permute.xlu0 %3825
    %3828 = vset.pattern.permute.xlu0 29
    %3829 = vperm.xlu0 %3828, %v35
    %v3830 = vpop.permute.xlu0 %3829
    %3832 = vset.pattern.permute.xlu0 29
    %3833 = vperm.xlu0 %3832, %v36
    %v3834 = vpop.permute.xlu0 %3833
    %v3836 = vlaneseq
    %v3837 = vshrl.u32 %v3836, 7
    %v3838 = vsub.s32 5, %v3837
    %v3839 = vrot.slane %v20, %v3838
    %v3840 = vsub.f32 %v3774, %v3839
    %v3841 = vsub.f32 %v3778, %v3839
    %v3842 = vsub.f32 %v3782, %v3839
    %v3843 = vsub.f32 %v3786, %v3839
    %v3844 = vsub.f32 %v3790, %v3839
    %v3845 = vsub.f32 %v3794, %v3839
    %v3846 = vsub.f32 %v3798, %v3839
    %v3847 = vsub.f32 %v3802, %v3839
    %v3848 = vsub.f32 %v3806, %v3839
    %v3849 = vsub.f32 %v3810, %v3839
    %v3850 = vsub.f32 %v3814, %v3839
    %v3851 = vsub.f32 %v3818, %v3839
    %v3852 = vsub.f32 %v3822, %v3839
    %v3853 = vsub.f32 %v3826, %v3839
    %v3854 = vsub.f32 %v3830, %v3839
    %v3855 = vsub.f32 %v3834, %v3839
    %v3856 = vand.u32 2147483647, %v3840
    %v3857 = vand.u32 2147483647, %v3841
    %v3858 = vand.u32 2147483647, %v3842
    %v3859 = vand.u32 2147483647, %v3843
    %v3860 = vand.u32 2147483647, %v3844
    %v3861 = vand.u32 2147483647, %v3845
    %v3862 = vand.u32 2147483647, %v3846
    %v3863 = vand.u32 2147483647, %v3847
    %v3864 = vand.u32 2147483647, %v3848
    %v3865 = vand.u32 2147483647, %v3849
    %v3866 = vand.u32 2147483647, %v3850
    %v3867 = vand.u32 2147483647, %v3851
    %v3868 = vand.u32 2147483647, %v3852
    %v3869 = vand.u32 2147483647, %v3853
    %v3870 = vand.u32 2147483647, %v3854
    %v3871 = vand.u32 2147483647, %v3855
    %v3872 = vadd.f32 %v3756, %v3856
    %v3873 = vadd.f32 %v3757, %v3857
    %v3874 = vadd.f32 %v3758, %v3858
    %v3875 = vadd.f32 %v3759, %v3859
    %v3876 = vadd.f32 %v3760, %v3860
    %v3877 = vadd.f32 %v3761, %v3861
    %v3878 = vadd.f32 %v3762, %v3862
    %v3879 = vadd.f32 %v3763, %v3863
    %v3880 = vadd.f32 %v3764, %v3864
    %v3881 = vadd.f32 %v3765, %v3865
    %v3882 = vadd.f32 %v3766, %v3866
    %v3883 = vadd.f32 %v3767, %v3867
    %v3884 = vadd.f32 %v3768, %v3868
    %v3885 = vadd.f32 %v3769, %v3869
    %v3886 = vadd.f32 %v3770, %v3870
    %v3887 = vadd.f32 %v3771, %v3871
    %3888 = vset.pattern.permute.xlu0 30
    %3889 = vperm.xlu0 %3888, %v21
    %v3890 = vpop.permute.xlu0 %3889
    %3892 = vset.pattern.permute.xlu0 30
    %3893 = vperm.xlu0 %3892, %v22
    %v3894 = vpop.permute.xlu0 %3893
    %3896 = vset.pattern.permute.xlu0 30
    %3897 = vperm.xlu0 %3896, %v23
    %v3898 = vpop.permute.xlu0 %3897
    %3900 = vset.pattern.permute.xlu0 30
    %3901 = vperm.xlu0 %3900, %v24
    %v3902 = vpop.permute.xlu0 %3901
    %3904 = vset.pattern.permute.xlu0 30
    %3905 = vperm.xlu0 %3904, %v25
    %v3906 = vpop.permute.xlu0 %3905
    %3908 = vset.pattern.permute.xlu0 30
    %3909 = vperm.xlu0 %3908, %v26
    %v3910 = vpop.permute.xlu0 %3909
    %3912 = vset.pattern.permute.xlu0 30
    %3913 = vperm.xlu0 %3912, %v27
    %v3914 = vpop.permute.xlu0 %3913
    %3916 = vset.pattern.permute.xlu0 30
    %3917 = vperm.xlu0 %3916, %v28
    %v3918 = vpop.permute.xlu0 %3917
    %3920 = vset.pattern.permute.xlu0 30
    %3921 = vperm.xlu0 %3920, %v29
    %v3922 = vpop.permute.xlu0 %3921
    %3924 = vset.pattern.permute.xlu0 30
    %3925 = vperm.xlu0 %3924, %v30
    %v3926 = vpop.permute.xlu0 %3925
    %3928 = vset.pattern.permute.xlu0 30
    %3929 = vperm.xlu0 %3928, %v31
    %v3930 = vpop.permute.xlu0 %3929
    %3932 = vset.pattern.permute.xlu0 30
    %3933 = vperm.xlu0 %3932, %v32
    %v3934 = vpop.permute.xlu0 %3933
    %3936 = vset.pattern.permute.xlu0 30
    %3937 = vperm.xlu0 %3936, %v33
    %v3938 = vpop.permute.xlu0 %3937
    %3940 = vset.pattern.permute.xlu0 30
    %3941 = vperm.xlu0 %3940, %v34
    %v3942 = vpop.permute.xlu0 %3941
    %3944 = vset.pattern.permute.xlu0 30
    %3945 = vperm.xlu0 %3944, %v35
    %v3946 = vpop.permute.xlu0 %3945
    %3948 = vset.pattern.permute.xlu0 30
    %3949 = vperm.xlu0 %3948, %v36
    %v3950 = vpop.permute.xlu0 %3949
    %v3952 = vlaneseq
    %v3953 = vshrl.u32 %v3952, 7
    %v3954 = vsub.s32 6, %v3953
    %v3955 = vrot.slane %v20, %v3954
    %v3956 = vsub.f32 %v3890, %v3955
    %v3957 = vsub.f32 %v3894, %v3955
    %v3958 = vsub.f32 %v3898, %v3955
    %v3959 = vsub.f32 %v3902, %v3955
    %v3960 = vsub.f32 %v3906, %v3955
    %v3961 = vsub.f32 %v3910, %v3955
    %v3962 = vsub.f32 %v3914, %v3955
    %v3963 = vsub.f32 %v3918, %v3955
    %v3964 = vsub.f32 %v3922, %v3955
    %v3965 = vsub.f32 %v3926, %v3955
    %v3966 = vsub.f32 %v3930, %v3955
    %v3967 = vsub.f32 %v3934, %v3955
    %v3968 = vsub.f32 %v3938, %v3955
    %v3969 = vsub.f32 %v3942, %v3955
    %v3970 = vsub.f32 %v3946, %v3955
    %v3971 = vsub.f32 %v3950, %v3955
    %v3972 = vand.u32 2147483647, %v3956
    %v3973 = vand.u32 2147483647, %v3957
    %v3974 = vand.u32 2147483647, %v3958
    %v3975 = vand.u32 2147483647, %v3959
    %v3976 = vand.u32 2147483647, %v3960
    %v3977 = vand.u32 2147483647, %v3961
    %v3978 = vand.u32 2147483647, %v3962
    %v3979 = vand.u32 2147483647, %v3963
    %v3980 = vand.u32 2147483647, %v3964
    %v3981 = vand.u32 2147483647, %v3965
    %v3982 = vand.u32 2147483647, %v3966
    %v3983 = vand.u32 2147483647, %v3967
    %v3984 = vand.u32 2147483647, %v3968
    %v3985 = vand.u32 2147483647, %v3969
    %v3986 = vand.u32 2147483647, %v3970
    %v3987 = vand.u32 2147483647, %v3971
    %v3988 = vadd.f32 %v3872, %v3972
    %v3989 = vadd.f32 %v3873, %v3973
    %v3990 = vadd.f32 %v3874, %v3974
    %v3991 = vadd.f32 %v3875, %v3975
    %v3992 = vadd.f32 %v3876, %v3976
    %v3993 = vadd.f32 %v3877, %v3977
    %v3994 = vadd.f32 %v3878, %v3978
    %v3995 = vadd.f32 %v3879, %v3979
    %v3996 = vadd.f32 %v3880, %v3980
    %v3997 = vadd.f32 %v3881, %v3981
    %v3998 = vadd.f32 %v3882, %v3982
    %v3999 = vadd.f32 %v3883, %v3983
    %v4000 = vadd.f32 %v3884, %v3984
    %v4001 = vadd.f32 %v3885, %v3985
    %v4002 = vadd.f32 %v3886, %v3986
    %v4003 = vadd.f32 %v3887, %v3987
    %4004 = vset.pattern.permute.xlu0 31
    %4005 = vperm.xlu0 %4004, %v21
    %v4006 = vpop.permute.xlu0 %4005
    %4008 = vset.pattern.permute.xlu0 31
    %4009 = vperm.xlu0 %4008, %v22
    %v4010 = vpop.permute.xlu0 %4009
    %4012 = vset.pattern.permute.xlu0 31
    %4013 = vperm.xlu0 %4012, %v23
    %v4014 = vpop.permute.xlu0 %4013
    %4016 = vset.pattern.permute.xlu0 31
    %4017 = vperm.xlu0 %4016, %v24
    %v4018 = vpop.permute.xlu0 %4017
    %4020 = vset.pattern.permute.xlu0 31
    %4021 = vperm.xlu0 %4020, %v25
    %v4022 = vpop.permute.xlu0 %4021
    %4024 = vset.pattern.permute.xlu0 31
    %4025 = vperm.xlu0 %4024, %v26
    %v4026 = vpop.permute.xlu0 %4025
    %4028 = vset.pattern.permute.xlu0 31
    %4029 = vperm.xlu0 %4028, %v27
    %v4030 = vpop.permute.xlu0 %4029
    %4032 = vset.pattern.permute.xlu0 31
    %4033 = vperm.xlu0 %4032, %v28
    %v4034 = vpop.permute.xlu0 %4033
    %4036 = vset.pattern.permute.xlu0 31
    %4037 = vperm.xlu0 %4036, %v29
    %v4038 = vpop.permute.xlu0 %4037
    %4040 = vset.pattern.permute.xlu0 31
    %4041 = vperm.xlu0 %4040, %v30
    %v4042 = vpop.permute.xlu0 %4041
    %4044 = vset.pattern.permute.xlu0 31
    %4045 = vperm.xlu0 %4044, %v31
    %v4046 = vpop.permute.xlu0 %4045
    %4048 = vset.pattern.permute.xlu0 31
    %4049 = vperm.xlu0 %4048, %v32
    %v4050 = vpop.permute.xlu0 %4049
    %4052 = vset.pattern.permute.xlu0 31
    %4053 = vperm.xlu0 %4052, %v33
    %v4054 = vpop.permute.xlu0 %4053
    %4056 = vset.pattern.permute.xlu0 31
    %4057 = vperm.xlu0 %4056, %v34
    %v4058 = vpop.permute.xlu0 %4057
    %4060 = vset.pattern.permute.xlu0 31
    %4061 = vperm.xlu0 %4060, %v35
    %v4062 = vpop.permute.xlu0 %4061
    %4064 = vset.pattern.permute.xlu0 31
    %4065 = vperm.xlu0 %4064, %v36
    %v4066 = vpop.permute.xlu0 %4065
    %v4068 = vlaneseq
    %v4069 = vshrl.u32 %v4068, 7
    %v4070 = vsub.s32 7, %v4069
    %v4071 = vrot.slane %v20, %v4070
    %v4072 = vsub.f32 %v4006, %v4071
    %v4073 = vsub.f32 %v4010, %v4071
    %v4074 = vsub.f32 %v4014, %v4071
    %v4075 = vsub.f32 %v4018, %v4071
    %v4076 = vsub.f32 %v4022, %v4071
    %v4077 = vsub.f32 %v4026, %v4071
    %v4078 = vsub.f32 %v4030, %v4071
    %v4079 = vsub.f32 %v4034, %v4071
    %v4080 = vsub.f32 %v4038, %v4071
    %v4081 = vsub.f32 %v4042, %v4071
    %v4082 = vsub.f32 %v4046, %v4071
    %v4083 = vsub.f32 %v4050, %v4071
    %v4084 = vsub.f32 %v4054, %v4071
    %v4085 = vsub.f32 %v4058, %v4071
    %v4086 = vsub.f32 %v4062, %v4071
    %v4087 = vsub.f32 %v4066, %v4071
    %v4088 = vand.u32 2147483647, %v4072
    %v4089 = vand.u32 2147483647, %v4073
    %v4090 = vand.u32 2147483647, %v4074
    %v4091 = vand.u32 2147483647, %v4075
    %v4092 = vand.u32 2147483647, %v4076
    %v4093 = vand.u32 2147483647, %v4077
    %v4094 = vand.u32 2147483647, %v4078
    %v4095 = vand.u32 2147483647, %v4079
    %v4096 = vand.u32 2147483647, %v4080
    %v4097 = vand.u32 2147483647, %v4081
    %v4098 = vand.u32 2147483647, %v4082
    %v4099 = vand.u32 2147483647, %v4083
    %v4100 = vand.u32 2147483647, %v4084
    %v4101 = vand.u32 2147483647, %v4085
    %v4102 = vand.u32 2147483647, %v4086
    %v4103 = vand.u32 2147483647, %v4087
    %v4104 = vadd.f32 %v3988, %v4088
    %v4105 = vadd.f32 %v3989, %v4089
    %v4106 = vadd.f32 %v3990, %v4090
    %v4107 = vadd.f32 %v3991, %v4091
    %v4108 = vadd.f32 %v3992, %v4092
    %v4109 = vadd.f32 %v3993, %v4093
    %v4110 = vadd.f32 %v3994, %v4094
    %v4111 = vadd.f32 %v3995, %v4095
    %v4112 = vadd.f32 %v3996, %v4096
    %v4113 = vadd.f32 %v3997, %v4097
    %v4114 = vadd.f32 %v3998, %v4098
    %v4115 = vadd.f32 %v3999, %v4099
    %v4116 = vadd.f32 %v4000, %v4100
    %v4117 = vadd.f32 %v4001, %v4101
    %v4118 = vadd.f32 %v4002, %v4102
    %v4119 = vadd.f32 %v4003, %v4103
    %v4120 = vsub.f32 0.0, %v4104
    %v4121 = vsub.f32 0.0, %v4105
    %v4122 = vsub.f32 0.0, %v4106
    %v4123 = vsub.f32 0.0, %v4107
    %v4124 = vsub.f32 0.0, %v4108
    %v4125 = vsub.f32 0.0, %v4109
    %v4126 = vsub.f32 0.0, %v4110
    %v4127 = vsub.f32 0.0, %v4111
    %v4128 = vsub.f32 0.0, %v4112
    %v4129 = vsub.f32 0.0, %v4113
    %v4130 = vsub.f32 0.0, %v4114
    %v4131 = vsub.f32 0.0, %v4115
    %v4132 = vsub.f32 0.0, %v4116
    %v4133 = vsub.f32 0.0, %v4117
    %v4134 = vsub.f32 0.0, %v4118
    %v4135 = vsub.f32 0.0, %v4119
    %v4136 = vmul.f32 %v4120, 1.442695
    %v4137 = vpow.pop %v4136
    %v4138 = vmul.f32 %v4121, 1.442695
    %v4139 = vpow.pop %v4138
    %v4140 = vmul.f32 %v4122, 1.442695
    %v4141 = vpow.pop %v4140
    %v4142 = vmul.f32 %v4123, 1.442695
    %v4143 = vpow.pop %v4142
    %v4144 = vmul.f32 %v4124, 1.442695
    %v4145 = vpow.pop %v4144
    %v4146 = vmul.f32 %v4125, 1.442695
    %v4147 = vpow.pop %v4146
    %v4148 = vmul.f32 %v4126, 1.442695
    %v4149 = vpow.pop %v4148
    %v4150 = vmul.f32 %v4127, 1.442695
    %v4151 = vpow.pop %v4150
    %v4152 = vmul.f32 %v4128, 1.442695
    %v4153 = vpow.pop %v4152
    %v4154 = vmul.f32 %v4129, 1.442695
    %v4155 = vpow.pop %v4154
    %v4156 = vmul.f32 %v4130, 1.442695
    %v4157 = vpow.pop %v4156
    %v4158 = vmul.f32 %v4131, 1.442695
    %v4159 = vpow.pop %v4158
    %v4160 = vmul.f32 %v4132, 1.442695
    %v4161 = vpow.pop %v4160
    %v4162 = vmul.f32 %v4133, 1.442695
    %v4163 = vpow.pop %v4162
    %v4164 = vmul.f32 %v4134, 1.442695
    %v4165 = vpow.pop %v4164
    %v4166 = vmul.f32 %v4135, 1.442695
    %v4167 = vpow.pop %v4166
    %v4168 = vadd.f32 %v4137, %v4139
    %v4169 = vadd.f32 %v4168, %v4141
    %v4170 = vadd.f32 %v4169, %v4143
    %v4171 = vadd.f32 %v4170, %v4145
    %v4172 = vadd.f32 %v4171, %v4147
    %v4173 = vadd.f32 %v4172, %v4149
    %v4174 = vadd.f32 %v4173, %v4151
    %v4175 = vadd.f32 %v4174, %v4153
    %v4176 = vadd.f32 %v4175, %v4155
    %v4177 = vadd.f32 %v4176, %v4157
    %v4178 = vadd.f32 %v4177, %v4159
    %v4179 = vadd.f32 %v4178, %v4161
    %v4180 = vadd.f32 %v4179, %v4163
    %v4181 = vadd.f32 %v4180, %v4165
    %v4182 = vadd.f32 %v4181, %v4167
    %v4183 = vrot.slane %v4182, 4
    %v4184 = vadd.f32 %v4182, %v4183
    %v4185 = vrot.slane %v4184, 2
    %v4186 = vadd.f32 %v4184, %v4185
    %v4187 = vrot.slane %v4186, 1
    %v4188 = vadd.f32 %v4186, %v4187
    %v4189 = vld [vmem:[#allocation2] sm:$0xff]
    %vm4190 = vcmask 1040384
    %v4191 = vsel %vm4190, %v569, %v1086
    %vm4192 = vcmask 1041408
    %v4193 = vsel %vm4192, %v4191, %v1603
    %vm4194 = vcmask 1042432
    %v4195 = vsel %vm4194, %v4193, %v2120
    %vm4196 = vcmask 1043456
    %v4197 = vsel %vm4196, %v4195, %v2637
    %vm4198 = vcmask 1044480
    %v4199 = vsel %vm4198, %v4197, %v3154
    %vm4200 = vcmask 1045504
    %v4201 = vsel %vm4200, %v4199, %v3671
    %vm4202 = vcmask 1046528
    %v4203 = vsel %vm4202, %v4201, %v4188
    %v4204 = vadd.f32 %v4189, %v4203
    %4205 = vst [vmem:[#allocation2] sm:$0xff] %v4204
    // Predicated region
    $region14: #{tpu_custom_call.1} parent=1 // pred_check
      _
    $region15: #{tpu_custom_call.1} parent=1 // pred_check_branch
      %4207 = sbr.rel (0) target = $region17
    $region16: #{tpu_custom_call.1} parent=1 // pred_region
      %s4209 = ssub.s32 128, 128
      %4210 = vsyncadd [#allocation3], %s4209
      %s4212 = sshll.u32 [#allocation2], 4
      %s4213 = int_to_ptr.vmem [resolvable:$true] %s4212
      %4215 = dma.vmem_to_hbm [thread:$0]  %s4213, 128, %s2, [#allocation3]
    $region17: #{tpu_custom_call.1} parent=1 // pred_fallthru
      _
    // Predicated region
    $region18: #{tpu_custom_call.1} parent=1 // pred_check
      _
    $region19: #{tpu_custom_call.1} parent=1 // pred_check_branch
      %4217 = sbr.rel (0) target = $region21
    $region20: #{tpu_custom_call.1} parent=1 // pred_region
      %4218 = dma.done [#allocation3], 128
    $region21: #{tpu_custom_call.1} parent=1 // pred_fallthru
      _
    %4219 = vsyncpa [#allocation3], 1

</llo_original>
